<compile_context>
chip_gen: v7x
topology: tpu7x:2x2x1
jax: 0.10.0
libtpu: 0.0.40
codegen_flags: <defaults>
</compile_context>

<pallas_src>
import functools

import jax
import jax.numpy as jnp
from jax import lax
from jax.experimental import pallas as pl
from jax.experimental.pallas import tpu as pltpu

NORM_EPS = 1e-5


def _silu(v):
    return v * (1.0 / (1.0 + jnp.exp(-v)))


def _softplus(v):
    return jnp.maximum(v, 0.0) + jnp.log(1.0 + jnp.exp(-jnp.abs(v)))


# --------------- fused TransformerBlock kernel (batch_block sequences per grid step) ---------
def _block_kernel(x_ref, norms_ref, wg_ref, wxbc_ref, wdt_ref, convwb_ref,
                  ssm_h_ref, ssm_c_ref, outp_ref, wo_ref, w1_ref, w3_ref, w2_ref,
                  o_ref, *, batch_block, seq_len, n_heads, head_dim, n_state,
                  kernel_size, eps):
    BB, S, H, P = batch_block, seq_len, n_heads, head_dim
    N, K = n_state, kernel_size
    d_in = H * P
    f32, bf16 = jnp.float32, jnp.bfloat16

    x = x_ref[...]                                                   # (BB*S, D) f32

    def rms(v, w_row):
        var = jnp.mean(v * v, axis=-1, keepdims=True)
        return v * lax.rsqrt(var + eps) * w_row

    # ---- attention_norm followed by Attention.norm (two RMSNorms, as in the reference) ----
    h2 = rms(rms(x, norms_ref[0:1, :]), norms_ref[1:2, :])
    h2b = h2.astype(bf16)

    # ---- Mamba2 in_proj on the full row slab (MXU; bf16 in, f32 accumulate) ----
    gate = jnp.dot(h2b, wg_ref[...], preferred_element_type=f32)     # (BB*S, d_inner)
    xbc = jnp.dot(h2b, wxbc_ref[...], preferred_element_type=f32)    # (BB*S, 2N + d_inner)
    dt_r = jnp.dot(h2b, wdt_ref[...], preferred_element_type=f32)    # (BB*S, H) per-head dt

    A_neg = -jnp.exp(ssm_h_ref[0:1, :])                              # (1, H)
    dt_bias = ssm_h_ref[1:2, :]                                      # (1, H)
    D_res = ssm_c_ref[0:1, :]                                        # (1, d_inner)
    mnorm_w = ssm_c_ref[1:2, :]                                      # (1, d_inner)

    dt_all = _softplus(dt_r + dt_bias)                               # (BB*S, H)
    dtA_all = dt_all * A_neg                                         # (BB*S, H), <= 0

    # shared triangular / iota masks
    row = lax.broadcasted_iota(jnp.int32, (S, S), 0)
    col = lax.broadcasted_iota(jnp.int32, (S, S), 1)
    tri = (row >= col).astype(f32)                                   # lower-tri incl. diag
    t_col = lax.broadcasted_iota(jnp.int32, (S, 1), 0)

    conv_bias = convwb_ref[K:K + 1, :]

    yns = []
    for b in range(BB):                                              # short static loop
        r0, r1 = b * S, (b + 1) * S
        xbc_b = xbc[r0:r1, :]                                        # (S, conv_dim)

        # ---- depthwise causal conv1d + SiLU: rolls (XLU) + one mask per tap ----
        conv = xbc_b * convwb_ref[K - 1:K, :]                        # tap j=0 -> w[K-1]
        for j in range(1, K):
            sh = pltpu.roll(xbc_b, j, 0)                             # sh[t] = x[t-j] (wrapped)
            sh = sh * (t_col >= j).astype(f32)                       # zero wrapped rows
            conv = conv + sh * convwb_ref[K - 1 - j:K - j, :]
        conv = _silu(conv + conv_bias)

        Bm = conv[:, 0:N]                                            # (S, N) 128-aligned split
        Cm = conv[:, N:2 * N]                                        # (S, N)
        xs = conv[:, 2 * N:2 * N + d_in]                             # (S, d_inner)

        dt_b = dt_all[r0:r1, :]                                      # (S, H)
        dtA_b = dtA_all[r0:r1, :]                                    # (S, H)

        # inclusive cumsum over time (per head) as a lower-triangular MXU matmul
        a_cum = jnp.dot(tri, dtA_b, preferred_element_type=f32)      # (S, H)
        a_cum_t = jnp.transpose(a_cum)                               # (H, S) (small XLU)

        # scores G[t, s] = <C_t, B_s>  (shared across heads; n_groups == 1)
        G = lax.dot_general(Cm, Bm, (((1,), (1,)), ((), ())),
                            preferred_element_type=f32)              # (S, S)

        # per-head masked-decay matmul:  Y_h = (G * L_h) @ (dt_h * x_h)
        y_heads = []
        for h in range(H):
            diff = a_cum[:, h:h + 1] - a_cum_t[h:h + 1, :]           # (S, S) outer difference
            L = jnp.exp(jnp.minimum(diff, 0.0)) * tri                # causal decay, no overflow
            dtx = dt_b[:, h:h + 1] * xs[:, h * P:(h + 1) * P]        # (S, P)
            y_heads.append(jnp.dot(G * L, dtx, preferred_element_type=f32))
        y = jnp.concatenate(y_heads, axis=1) + D_res * xs            # (S, d_inner)

        # gated RMSNorm (RMSNormGated, n_groups == 1)
        g = y * _silu(gate[r0:r1, :])
        gvar = jnp.mean(g * g, axis=-1, keepdims=True)
        yns.append(g * lax.rsqrt(gvar + eps) * mnorm_w)

    yn = (jnp.concatenate(yns, axis=0) if BB > 1 else yns[0]).astype(bf16)  # (BB*S, d_inner)

    # ---- out_proj -> wo -> residual (full row slab on the MXU) ----
    mo = jnp.dot(yn, outp_ref[...], preferred_element_type=f32).astype(bf16)
    h = x + jnp.dot(mo, wo_ref[...], preferred_element_type=f32)

    # ---- ffn_norm -> SwiGLU FFN -> residual (single dense store) ----
    hf = rms(h, norms_ref[2:3, :]).astype(bf16)
    a1 = jnp.dot(hf, w1_ref[...], preferred_element_type=f32)
    a3 = jnp.dot(hf, w3_ref[...], preferred_element_type=f32)
    hh = (_silu(a1) * a3).astype(bf16)
    o_ref[...] = h + jnp.dot(hh, w2_ref[...], preferred_element_type=f32)


# ---------------- wrapper ----------------
def transformer_block(x_bsd, kp, cfg, batch_block=None):
    B, S, D = x_bsd.shape
    H, P = cfg["n_heads"], cfg["head_dim"]
    N, K, F = cfg["state_size"], cfg["conv_kernel"], cfg["ffn_hidden"]
    d_in = H * P
    conv_dim = d_in + 2 * N

    BB = B if batch_block is None else batch_block
    assert B % BB == 0

    kernel = functools.partial(
        _block_kernel, batch_block=BB, seq_len=S, n_heads=H, head_dim=P,
        n_state=N, kernel_size=K, eps=cfg["norm_eps"])

    def wspec(shape):
        return pl.BlockSpec(shape, lambda g: (0, 0))

    x2d = x_bsd.reshape(B * S, D)
    out2d = pl.pallas_call(
        kernel,
        out_shape=jax.ShapeDtypeStruct((B * S, D), jnp.float32),
        grid=(B // BB,),
        in_specs=[
            pl.BlockSpec((BB * S, D), lambda g: (g, 0)),   # x (row slab)
            wspec((3, D)),                                 # [attn_norm | inner_norm | ffn_norm]
            wspec((D, d_in)),                              # in_proj gate cols (bf16)
            wspec((D, conv_dim)),                          # in_proj [B|C|x] cols (bf16)
            wspec((D, H)),                                 # in_proj dt cols, per-head (bf16)
            wspec((K + 1, conv_dim)),                      # conv taps + bias (f32)
            wspec((2, H)),                                 # [A_log | dt_bias] per head (f32)
            wspec((2, d_in)),                              # [D | mamba_norm_w] (f32)
            wspec((d_in, D)),                              # out_proj (bf16)
            wspec((D, D)),                                 # wo (bf16)
            wspec((D, F)),                                 # w1 (bf16)
            wspec((D, F)),                                 # w3 (bf16)
            wspec((F, D)),                                 # w2 (bf16)
        ],
        out_specs=pl.BlockSpec((BB * S, D), lambda g: (g, 0)),
        compiler_params=pltpu.CompilerParams(
            dimension_semantics=("parallel",),
            vmem_limit_bytes=32 * 1024 * 1024),
    )(x2d, kp["norms_d"], kp["wg"], kp["w_xbc"], kp["wdt"], kp["conv_wb"],
      kp["ssm_h"], kp["ssm_c"], kp["out_proj"], kp["wo"], kp["w1"], kp["w3"], kp["w2"])
    return out2d.reshape(B, S, D)


# ---------------- config / deterministic parameter init (module layout) ----------------
def make_config(dim=32, n_heads=4, multiple_of=256, norm_eps=1e-5):
    head_dim = dim // n_heads
    ffn_hidden = int(2 * (4 * dim) / 3)
    ffn_hidden = multiple_of * ((ffn_hidden + multiple_of - 1) // multiple_of)
    return dict(dim=dim, n_heads=n_heads, head_dim=head_dim,
                state_size=256, conv_kernel=4, chunk_size=64,
                n_groups=1, expand=1, norm_eps=norm_eps, ffn_hidden=ffn_hidden)


def init_params(cfg, key):
    D, H, P = cfg["dim"], cfg["n_heads"], cfg["head_dim"]
    N, K, F = cfg["state_size"], cfg["conv_kernel"], cfg["ffn_hidden"]
    d_in = H * P
    conv_dim = d_in + 2 * N
    proj_dim = d_in + conv_dim + H
    ks = jax.random.split(key, 9)

    def w(k, shape, std=0.02):
        return std * jax.random.normal(k, shape, jnp.float32)

    return {
        "attention_norm_w": jnp.ones((1, D), jnp.float32),
        "attn_inner_norm_w": jnp.ones((1, D), jnp.float32),
        "ffn_norm_w": jnp.ones((1, D), jnp.float32),
        "mamba_norm_w": jnp.ones((1, d_in), jnp.float32),
        "in_proj_w_t": w(ks[0], (D, proj_dim)),          # cols = [gate | x | B | C | dt]
        "conv_w": w(ks[1], (K, conv_dim), std=0.2),      # depthwise conv weight, channels = [x|B|C]
        "conv_b": w(ks[2], (1, conv_dim)),
        "A_log": jnp.log(jnp.arange(1, H + 1, dtype=jnp.float32)).reshape(1, H),
        "dt_bias": w(ks[3], (1, H), std=0.1),
        "D_hp": jnp.ones((1, d_in), jnp.float32),        # per-head D expanded over head_dim
        "out_proj_w_t": w(ks[4], (d_in, D)),
        "wo_w_t": w(ks[5], (D, D)),
        "w1_t": w(ks[6], (D, F)),
        "w3_t": w(ks[7], (D, F)),
        "w2_t": w(ks[8], (F, D)),
    }


def prepare_params(p, cfg):
    """Repack module parameters into the fused-kernel layout (done once, host side)."""
    D, H, P = cfg["dim"], cfg["n_heads"], cfg["head_dim"]
    N, K = cfg["state_size"], cfg["conv_kernel"]
    d_in = H * P
    conv_dim = d_in + 2 * N

    w_in = p["in_proj_w_t"]                               # (D, d_in + conv_dim + H)
    wg = w_in[:, :d_in]
    wx = w_in[:, d_in:2 * d_in]
    wB = w_in[:, 2 * d_in:2 * d_in + N]
    wC = w_in[:, 2 * d_in + N:2 * d_in + 2 * N]
    wdt = w_in[:, d_in + conv_dim:]                       # (D, H) per-head dt (NOT expanded)
    w_xbc = jnp.concatenate([wB, wC, wx], axis=1)         # reorder to [B|C|x]: 128-aligned splits

    perm = jnp.concatenate([jnp.arange(d_in, d_in + N),        # B
                            jnp.arange(d_in + N, conv_dim),    # C
                            jnp.arange(0, d_in)])              # x
    conv_w = p["conv_w"][:, perm]
    conv_b = p["conv_b"][:, perm]
    conv_wb = jnp.concatenate([conv_w, conv_b], axis=0)   # (K+1, conv_dim): taps then bias

    ssm_h = jnp.concatenate([p["A_log"], p["dt_bias"]], axis=0)          # (2, H)
    ssm_c = jnp.concatenate([p["D_hp"], p["mamba_norm_w"]], axis=0)      # (2, d_in)

    norms_d = jnp.concatenate(
        [p["attention_norm_w"], p["attn_inner_norm_w"], p["ffn_norm_w"]], axis=0)  # (3, D)

    def bf(a):
        return a.astype(jnp.bfloat16)

    return {
        "norms_d": norms_d,
        "ssm_h": ssm_h, "ssm_c": ssm_c,
        "conv_wb": conv_wb,
        "wg": bf(wg), "w_xbc": bf(w_xbc), "wdt": bf(wdt),
        "out_proj": bf(p["out_proj_w_t"]), "wo": bf(p["wo_w_t"]),
        "w1": bf(p["w1_t"]), "w3": bf(p["w3_t"]), "w2": bf(p["w2_t"]),
    }


if __name__ == "__main__":
    cfg = make_config(dim=32, n_heads=4, multiple_of=256, norm_eps=NORM_EPS)
    key = jax.random.PRNGKey(0)
    pkey, xkey = jax.random.split(key)
    params = init_params(cfg, pkey)
    kparams = prepare_params(params, cfg)

    B, S = 2, 8   # seq_len <= chunk_size (64): the reference itself uses a single SSD chunk
    x = jax.random.normal(xkey, (B, S, cfg["dim"]), jnp.float32)

    out = transformer_block(x, kparams, cfg)
    out = jax.block_until_ready(out)
    assert out.shape == (B, S, cfg["dim"])
    assert bool(jnp.all(jnp.isfinite(out)))
    print("KERNEL_OK")
</pallas_src>

<mosaic_0001>
module attributes {stable_mosaic.version = 11 : i64} {
  func.func @_block_kernel(%arg0: i32, %arg1: memref<16x32xf32, #tpu.memory_space<vmem>>, %arg2: memref<3x32xf32, #tpu.memory_space<vmem>>, %arg3: memref<32x32xbf16, #tpu.memory_space<vmem>>, %arg4: memref<32x544xbf16, #tpu.memory_space<vmem>>, %arg5: memref<32x4xbf16, #tpu.memory_space<vmem>>, %arg6: memref<5x544xf32, #tpu.memory_space<vmem>>, %arg7: memref<2x4xf32, #tpu.memory_space<vmem>>, %arg8: memref<2x32xf32, #tpu.memory_space<vmem>>, %arg9: memref<32x32xbf16, #tpu.memory_space<vmem>>, %arg10: memref<32x32xbf16, #tpu.memory_space<vmem>>, %arg11: memref<32x256xbf16, #tpu.memory_space<vmem>>, %arg12: memref<32x256xbf16, #tpu.memory_space<vmem>>, %arg13: memref<256x32xbf16, #tpu.memory_space<vmem>>, %arg14: memref<16x32xf32, #tpu.memory_space<vmem>>) attributes {dimension_semantics = [#tpu.dimension_semantics<parallel>], iteration_bounds = array<i64: 1>, scalar_prefetch = 0 : i64, scratch_operands = 0 : i64, tpu.core_type = #tpu.core_type<tc>, window_params = [{transform_indices = @transform_0, window_bounds = array<i64: 16, 32>}, {pipeline_mode = #tpu.pipeline_mode<synchronous>, transform_indices = @transform_1, window_bounds = array<i64: 3, 32>}, {pipeline_mode = #tpu.pipeline_mode<synchronous>, transform_indices = @transform_2, window_bounds = array<i64: 32, 32>}, {pipeline_mode = #tpu.pipeline_mode<synchronous>, transform_indices = @transform_3, window_bounds = array<i64: 32, 544>}, {pipeline_mode = #tpu.pipeline_mode<synchronous>, transform_indices = @transform_4, window_bounds = array<i64: 32, 4>}, {pipeline_mode = #tpu.pipeline_mode<synchronous>, transform_indices = @transform_5, window_bounds = array<i64: 5, 544>}, {pipeline_mode = #tpu.pipeline_mode<synchronous>, transform_indices = @transform_6, window_bounds = array<i64: 2, 4>}, {pipeline_mode = #tpu.pipeline_mode<synchronous>, transform_indices = @transform_7, window_bounds = array<i64: 2, 32>}, {pipeline_mode = #tpu.pipeline_mode<synchronous>, transform_indices = @transform_8, window_bounds = array<i64: 32, 32>}, {pipeline_mode = #tpu.pipeline_mode<synchronous>, transform_indices = @transform_9, window_bounds = array<i64: 32, 32>}, {pipeline_mode = #tpu.pipeline_mode<synchronous>, transform_indices = @transform_10, window_bounds = array<i64: 32, 256>}, {pipeline_mode = #tpu.pipeline_mode<synchronous>, transform_indices = @transform_11, window_bounds = array<i64: 32, 256>}, {pipeline_mode = #tpu.pipeline_mode<synchronous>, transform_indices = @transform_12, window_bounds = array<i64: 256, 32>}, {transform_indices = @transform_13, window_bounds = array<i64: 16, 32>}]} {
    %c0 = arith.constant 0 : index
    %c0_0 = arith.constant 0 : index
    %0 = vector.load %arg1[%c0, %c0_0] : memref<16x32xf32, #tpu.memory_space<vmem>>, vector<16x32xf32>
    %c0_1 = arith.constant 0 : index
    %c0_2 = arith.constant 0 : index
    %1 = vector.load %arg2[%c0_1, %c0_2] : memref<3x32xf32, #tpu.memory_space<vmem>>, vector<1x32xf32>
    %2 = arith.mulf %0, %0 : vector<16x32xf32>
    %cst = arith.constant dense<0.000000e+00> : vector<16xf32>
    %3 = vector.multi_reduction <add>, %2, %cst [1] : vector<16x32xf32> to vector<16xf32>
    %4 = vector.shape_cast %3 : vector<16xf32> to vector<16x1xf32>
    %cst_3 = arith.constant 3.200000e+01 : f32
    %5 = vector.broadcast %cst_3 : f32 to vector<16x1xf32>
    %6 = arith.divf %4, %5 : vector<16x1xf32>
    %cst_4 = arith.constant 9.99999974E-6 : f32
    %7 = vector.broadcast %cst_4 : f32 to vector<16x1xf32>
    %8 = arith.addf %6, %7 : vector<16x1xf32>
    %9 = math.rsqrt %8 : vector<16x1xf32>
    %10 = vector.broadcast %9 : vector<16x1xf32> to vector<16x32xf32>
    %11 = arith.mulf %0, %10 : vector<16x32xf32>
    %12 = vector.broadcast %1 : vector<1x32xf32> to vector<16x32xf32>
    %13 = arith.mulf %11, %12 : vector<16x32xf32>
    %c1 = arith.constant 1 : index
    %c0_5 = arith.constant 0 : index
    %14 = vector.load %arg2[%c1, %c0_5] : memref<3x32xf32, #tpu.memory_space<vmem>>, vector<1x32xf32>
    %15 = arith.mulf %13, %13 : vector<16x32xf32>
    %cst_6 = arith.constant dense<0.000000e+00> : vector<16xf32>
    %16 = vector.multi_reduction <add>, %15, %cst_6 [1] : vector<16x32xf32> to vector<16xf32>
    %17 = vector.shape_cast %16 : vector<16xf32> to vector<16x1xf32>
    %cst_7 = arith.constant 3.200000e+01 : f32
    %18 = vector.broadcast %cst_7 : f32 to vector<16x1xf32>
    %19 = arith.divf %17, %18 : vector<16x1xf32>
    %cst_8 = arith.constant 9.99999974E-6 : f32
    %20 = vector.broadcast %cst_8 : f32 to vector<16x1xf32>
    %21 = arith.addf %19, %20 : vector<16x1xf32>
    %22 = math.rsqrt %21 : vector<16x1xf32>
    %23 = vector.broadcast %22 : vector<16x1xf32> to vector<16x32xf32>
    %24 = arith.mulf %13, %23 : vector<16x32xf32>
    %25 = vector.broadcast %14 : vector<1x32xf32> to vector<16x32xf32>
    %26 = arith.mulf %24, %25 : vector<16x32xf32>
    %27 = arith.truncf %26 : vector<16x32xf32> to vector<16x32xbf16>
    %c0_9 = arith.constant 0 : index
    %c0_10 = arith.constant 0 : index
    %28 = vector.load %arg3[%c0_9, %c0_10] : memref<32x32xbf16, #tpu.memory_space<vmem>>, vector<32x32xbf16>
    %cst_11 = arith.constant dense<0.000000e+00> : vector<16x32xf32>
    %29 = tpu.matmul %27, %28, %cst_11 {dimension_numbers = #tpu.dot_dimension_numbers<[1], [0], [0], [1], [0, 0, 1, 1], [], []>} : vector<16x32xbf16>, vector<32x32xbf16>, vector<16x32xf32> -> vector<16x32xf32>
    %c0_12 = arith.constant 0 : index
    %c0_13 = arith.constant 0 : index
    %30 = vector.load %arg4[%c0_12, %c0_13] : memref<32x544xbf16, #tpu.memory_space<vmem>>, vector<32x544xbf16>
    %cst_14 = arith.constant dense<0.000000e+00> : vector<16x544xf32>
    %31 = tpu.matmul %27, %30, %cst_14 {dimension_numbers = #tpu.dot_dimension_numbers<[1], [0], [0], [1], [0, 0, 1, 1], [], []>} : vector<16x32xbf16>, vector<32x544xbf16>, vector<16x544xf32> -> vector<16x544xf32>
    %c0_15 = arith.constant 0 : index
    %c0_16 = arith.constant 0 : index
    %32 = vector.load %arg5[%c0_15, %c0_16] : memref<32x4xbf16, #tpu.memory_space<vmem>>, vector<32x4xbf16>
    %cst_17 = arith.constant dense<0.000000e+00> : vector<16x4xf32>
    %33 = tpu.matmul %27, %32, %cst_17 {dimension_numbers = #tpu.dot_dimension_numbers<[1], [0], [0], [1], [0, 0, 1, 1], [], []>} : vector<16x32xbf16>, vector<32x4xbf16>, vector<16x4xf32> -> vector<16x4xf32>
    %c0_18 = arith.constant 0 : index
    %c0_19 = arith.constant 0 : index
    %34 = vector.load %arg7[%c0_18, %c0_19] : memref<2x4xf32, #tpu.memory_space<vmem>>, vector<1x4xf32>
    %35 = math.exp %34 : vector<1x4xf32>
    %cst_20 = arith.constant 0.000000e+00 : f32
    %36 = vector.broadcast %cst_20 : f32 to vector<1x4xf32>
    %37 = arith.subf %36, %35 : vector<1x4xf32>
    %c1_21 = arith.constant 1 : index
    %c0_22 = arith.constant 0 : index
    %38 = vector.load %arg7[%c1_21, %c0_22] : memref<2x4xf32, #tpu.memory_space<vmem>>, vector<1x4xf32>
    %c0_23 = arith.constant 0 : index
    %c0_24 = arith.constant 0 : index
    %39 = vector.load %arg8[%c0_23, %c0_24] : memref<2x32xf32, #tpu.memory_space<vmem>>, vector<1x32xf32>
    %c1_25 = arith.constant 1 : index
    %c0_26 = arith.constant 0 : index
    %40 = vector.load %arg8[%c1_25, %c0_26] : memref<2x32xf32, #tpu.memory_space<vmem>>, vector<1x32xf32>
    %41 = vector.broadcast %38 : vector<1x4xf32> to vector<16x4xf32>
    %42 = arith.addf %33, %41 : vector<16x4xf32>
    %cst_27 = arith.constant 0.000000e+00 : f32
    %43 = vector.broadcast %cst_27 : f32 to vector<16x4xf32>
    %44 = arith.maximumf %42, %43 : vector<16x4xf32>
    %45 = math.absf %42 : vector<16x4xf32>
    %cst_28 = arith.constant 0.000000e+00 : f32
    %46 = vector.broadcast %cst_28 : f32 to vector<16x4xf32>
    %47 = arith.subf %46, %45 : vector<16x4xf32>
    %48 = math.exp %47 : vector<16x4xf32>
    %cst_29 = arith.constant 1.000000e+00 : f32
    %49 = vector.broadcast %cst_29 : f32 to vector<16x4xf32>
    %50 = arith.addf %49, %48 : vector<16x4xf32>
    %51 = math.log %50 : vector<16x4xf32>
    %52 = arith.addf %44, %51 : vector<16x4xf32>
    %53 = vector.broadcast %37 : vector<1x4xf32> to vector<16x4xf32>
    %54 = arith.mulf %52, %53 : vector<16x4xf32>
    %55 = tpu.iota {dimensions = array<i32: 0>} : vector<8x8xi32>
    %56 = tpu.iota {dimensions = array<i32: 1>} : vector<8x8xi32>
    %57 = arith.cmpi sge, %55, %56 : vector<8x8xi32>
    %58 = arith.extui %57 : vector<8x8xi1> to vector<8x8xi32>
    %59 = arith.sitofp %58 : vector<8x8xi32> to vector<8x8xf32>
    %60 = tpu.iota {dimensions = array<i32: 0>} : vector<8x1xi32>
    %c4 = arith.constant 4 : index
    %c0_30 = arith.constant 0 : index
    %61 = vector.load %arg6[%c4, %c0_30] : memref<5x544xf32, #tpu.memory_space<vmem>>, vector<1x544xf32>
    %62 = vector.extract_strided_slice %31 {offsets = [0, 0], sizes = [8, 544], strides = [1, 1]} : vector<16x544xf32> to vector<8x544xf32>
    %c3 = arith.constant 3 : index
    %c0_31 = arith.constant 0 : index
    %63 = vector.load %arg6[%c3, %c0_31] : memref<5x544xf32, #tpu.memory_space<vmem>>, vector<1x544xf32>
    %64 = vector.broadcast %63 : vector<1x544xf32> to vector<8x544xf32>
    %65 = arith.mulf %62, %64 : vector<8x544xf32>
    %c1_i32 = arith.constant 1 : i32
    %66 = tpu.dynamic_rotate %62 by %c1_i32 dim 0 : vector<8x544xf32>, i32 -> vector<8x544xf32>
    %c1_i32_32 = arith.constant 1 : i32
    %67 = vector.broadcast %c1_i32_32 : i32 to vector<8x1xi32>
    %68 = arith.cmpi sge, %60, %67 : vector<8x1xi32>
    %69 = arith.extui %68 : vector<8x1xi1> to vector<8x1xi32>
    %70 = arith.sitofp %69 : vector<8x1xi32> to vector<8x1xf32>
    %71 = vector.broadcast %70 : vector<8x1xf32> to vector<8x544xf32>
    %72 = arith.mulf %66, %71 : vector<8x544xf32>
    %c2 = arith.constant 2 : index
    %c0_33 = arith.constant 0 : index
    %73 = vector.load %arg6[%c2, %c0_33] : memref<5x544xf32, #tpu.memory_space<vmem>>, vector<1x544xf32>
    %74 = vector.broadcast %73 : vector<1x544xf32> to vector<8x544xf32>
    %75 = arith.mulf %72, %74 : vector<8x544xf32>
    %76 = arith.addf %65, %75 : vector<8x544xf32>
    %c2_i32 = arith.constant 2 : i32
    %77 = tpu.dynamic_rotate %62 by %c2_i32 dim 0 : vector<8x544xf32>, i32 -> vector<8x544xf32>
    %c2_i32_34 = arith.constant 2 : i32
    %78 = vector.broadcast %c2_i32_34 : i32 to vector<8x1xi32>
    %79 = arith.cmpi sge, %60, %78 : vector<8x1xi32>
    %80 = arith.extui %79 : vector<8x1xi1> to vector<8x1xi32>
    %81 = arith.sitofp %80 : vector<8x1xi32> to vector<8x1xf32>
    %82 = vector.broadcast %81 : vector<8x1xf32> to vector<8x544xf32>
    %83 = arith.mulf %77, %82 : vector<8x544xf32>
    %c1_35 = arith.constant 1 : index
    %c0_36 = arith.constant 0 : index
    %84 = vector.load %arg6[%c1_35, %c0_36] : memref<5x544xf32, #tpu.memory_space<vmem>>, vector<1x544xf32>
    %85 = vector.broadcast %84 : vector<1x544xf32> to vector<8x544xf32>
    %86 = arith.mulf %83, %85 : vector<8x544xf32>
    %87 = arith.addf %76, %86 : vector<8x544xf32>
    %c3_i32 = arith.constant 3 : i32
    %88 = tpu.dynamic_rotate %62 by %c3_i32 dim 0 : vector<8x544xf32>, i32 -> vector<8x544xf32>
    %c3_i32_37 = arith.constant 3 : i32
    %89 = vector.broadcast %c3_i32_37 : i32 to vector<8x1xi32>
    %90 = arith.cmpi sge, %60, %89 : vector<8x1xi32>
    %91 = arith.extui %90 : vector<8x1xi1> to vector<8x1xi32>
    %92 = arith.sitofp %91 : vector<8x1xi32> to vector<8x1xf32>
    %93 = vector.broadcast %92 : vector<8x1xf32> to vector<8x544xf32>
    %94 = arith.mulf %88, %93 : vector<8x544xf32>
    %c0_38 = arith.constant 0 : index
    %c0_39 = arith.constant 0 : index
    %95 = vector.load %arg6[%c0_38, %c0_39] : memref<5x544xf32, #tpu.memory_space<vmem>>, vector<1x544xf32>
    %96 = vector.broadcast %95 : vector<1x544xf32> to vector<8x544xf32>
    %97 = arith.mulf %94, %96 : vector<8x544xf32>
    %98 = arith.addf %87, %97 : vector<8x544xf32>
    %99 = vector.broadcast %61 : vector<1x544xf32> to vector<8x544xf32>
    %100 = arith.addf %98, %99 : vector<8x544xf32>
    %cst_40 = arith.constant 0.000000e+00 : f32
    %101 = vector.broadcast %cst_40 : f32 to vector<8x544xf32>
    %102 = arith.subf %101, %100 : vector<8x544xf32>
    %103 = math.exp %102 : vector<8x544xf32>
    %cst_41 = arith.constant 1.000000e+00 : f32
    %104 = vector.broadcast %cst_41 : f32 to vector<8x544xf32>
    %105 = arith.addf %104, %103 : vector<8x544xf32>
    %cst_42 = arith.constant 1.000000e+00 : f32
    %106 = vector.broadcast %cst_42 : f32 to vector<8x544xf32>
    %107 = arith.divf %106, %105 : vector<8x544xf32>
    %108 = arith.mulf %100, %107 : vector<8x544xf32>
    %109 = vector.extract_strided_slice %108 {offsets = [0, 0], sizes = [8, 256], strides = [1, 1]} : vector<8x544xf32> to vector<8x256xf32>
    %110 = vector.extract_strided_slice %108 {offsets = [0, 256], sizes = [8, 256], strides = [1, 1]} : vector<8x544xf32> to vector<8x256xf32>
    %111 = vector.extract_strided_slice %108 {offsets = [0, 512], sizes = [8, 32], strides = [1, 1]} : vector<8x544xf32> to vector<8x32xf32>
    %112 = vector.extract_strided_slice %52 {offsets = [0, 0], sizes = [8, 4], strides = [1, 1]} : vector<16x4xf32> to vector<8x4xf32>
    %113 = vector.extract_strided_slice %54 {offsets = [0, 0], sizes = [8, 4], strides = [1, 1]} : vector<16x4xf32> to vector<8x4xf32>
    %cst_43 = arith.constant dense<0.000000e+00> : vector<8x4xf32>
    %114 = tpu.matmul %59, %113, %cst_43 {dimension_numbers = #tpu.dot_dimension_numbers<[1], [0], [0], [1], [0, 0, 1, 1], [], []>} : vector<8x8xf32>, vector<8x4xf32>, vector<8x4xf32> -> vector<8x4xf32>
    %115 = tpu.transpose %114, [1, 0] : vector<8x4xf32> -> vector<4x8xf32>
    %cst_44 = arith.constant dense<0.000000e+00> : vector<8x8xf32>
    %116 = tpu.matmul %110, %109, %cst_44 {dimension_numbers = #tpu.dot_dimension_numbers<[1], [1], [0], [0], [0, 0, 1, 0], [], []>} : vector<8x256xf32>, vector<8x256xf32>, vector<8x8xf32> -> vector<8x8xf32>
    %117 = vector.extract_strided_slice %114 {offsets = [0, 0], sizes = [8, 1], strides = [1, 1]} : vector<8x4xf32> to vector<8x1xf32>
    %118 = vector.extract_strided_slice %115 {offsets = [0, 0], sizes = [1, 8], strides = [1, 1]} : vector<4x8xf32> to vector<1x8xf32>
    %119 = vector.broadcast %117 : vector<8x1xf32> to vector<8x8xf32>
    %120 = vector.broadcast %118 : vector<1x8xf32> to vector<8x8xf32>
    %121 = arith.subf %119, %120 : vector<8x8xf32>
    %cst_45 = arith.constant 0.000000e+00 : f32
    %122 = vector.broadcast %cst_45 : f32 to vector<8x8xf32>
    %123 = arith.minimumf %121, %122 : vector<8x8xf32>
    %124 = math.exp %123 : vector<8x8xf32>
    %125 = arith.mulf %124, %59 : vector<8x8xf32>
    %126 = vector.extract_strided_slice %112 {offsets = [0, 0], sizes = [8, 1], strides = [1, 1]} : vector<8x4xf32> to vector<8x1xf32>
    %127 = vector.extract_strided_slice %111 {offsets = [0, 0], sizes = [8, 8], strides = [1, 1]} : vector<8x32xf32> to vector<8x8xf32>
    %128 = vector.broadcast %126 : vector<8x1xf32> to vector<8x8xf32>
    %129 = arith.mulf %128, %127 : vector<8x8xf32>
    %130 = arith.mulf %116, %125 : vector<8x8xf32>
    %cst_46 = arith.constant dense<0.000000e+00> : vector<8x8xf32>
    %131 = tpu.matmul %130, %129, %cst_46 {dimension_numbers = #tpu.dot_dimension_numbers<[1], [0], [0], [1], [0, 0, 1, 1], [], []>} : vector<8x8xf32>, vector<8x8xf32>, vector<8x8xf32> -> vector<8x8xf32>
    %132 = vector.extract_strided_slice %114 {offsets = [0, 1], sizes = [8, 1], strides = [1, 1]} : vector<8x4xf32> to vector<8x1xf32>
    %133 = vector.extract_strided_slice %115 {offsets = [1, 0], sizes = [1, 8], strides = [1, 1]} : vector<4x8xf32> to vector<1x8xf32>
    %134 = vector.broadcast %132 : vector<8x1xf32> to vector<8x8xf32>
    %135 = vector.broadcast %133 : vector<1x8xf32> to vector<8x8xf32>
    %136 = arith.subf %134, %135 : vector<8x8xf32>
    %cst_47 = arith.constant 0.000000e+00 : f32
    %137 = vector.broadcast %cst_47 : f32 to vector<8x8xf32>
    %138 = arith.minimumf %136, %137 : vector<8x8xf32>
    %139 = math.exp %138 : vector<8x8xf32>
    %140 = arith.mulf %139, %59 : vector<8x8xf32>
    %141 = vector.extract_strided_slice %112 {offsets = [0, 1], sizes = [8, 1], strides = [1, 1]} : vector<8x4xf32> to vector<8x1xf32>
    %142 = vector.extract_strided_slice %111 {offsets = [0, 8], sizes = [8, 8], strides = [1, 1]} : vector<8x32xf32> to vector<8x8xf32>
    %143 = vector.broadcast %141 : vector<8x1xf32> to vector<8x8xf32>
    %144 = arith.mulf %143, %142 : vector<8x8xf32>
    %145 = arith.mulf %116, %140 : vector<8x8xf32>
    %cst_48 = arith.constant dense<0.000000e+00> : vector<8x8xf32>
    %146 = tpu.matmul %145, %144, %cst_48 {dimension_numbers = #tpu.dot_dimension_numbers<[1], [0], [0], [1], [0, 0, 1, 1], [], []>} : vector<8x8xf32>, vector<8x8xf32>, vector<8x8xf32> -> vector<8x8xf32>
    %147 = vector.extract_strided_slice %114 {offsets = [0, 2], sizes = [8, 1], strides = [1, 1]} : vector<8x4xf32> to vector<8x1xf32>
    %148 = vector.extract_strided_slice %115 {offsets = [2, 0], sizes = [1, 8], strides = [1, 1]} : vector<4x8xf32> to vector<1x8xf32>
    %149 = vector.broadcast %147 : vector<8x1xf32> to vector<8x8xf32>
    %150 = vector.broadcast %148 : vector<1x8xf32> to vector<8x8xf32>
    %151 = arith.subf %149, %150 : vector<8x8xf32>
    %cst_49 = arith.constant 0.000000e+00 : f32
    %152 = vector.broadcast %cst_49 : f32 to vector<8x8xf32>
    %153 = arith.minimumf %151, %152 : vector<8x8xf32>
    %154 = math.exp %153 : vector<8x8xf32>
    %155 = arith.mulf %154, %59 : vector<8x8xf32>
    %156 = vector.extract_strided_slice %112 {offsets = [0, 2], sizes = [8, 1], strides = [1, 1]} : vector<8x4xf32> to vector<8x1xf32>
    %157 = vector.extract_strided_slice %111 {offsets = [0, 16], sizes = [8, 8], strides = [1, 1]} : vector<8x32xf32> to vector<8x8xf32>
    %158 = vector.broadcast %156 : vector<8x1xf32> to vector<8x8xf32>
    %159 = arith.mulf %158, %157 : vector<8x8xf32>
    %160 = arith.mulf %116, %155 : vector<8x8xf32>
    %cst_50 = arith.constant dense<0.000000e+00> : vector<8x8xf32>
    %161 = tpu.matmul %160, %159, %cst_50 {dimension_numbers = #tpu.dot_dimension_numbers<[1], [0], [0], [1], [0, 0, 1, 1], [], []>} : vector<8x8xf32>, vector<8x8xf32>, vector<8x8xf32> -> vector<8x8xf32>
    %162 = vector.extract_strided_slice %114 {offsets = [0, 3], sizes = [8, 1], strides = [1, 1]} : vector<8x4xf32> to vector<8x1xf32>
    %163 = vector.extract_strided_slice %115 {offsets = [3, 0], sizes = [1, 8], strides = [1, 1]} : vector<4x8xf32> to vector<1x8xf32>
    %164 = vector.broadcast %162 : vector<8x1xf32> to vector<8x8xf32>
    %165 = vector.broadcast %163 : vector<1x8xf32> to vector<8x8xf32>
    %166 = arith.subf %164, %165 : vector<8x8xf32>
    %cst_51 = arith.constant 0.000000e+00 : f32
    %167 = vector.broadcast %cst_51 : f32 to vector<8x8xf32>
    %168 = arith.minimumf %166, %167 : vector<8x8xf32>
    %169 = math.exp %168 : vector<8x8xf32>
    %170 = arith.mulf %169, %59 : vector<8x8xf32>
    %171 = vector.extract_strided_slice %112 {offsets = [0, 3], sizes = [8, 1], strides = [1, 1]} : vector<8x4xf32> to vector<8x1xf32>
    %172 = vector.extract_strided_slice %111 {offsets = [0, 24], sizes = [8, 8], strides = [1, 1]} : vector<8x32xf32> to vector<8x8xf32>
    %173 = vector.broadcast %171 : vector<8x1xf32> to vector<8x8xf32>
    %174 = arith.mulf %173, %172 : vector<8x8xf32>
    %175 = arith.mulf %116, %170 : vector<8x8xf32>
    %cst_52 = arith.constant dense<0.000000e+00> : vector<8x8xf32>
    %176 = tpu.matmul %175, %174, %cst_52 {dimension_numbers = #tpu.dot_dimension_numbers<[1], [0], [0], [1], [0, 0, 1, 1], [], []>} : vector<8x8xf32>, vector<8x8xf32>, vector<8x8xf32> -> vector<8x8xf32>
    %177 = tpu.concatenate %131, %146, %161, %176 in 1 : vector<8x8xf32>, vector<8x8xf32>, vector<8x8xf32>, vector<8x8xf32> -> vector<8x32xf32>
    %178 = vector.broadcast %39 : vector<1x32xf32> to vector<8x32xf32>
    %179 = arith.mulf %178, %111 : vector<8x32xf32>
    %180 = arith.addf %177, %179 : vector<8x32xf32>
    %181 = vector.extract_strided_slice %29 {offsets = [0, 0], sizes = [8, 32], strides = [1, 1]} : vector<16x32xf32> to vector<8x32xf32>
    %cst_53 = arith.constant 0.000000e+00 : f32
    %182 = vector.broadcast %cst_53 : f32 to vector<8x32xf32>
    %183 = arith.subf %182, %181 : vector<8x32xf32>
    %184 = math.exp %183 : vector<8x32xf32>
    %cst_54 = arith.constant 1.000000e+00 : f32
    %185 = vector.broadcast %cst_54 : f32 to vector<8x32xf32>
    %186 = arith.addf %185, %184 : vector<8x32xf32>
    %cst_55 = arith.constant 1.000000e+00 : f32
    %187 = vector.broadcast %cst_55 : f32 to vector<8x32xf32>
    %188 = arith.divf %187, %186 : vector<8x32xf32>
    %189 = arith.mulf %181, %188 : vector<8x32xf32>
    %190 = arith.mulf %180, %189 : vector<8x32xf32>
    %191 = arith.mulf %190, %190 : vector<8x32xf32>
    %cst_56 = arith.constant dense<0.000000e+00> : vector<8xf32>
    %192 = vector.multi_reduction <add>, %191, %cst_56 [1] : vector<8x32xf32> to vector<8xf32>
    %193 = vector.shape_cast %192 : vector<8xf32> to vector<8x1xf32>
    %cst_57 = arith.constant 3.200000e+01 : f32
    %194 = vector.broadcast %cst_57 : f32 to vector<8x1xf32>
    %195 = arith.divf %193, %194 : vector<8x1xf32>
    %cst_58 = arith.constant 9.99999974E-6 : f32
    %196 = vector.broadcast %cst_58 : f32 to vector<8x1xf32>
    %197 = arith.addf %195, %196 : vector<8x1xf32>
    %198 = math.rsqrt %197 : vector<8x1xf32>
    %199 = vector.broadcast %198 : vector<8x1xf32> to vector<8x32xf32>
    %200 = arith.mulf %190, %199 : vector<8x32xf32>
    %201 = vector.broadcast %40 : vector<1x32xf32> to vector<8x32xf32>
    %202 = arith.mulf %200, %201 : vector<8x32xf32>
    %203 = vector.extract_strided_slice %31 {offsets = [8, 0], sizes = [8, 544], strides = [1, 1]} : vector<16x544xf32> to vector<8x544xf32>
    %c3_59 = arith.constant 3 : index
    %c0_60 = arith.constant 0 : index
    %204 = vector.load %arg6[%c3_59, %c0_60] : memref<5x544xf32, #tpu.memory_space<vmem>>, vector<1x544xf32>
    %205 = vector.broadcast %204 : vector<1x544xf32> to vector<8x544xf32>
    %206 = arith.mulf %203, %205 : vector<8x544xf32>
    %c1_i32_61 = arith.constant 1 : i32
    %207 = tpu.dynamic_rotate %203 by %c1_i32_61 dim 0 : vector<8x544xf32>, i32 -> vector<8x544xf32>
    %c1_i32_62 = arith.constant 1 : i32
    %208 = vector.broadcast %c1_i32_62 : i32 to vector<8x1xi32>
    %209 = arith.cmpi sge, %60, %208 : vector<8x1xi32>
    %210 = arith.extui %209 : vector<8x1xi1> to vector<8x1xi32>
    %211 = arith.sitofp %210 : vector<8x1xi32> to vector<8x1xf32>
    %212 = vector.broadcast %211 : vector<8x1xf32> to vector<8x544xf32>
    %213 = arith.mulf %207, %212 : vector<8x544xf32>
    %c2_63 = arith.constant 2 : index
    %c0_64 = arith.constant 0 : index
    %214 = vector.load %arg6[%c2_63, %c0_64] : memref<5x544xf32, #tpu.memory_space<vmem>>, vector<1x544xf32>
    %215 = vector.broadcast %214 : vector<1x544xf32> to vector<8x544xf32>
    %216 = arith.mulf %213, %215 : vector<8x544xf32>
    %217 = arith.addf %206, %216 : vector<8x544xf32>
    %c2_i32_65 = arith.constant 2 : i32
    %218 = tpu.dynamic_rotate %203 by %c2_i32_65 dim 0 : vector<8x544xf32>, i32 -> vector<8x544xf32>
    %c2_i32_66 = arith.constant 2 : i32
    %219 = vector.broadcast %c2_i32_66 : i32 to vector<8x1xi32>
    %220 = arith.cmpi sge, %60, %219 : vector<8x1xi32>
    %221 = arith.extui %220 : vector<8x1xi1> to vector<8x1xi32>
    %222 = arith.sitofp %221 : vector<8x1xi32> to vector<8x1xf32>
    %223 = vector.broadcast %222 : vector<8x1xf32> to vector<8x544xf32>
    %224 = arith.mulf %218, %223 : vector<8x544xf32>
    %c1_67 = arith.constant 1 : index
    %c0_68 = arith.constant 0 : index
    %225 = vector.load %arg6[%c1_67, %c0_68] : memref<5x544xf32, #tpu.memory_space<vmem>>, vector<1x544xf32>
    %226 = vector.broadcast %225 : vector<1x544xf32> to vector<8x544xf32>
    %227 = arith.mulf %224, %226 : vector<8x544xf32>
    %228 = arith.addf %217, %227 : vector<8x544xf32>
    %c3_i32_69 = arith.constant 3 : i32
    %229 = tpu.dynamic_rotate %203 by %c3_i32_69 dim 0 : vector<8x544xf32>, i32 -> vector<8x544xf32>
    %c3_i32_70 = arith.constant 3 : i32
    %230 = vector.broadcast %c3_i32_70 : i32 to vector<8x1xi32>
    %231 = arith.cmpi sge, %60, %230 : vector<8x1xi32>
    %232 = arith.extui %231 : vector<8x1xi1> to vector<8x1xi32>
    %233 = arith.sitofp %232 : vector<8x1xi32> to vector<8x1xf32>
    %234 = vector.broadcast %233 : vector<8x1xf32> to vector<8x544xf32>
    %235 = arith.mulf %229, %234 : vector<8x544xf32>
    %c0_71 = arith.constant 0 : index
    %c0_72 = arith.constant 0 : index
    %236 = vector.load %arg6[%c0_71, %c0_72] : memref<5x544xf32, #tpu.memory_space<vmem>>, vector<1x544xf32>
    %237 = vector.broadcast %236 : vector<1x544xf32> to vector<8x544xf32>
    %238 = arith.mulf %235, %237 : vector<8x544xf32>
    %239 = arith.addf %228, %238 : vector<8x544xf32>
    %240 = vector.broadcast %61 : vector<1x544xf32> to vector<8x544xf32>
    %241 = arith.addf %239, %240 : vector<8x544xf32>
    %cst_73 = arith.constant 0.000000e+00 : f32
    %242 = vector.broadcast %cst_73 : f32 to vector<8x544xf32>
    %243 = arith.subf %242, %241 : vector<8x544xf32>
    %244 = math.exp %243 : vector<8x544xf32>
    %cst_74 = arith.constant 1.000000e+00 : f32
    %245 = vector.broadcast %cst_74 : f32 to vector<8x544xf32>
    %246 = arith.addf %245, %244 : vector<8x544xf32>
    %cst_75 = arith.constant 1.000000e+00 : f32
    %247 = vector.broadcast %cst_75 : f32 to vector<8x544xf32>
    %248 = arith.divf %247, %246 : vector<8x544xf32>
    %249 = arith.mulf %241, %248 : vector<8x544xf32>
    %250 = vector.extract_strided_slice %249 {offsets = [0, 0], sizes = [8, 256], strides = [1, 1]} : vector<8x544xf32> to vector<8x256xf32>
    %251 = vector.extract_strided_slice %249 {offsets = [0, 256], sizes = [8, 256], strides = [1, 1]} : vector<8x544xf32> to vector<8x256xf32>
    %252 = vector.extract_strided_slice %249 {offsets = [0, 512], sizes = [8, 32], strides = [1, 1]} : vector<8x544xf32> to vector<8x32xf32>
    %253 = vector.extract_strided_slice %52 {offsets = [8, 0], sizes = [8, 4], strides = [1, 1]} : vector<16x4xf32> to vector<8x4xf32>
    %254 = vector.extract_strided_slice %54 {offsets = [8, 0], sizes = [8, 4], strides = [1, 1]} : vector<16x4xf32> to vector<8x4xf32>
    %cst_76 = arith.constant dense<0.000000e+00> : vector<8x4xf32>
    %255 = tpu.matmul %59, %254, %cst_76 {dimension_numbers = #tpu.dot_dimension_numbers<[1], [0], [0], [1], [0, 0, 1, 1], [], []>} : vector<8x8xf32>, vector<8x4xf32>, vector<8x4xf32> -> vector<8x4xf32>
    %256 = tpu.transpose %255, [1, 0] : vector<8x4xf32> -> vector<4x8xf32>
    %cst_77 = arith.constant dense<0.000000e+00> : vector<8x8xf32>
    %257 = tpu.matmul %251, %250, %cst_77 {dimension_numbers = #tpu.dot_dimension_numbers<[1], [1], [0], [0], [0, 0, 1, 0], [], []>} : vector<8x256xf32>, vector<8x256xf32>, vector<8x8xf32> -> vector<8x8xf32>
    %258 = vector.extract_strided_slice %255 {offsets = [0, 0], sizes = [8, 1], strides = [1, 1]} : vector<8x4xf32> to vector<8x1xf32>
    %259 = vector.extract_strided_slice %256 {offsets = [0, 0], sizes = [1, 8], strides = [1, 1]} : vector<4x8xf32> to vector<1x8xf32>
    %260 = vector.broadcast %258 : vector<8x1xf32> to vector<8x8xf32>
    %261 = vector.broadcast %259 : vector<1x8xf32> to vector<8x8xf32>
    %262 = arith.subf %260, %261 : vector<8x8xf32>
    %cst_78 = arith.constant 0.000000e+00 : f32
    %263 = vector.broadcast %cst_78 : f32 to vector<8x8xf32>
    %264 = arith.minimumf %262, %263 : vector<8x8xf32>
    %265 = math.exp %264 : vector<8x8xf32>
    %266 = arith.mulf %265, %59 : vector<8x8xf32>
    %267 = vector.extract_strided_slice %253 {offsets = [0, 0], sizes = [8, 1], strides = [1, 1]} : vector<8x4xf32> to vector<8x1xf32>
    %268 = vector.extract_strided_slice %252 {offsets = [0, 0], sizes = [8, 8], strides = [1, 1]} : vector<8x32xf32> to vector<8x8xf32>
    %269 = vector.broadcast %267 : vector<8x1xf32> to vector<8x8xf32>
    %270 = arith.mulf %269, %268 : vector<8x8xf32>
    %271 = arith.mulf %257, %266 : vector<8x8xf32>
    %cst_79 = arith.constant dense<0.000000e+00> : vector<8x8xf32>
    %272 = tpu.matmul %271, %270, %cst_79 {dimension_numbers = #tpu.dot_dimension_numbers<[1], [0], [0], [1], [0, 0, 1, 1], [], []>} : vector<8x8xf32>, vector<8x8xf32>, vector<8x8xf32> -> vector<8x8xf32>
    %273 = vector.extract_strided_slice %255 {offsets = [0, 1], sizes = [8, 1], strides = [1, 1]} : vector<8x4xf32> to vector<8x1xf32>
    %274 = vector.extract_strided_slice %256 {offsets = [1, 0], sizes = [1, 8], strides = [1, 1]} : vector<4x8xf32> to vector<1x8xf32>
    %275 = vector.broadcast %273 : vector<8x1xf32> to vector<8x8xf32>
    %276 = vector.broadcast %274 : vector<1x8xf32> to vector<8x8xf32>
    %277 = arith.subf %275, %276 : vector<8x8xf32>
    %cst_80 = arith.constant 0.000000e+00 : f32
    %278 = vector.broadcast %cst_80 : f32 to vector<8x8xf32>
    %279 = arith.minimumf %277, %278 : vector<8x8xf32>
    %280 = math.exp %279 : vector<8x8xf32>
    %281 = arith.mulf %280, %59 : vector<8x8xf32>
    %282 = vector.extract_strided_slice %253 {offsets = [0, 1], sizes = [8, 1], strides = [1, 1]} : vector<8x4xf32> to vector<8x1xf32>
    %283 = vector.extract_strided_slice %252 {offsets = [0, 8], sizes = [8, 8], strides = [1, 1]} : vector<8x32xf32> to vector<8x8xf32>
    %284 = vector.broadcast %282 : vector<8x1xf32> to vector<8x8xf32>
    %285 = arith.mulf %284, %283 : vector<8x8xf32>
    %286 = arith.mulf %257, %281 : vector<8x8xf32>
    %cst_81 = arith.constant dense<0.000000e+00> : vector<8x8xf32>
    %287 = tpu.matmul %286, %285, %cst_81 {dimension_numbers = #tpu.dot_dimension_numbers<[1], [0], [0], [1], [0, 0, 1, 1], [], []>} : vector<8x8xf32>, vector<8x8xf32>, vector<8x8xf32> -> vector<8x8xf32>
    %288 = vector.extract_strided_slice %255 {offsets = [0, 2], sizes = [8, 1], strides = [1, 1]} : vector<8x4xf32> to vector<8x1xf32>
    %289 = vector.extract_strided_slice %256 {offsets = [2, 0], sizes = [1, 8], strides = [1, 1]} : vector<4x8xf32> to vector<1x8xf32>
    %290 = vector.broadcast %288 : vector<8x1xf32> to vector<8x8xf32>
    %291 = vector.broadcast %289 : vector<1x8xf32> to vector<8x8xf32>
    %292 = arith.subf %290, %291 : vector<8x8xf32>
    %cst_82 = arith.constant 0.000000e+00 : f32
    %293 = vector.broadcast %cst_82 : f32 to vector<8x8xf32>
    %294 = arith.minimumf %292, %293 : vector<8x8xf32>
    %295 = math.exp %294 : vector<8x8xf32>
    %296 = arith.mulf %295, %59 : vector<8x8xf32>
    %297 = vector.extract_strided_slice %253 {offsets = [0, 2], sizes = [8, 1], strides = [1, 1]} : vector<8x4xf32> to vector<8x1xf32>
    %298 = vector.extract_strided_slice %252 {offsets = [0, 16], sizes = [8, 8], strides = [1, 1]} : vector<8x32xf32> to vector<8x8xf32>
    %299 = vector.broadcast %297 : vector<8x1xf32> to vector<8x8xf32>
    %300 = arith.mulf %299, %298 : vector<8x8xf32>
    %301 = arith.mulf %257, %296 : vector<8x8xf32>
    %cst_83 = arith.constant dense<0.000000e+00> : vector<8x8xf32>
    %302 = tpu.matmul %301, %300, %cst_83 {dimension_numbers = #tpu.dot_dimension_numbers<[1], [0], [0], [1], [0, 0, 1, 1], [], []>} : vector<8x8xf32>, vector<8x8xf32>, vector<8x8xf32> -> vector<8x8xf32>
    %303 = vector.extract_strided_slice %255 {offsets = [0, 3], sizes = [8, 1], strides = [1, 1]} : vector<8x4xf32> to vector<8x1xf32>
    %304 = vector.extract_strided_slice %256 {offsets = [3, 0], sizes = [1, 8], strides = [1, 1]} : vector<4x8xf32> to vector<1x8xf32>
    %305 = vector.broadcast %303 : vector<8x1xf32> to vector<8x8xf32>
    %306 = vector.broadcast %304 : vector<1x8xf32> to vector<8x8xf32>
    %307 = arith.subf %305, %306 : vector<8x8xf32>
    %cst_84 = arith.constant 0.000000e+00 : f32
    %308 = vector.broadcast %cst_84 : f32 to vector<8x8xf32>
    %309 = arith.minimumf %307, %308 : vector<8x8xf32>
    %310 = math.exp %309 : vector<8x8xf32>
    %311 = arith.mulf %310, %59 : vector<8x8xf32>
    %312 = vector.extract_strided_slice %253 {offsets = [0, 3], sizes = [8, 1], strides = [1, 1]} : vector<8x4xf32> to vector<8x1xf32>
    %313 = vector.extract_strided_slice %252 {offsets = [0, 24], sizes = [8, 8], strides = [1, 1]} : vector<8x32xf32> to vector<8x8xf32>
    %314 = vector.broadcast %312 : vector<8x1xf32> to vector<8x8xf32>
    %315 = arith.mulf %314, %313 : vector<8x8xf32>
    %316 = arith.mulf %257, %311 : vector<8x8xf32>
    %cst_85 = arith.constant dense<0.000000e+00> : vector<8x8xf32>
    %317 = tpu.matmul %316, %315, %cst_85 {dimension_numbers = #tpu.dot_dimension_numbers<[1], [0], [0], [1], [0, 0, 1, 1], [], []>} : vector<8x8xf32>, vector<8x8xf32>, vector<8x8xf32> -> vector<8x8xf32>
    %318 = tpu.concatenate %272, %287, %302, %317 in 1 : vector<8x8xf32>, vector<8x8xf32>, vector<8x8xf32>, vector<8x8xf32> -> vector<8x32xf32>
    %319 = vector.broadcast %39 : vector<1x32xf32> to vector<8x32xf32>
    %320 = arith.mulf %319, %252 : vector<8x32xf32>
    %321 = arith.addf %318, %320 : vector<8x32xf32>
    %322 = vector.extract_strided_slice %29 {offsets = [8, 0], sizes = [8, 32], strides = [1, 1]} : vector<16x32xf32> to vector<8x32xf32>
    %cst_86 = arith.constant 0.000000e+00 : f32
    %323 = vector.broadcast %cst_86 : f32 to vector<8x32xf32>
    %324 = arith.subf %323, %322 : vector<8x32xf32>
    %325 = math.exp %324 : vector<8x32xf32>
    %cst_87 = arith.constant 1.000000e+00 : f32
    %326 = vector.broadcast %cst_87 : f32 to vector<8x32xf32>
    %327 = arith.addf %326, %325 : vector<8x32xf32>
    %cst_88 = arith.constant 1.000000e+00 : f32
    %328 = vector.broadcast %cst_88 : f32 to vector<8x32xf32>
    %329 = arith.divf %328, %327 : vector<8x32xf32>
    %330 = arith.mulf %322, %329 : vector<8x32xf32>
    %331 = arith.mulf %321, %330 : vector<8x32xf32>
    %332 = arith.mulf %331, %331 : vector<8x32xf32>
    %cst_89 = arith.constant dense<0.000000e+00> : vector<8xf32>
    %333 = vector.multi_reduction <add>, %332, %cst_89 [1] : vector<8x32xf32> to vector<8xf32>
    %334 = vector.shape_cast %333 : vector<8xf32> to vector<8x1xf32>
    %cst_90 = arith.constant 3.200000e+01 : f32
    %335 = vector.broadcast %cst_90 : f32 to vector<8x1xf32>
    %336 = arith.divf %334, %335 : vector<8x1xf32>
    %cst_91 = arith.constant 9.99999974E-6 : f32
    %337 = vector.broadcast %cst_91 : f32 to vector<8x1xf32>
    %338 = arith.addf %336, %337 : vector<8x1xf32>
    %339 = math.rsqrt %338 : vector<8x1xf32>
    %340 = vector.broadcast %339 : vector<8x1xf32> to vector<8x32xf32>
    %341 = arith.mulf %331, %340 : vector<8x32xf32>
    %342 = vector.broadcast %40 : vector<1x32xf32> to vector<8x32xf32>
    %343 = arith.mulf %341, %342 : vector<8x32xf32>
    %344 = tpu.concatenate %202, %343 in 0 : vector<8x32xf32>, vector<8x32xf32> -> vector<16x32xf32>
    %345 = arith.truncf %344 : vector<16x32xf32> to vector<16x32xbf16>
    %c0_92 = arith.constant 0 : index
    %c0_93 = arith.constant 0 : index
    %346 = vector.load %arg9[%c0_92, %c0_93] : memref<32x32xbf16, #tpu.memory_space<vmem>>, vector<32x32xbf16>
    %cst_94 = arith.constant dense<0.000000e+00> : vector<16x32xf32>
    %347 = tpu.matmul %345, %346, %cst_94 {dimension_numbers = #tpu.dot_dimension_numbers<[1], [0], [0], [1], [0, 0, 1, 1], [], []>} : vector<16x32xbf16>, vector<32x32xbf16>, vector<16x32xf32> -> vector<16x32xf32>
    %348 = arith.truncf %347 : vector<16x32xf32> to vector<16x32xbf16>
    %c0_95 = arith.constant 0 : index
    %c0_96 = arith.constant 0 : index
    %349 = vector.load %arg10[%c0_95, %c0_96] : memref<32x32xbf16, #tpu.memory_space<vmem>>, vector<32x32xbf16>
    %cst_97 = arith.constant dense<0.000000e+00> : vector<16x32xf32>
    %350 = tpu.matmul %348, %349, %cst_97 {dimension_numbers = #tpu.dot_dimension_numbers<[1], [0], [0], [1], [0, 0, 1, 1], [], []>} : vector<16x32xbf16>, vector<32x32xbf16>, vector<16x32xf32> -> vector<16x32xf32>
    %351 = arith.addf %0, %350 : vector<16x32xf32>
    %c2_98 = arith.constant 2 : index
    %c0_99 = arith.constant 0 : index
    %352 = vector.load %arg2[%c2_98, %c0_99] : memref<3x32xf32, #tpu.memory_space<vmem>>, vector<1x32xf32>
    %353 = arith.mulf %351, %351 : vector<16x32xf32>
    %cst_100 = arith.constant dense<0.000000e+00> : vector<16xf32>
    %354 = vector.multi_reduction <add>, %353, %cst_100 [1] : vector<16x32xf32> to vector<16xf32>
    %355 = vector.shape_cast %354 : vector<16xf32> to vector<16x1xf32>
    %cst_101 = arith.constant 3.200000e+01 : f32
    %356 = vector.broadcast %cst_101 : f32 to vector<16x1xf32>
    %357 = arith.divf %355, %356 : vector<16x1xf32>
    %cst_102 = arith.constant 9.99999974E-6 : f32
    %358 = vector.broadcast %cst_102 : f32 to vector<16x1xf32>
    %359 = arith.addf %357, %358 : vector<16x1xf32>
    %360 = math.rsqrt %359 : vector<16x1xf32>
    %361 = vector.broadcast %360 : vector<16x1xf32> to vector<16x32xf32>
    %362 = arith.mulf %351, %361 : vector<16x32xf32>
    %363 = vector.broadcast %352 : vector<1x32xf32> to vector<16x32xf32>
    %364 = arith.mulf %362, %363 : vector<16x32xf32>
    %365 = arith.truncf %364 : vector<16x32xf32> to vector<16x32xbf16>
    %c0_103 = arith.constant 0 : index
    %c0_104 = arith.constant 0 : index
    %366 = vector.load %arg11[%c0_103, %c0_104] : memref<32x256xbf16, #tpu.memory_space<vmem>>, vector<32x256xbf16>
    %cst_105 = arith.constant dense<0.000000e+00> : vector<16x256xf32>
    %367 = tpu.matmul %365, %366, %cst_105 {dimension_numbers = #tpu.dot_dimension_numbers<[1], [0], [0], [1], [0, 0, 1, 1], [], []>} : vector<16x32xbf16>, vector<32x256xbf16>, vector<16x256xf32> -> vector<16x256xf32>
    %c0_106 = arith.constant 0 : index
    %c0_107 = arith.constant 0 : index
    %368 = vector.load %arg12[%c0_106, %c0_107] : memref<32x256xbf16, #tpu.memory_space<vmem>>, vector<32x256xbf16>
    %cst_108 = arith.constant dense<0.000000e+00> : vector<16x256xf32>
    %369 = tpu.matmul %365, %368, %cst_108 {dimension_numbers = #tpu.dot_dimension_numbers<[1], [0], [0], [1], [0, 0, 1, 1], [], []>} : vector<16x32xbf16>, vector<32x256xbf16>, vector<16x256xf32> -> vector<16x256xf32>
    %cst_109 = arith.constant 0.000000e+00 : f32
    %370 = vector.broadcast %cst_109 : f32 to vector<16x256xf32>
    %371 = arith.subf %370, %367 : vector<16x256xf32>
    %372 = math.exp %371 : vector<16x256xf32>
    %cst_110 = arith.constant 1.000000e+00 : f32
    %373 = vector.broadcast %cst_110 : f32 to vector<16x256xf32>
    %374 = arith.addf %373, %372 : vector<16x256xf32>
    %cst_111 = arith.constant 1.000000e+00 : f32
    %375 = vector.broadcast %cst_111 : f32 to vector<16x256xf32>
    %376 = arith.divf %375, %374 : vector<16x256xf32>
    %377 = arith.mulf %367, %376 : vector<16x256xf32>
    %378 = arith.mulf %377, %369 : vector<16x256xf32>
    %379 = arith.truncf %378 : vector<16x256xf32> to vector<16x256xbf16>
    %c0_112 = arith.constant 0 : index
    %c0_113 = arith.constant 0 : index
    %380 = vector.load %arg13[%c0_112, %c0_113] : memref<256x32xbf16, #tpu.memory_space<vmem>>, vector<256x32xbf16>
    %cst_114 = arith.constant dense<0.000000e+00> : vector<16x32xf32>
    %381 = tpu.matmul %379, %380, %cst_114 {dimension_numbers = #tpu.dot_dimension_numbers<[1], [0], [0], [1], [0, 0, 1, 1], [], []>} : vector<16x256xbf16>, vector<256x32xbf16>, vector<16x32xf32> -> vector<16x32xf32>
    %382 = arith.addf %351, %381 : vector<16x32xf32>
    %c0_115 = arith.constant 0 : index
    %c0_116 = arith.constant 0 : index
    %383 = vector.load %arg14[%c0_115, %c0_116] : memref<16x32xf32, #tpu.memory_space<vmem>>, vector<16x32xf32>
    tpu.vector_store %arg14[%c0_115, %c0_116], %382 {strides = array<i32>} : memref<16x32xf32, #tpu.memory_space<vmem>>, vector<16x32xf32>,
    return
  }
  func.func @transform_0(%arg0: i32) -> (i32, i32) {
    %c0_i32 = arith.constant 0 : i32
    %c0_i32_0 = arith.constant 0 : i32
    return %arg0, %c0_i32 : i32, i32
  }
  func.func @transform_1(%arg0: i32) -> (i32, i32) {
    %c0_i32 = arith.constant 0 : i32
    %c0_i32_0 = arith.constant 0 : i32
    %c0_i32_1 = arith.constant 0 : i32
    return %c0_i32, %c0_i32_0 : i32, i32
  }
  func.func @transform_2(%arg0: i32) -> (i32, i32) {
    %c0_i32 = arith.constant 0 : i32
    %c0_i32_0 = arith.constant 0 : i32
    %c0_i32_1 = arith.constant 0 : i32
    return %c0_i32, %c0_i32_0 : i32, i32
  }
  func.func @transform_3(%arg0: i32) -> (i32, i32) {
    %c0_i32 = arith.constant 0 : i32
    %c0_i32_0 = arith.constant 0 : i32
    %c0_i32_1 = arith.constant 0 : i32
    return %c0_i32, %c0_i32_0 : i32, i32
  }
  func.func @transform_4(%arg0: i32) -> (i32, i32) {
    %c0_i32 = arith.constant 0 : i32
    %c0_i32_0 = arith.constant 0 : i32
    %c0_i32_1 = arith.constant 0 : i32
    return %c0_i32, %c0_i32_0 : i32, i32
  }
  func.func @transform_5(%arg0: i32) -> (i32, i32) {
    %c0_i32 = arith.constant 0 : i32
    %c0_i32_0 = arith.constant 0 : i32
    %c0_i32_1 = arith.constant 0 : i32
    return %c0_i32, %c0_i32_0 : i32, i32
  }
  func.func @transform_6(%arg0: i32) -> (i32, i32) {
    %c0_i32 = arith.constant 0 : i32
    %c0_i32_0 = arith.constant 0 : i32
    %c0_i32_1 = arith.constant 0 : i32
    return %c0_i32, %c0_i32_0 : i32, i32
  }
  func.func @transform_7(%arg0: i32) -> (i32, i32) {
    %c0_i32 = arith.constant 0 : i32
    %c0_i32_0 = arith.constant 0 : i32
    %c0_i32_1 = arith.constant 0 : i32
    return %c0_i32, %c0_i32_0 : i32, i32
  }
  func.func @transform_8(%arg0: i32) -> (i32, i32) {
    %c0_i32 = arith.constant 0 : i32
    %c0_i32_0 = arith.constant 0 : i32
    %c0_i32_1 = arith.constant 0 : i32
    return %c0_i32, %c0_i32_0 : i32, i32
  }
  func.func @transform_9(%arg0: i32) -> (i32, i32) {
    %c0_i32 = arith.constant 0 : i32
    %c0_i32_0 = arith.constant 0 : i32
    %c0_i32_1 = arith.constant 0 : i32
    return %c0_i32, %c0_i32_0 : i32, i32
  }
  func.func @transform_10(%arg0: i32) -> (i32, i32) {
    %c0_i32 = arith.constant 0 : i32
    %c0_i32_0 = arith.constant 0 : i32
    %c0_i32_1 = arith.constant 0 : i32
    return %c0_i32, %c0_i32_0 : i32, i32
  }
  func.func @transform_11(%arg0: i32) -> (i32, i32) {
    %c0_i32 = arith.constant 0 : i32
    %c0_i32_0 = arith.constant 0 : i32
    %c0_i32_1 = arith.constant 0 : i32
    return %c0_i32, %c0_i32_0 : i32, i32
  }
  func.func @transform_12(%arg0: i32) -> (i32, i32) {
    %c0_i32 = arith.constant 0 : i32
    %c0_i32_0 = arith.constant 0 : i32
    %c0_i32_1 = arith.constant 0 : i32
    return %c0_i32, %c0_i32_0 : i32, i32
  }
  func.func @transform_13(%arg0: i32) -> (i32, i32) {
    %c0_i32 = arith.constant 0 : i32
    %c0_i32_0 = arith.constant 0 : i32
    return %arg0, %c0_i32 : i32, i32
  }
}

</mosaic_0001>

<llo_original>
// kernel: tpu_custom_call.1
$region0: #{tpu_custom_call.1}
  #allocation0 [shape = 'u32[]', space=smem, size = 0x4, offset = 0x4, fixed_abs, tag = 'smem constant byte address 0x4 - core index']
  #allocation1 [shape = 'u32[144,128]{1,0:T(1,128)}', space=vmem, size = 0x12000, scoped, tag = 'internal scratch']
  %s0 = inlined_call_operand.hbm [shape: f32[16,32], index: 0, kind: input, shape index: {}]
  %s1 = inlined_call_operand.hbm [shape: f32[3,32], index: 1, kind: input, shape index: {}]
  %s2 = inlined_call_operand.hbm [shape: bf16[32,32], index: 2, kind: input, shape index: {}]
  %s3 = inlined_call_operand.vmem [shape: bf16[32,544], index: 3, kind: input, shape index: {}]
  %s4 = inlined_call_operand.vmem [shape: bf16[32,4], index: 4, kind: input, shape index: {}]
  %s5 = inlined_call_operand.vmem [shape: f32[5,544], index: 5, kind: input, shape index: {}]
  %s6 = inlined_call_operand.vmem [shape: f32[2,4], index: 6, kind: input, shape index: {}]
  %s7 = inlined_call_operand.vmem [shape: f32[2,32], index: 7, kind: input, shape index: {}]
  %s8 = inlined_call_operand.hbm [shape: bf16[32,32], index: 8, kind: input, shape index: {}]
  %s9 = inlined_call_operand.hbm [shape: bf16[32,32], index: 9, kind: input, shape index: {}]
  %s10 = inlined_call_operand.vmem [shape: bf16[32,256], index: 10, kind: input, shape index: {}]
  %s11 = inlined_call_operand.vmem [shape: bf16[32,256], index: 11, kind: input, shape index: {}]
  %s12 = inlined_call_operand.vmem [shape: bf16[256,32], index: 12, kind: input, shape index: {}]
  %s13 = inlined_call_operand.hbm [shape: f32[16,32], index: 13, kind: output, shape index: {}]
  %s14 = sld [smem:[#allocation0]]
  $region82: #{tpu_custom_call.1} parent=0
    _
  %s16 = ssub.s32 1, %s14
  %s17 = scalar_select 0, %s16, %s14
  $region1: #{tpu_custom_call.1} parent=0
    #allocation2 [shape = 'u8[8192]{0}', space=vmem, size = 0x2000, scoped, tag = 'input window, operand 0, single buffered']
    #allocation3 [shape = 's32[1]{0}', space=sflag, size = 0x4, scoped, tag = 'scoped memory for tpu_custom_call.1']
    #allocation4 [shape = 's32[1]{0}', space=sflag, size = 0x4, scoped, tag = 'scoped memory for tpu_custom_call.1']
    #allocation5 [shape = 'u8[2048]{0}', space=vmem, size = 0x800, scoped, tag = 'input window, operand 1, single buffered']
    #allocation6 [shape = 's32[1]{0}', space=sflag, size = 0x4, scoped, tag = 'scoped memory for tpu_custom_call.1']
    #allocation7 [shape = 'u8[8192]{0}', space=vmem, size = 0x2000, scoped, tag = 'input window, operand 2, single buffered']
    #allocation8 [shape = 'u8[8192]{0}', space=vmem, size = 0x2000, scoped, tag = 'input window, operand 8, single buffered']
    #allocation9 [shape = 's32[1]{0}', space=sflag, size = 0x4, scoped, tag = 'scoped memory for tpu_custom_call.1']
    #allocation10 [shape = 'u8[8192]{0}', space=vmem, size = 0x2000, scoped, tag = 'input window, operand 9, single buffered']
    #allocation11 [shape = 'u8[8192]{0}', space=vmem, size = 0x2000, scoped, tag = 'output window, operand 0, single buffered']
    %18 = vsyncpa [#allocation3], 0
    %19 = vsyncpa [#allocation6], 0
    %20 = vsyncpa [#allocation9], 0
    %21 = vsyncpa [#allocation4], 0
    // Predicated region
    $region2: #{tpu_custom_call.1} parent=1 // pred_check
      _
    $region3: #{tpu_custom_call.1} parent=1 // pred_check_branch
      %23 = sbr.rel (0) target = $region5
    $region4: #{tpu_custom_call.1} parent=1 // pred_region
      %s25 = ssub.s32 256, 256
      %26 = vsyncadd [#allocation3], %s25
      %s27 = sshll.u32 [#allocation2], 4
      %s28 = int_to_ptr.vmem [resolvable:$true] %s27
      %33 = dma.hbm_to_vmem [thread:$0]  %s0, 256, %s28, [#allocation3], 128, 128, 8
    $region5: #{tpu_custom_call.1} parent=1 // pred_fallthru
      _
    // Predicated region
    $region6: #{tpu_custom_call.1} parent=1 // pred_check
      _
    $region7: #{tpu_custom_call.1} parent=1 // pred_check_branch
      %35 = sbr.rel (0) target = $region9
    $region8: #{tpu_custom_call.1} parent=1 // pred_region
      %s37 = ssub.s32 64, 64
      %38 = vsyncadd [#allocation6], %s37
      %s40 = sshll.u32 [#allocation5], 4
      %s41 = int_to_ptr.vmem [resolvable:$true] %s40
      %43 = dma.hbm_to_vmem [thread:$0]  %s1, 64, %s41, [#allocation6]
    $region9: #{tpu_custom_call.1} parent=1 // pred_fallthru
      _
    // Predicated region
    $region10: #{tpu_custom_call.1} parent=1 // pred_check
      _
    $region11: #{tpu_custom_call.1} parent=1 // pred_check_branch
      %45 = sbr.rel (0) target = $region13
    $region12: #{tpu_custom_call.1} parent=1 // pred_region
      %s47 = ssub.s32 256, 256
      %48 = vsyncadd [#allocation6], %s47
      %s49 = sshll.u32 [#allocation7], 4
      %s50 = int_to_ptr.vmem [resolvable:$true] %s49
      %55 = dma.hbm_to_vmem [thread:$0]  %s2, 256, %s50, [#allocation6], 64, 64, 4
    $region13: #{tpu_custom_call.1} parent=1 // pred_fallthru
      _
    // Predicated region
    $region14: #{tpu_custom_call.1} parent=1 // pred_check
      _
    $region15: #{tpu_custom_call.1} parent=1 // pred_check_branch
      %57 = sbr.rel (0) target = $region17
    $region16: #{tpu_custom_call.1} parent=1 // pred_region
      _
    $region17: #{tpu_custom_call.1} parent=1 // pred_fallthru
      _
    // Predicated region
    $region18: #{tpu_custom_call.1} parent=1 // pred_check
      _
    $region19: #{tpu_custom_call.1} parent=1 // pred_check_branch
      %59 = sbr.rel (0) target = $region21
    $region20: #{tpu_custom_call.1} parent=1 // pred_region
      _
    $region21: #{tpu_custom_call.1} parent=1 // pred_fallthru
      _
    // Predicated region
    $region22: #{tpu_custom_call.1} parent=1 // pred_check
      _
    $region23: #{tpu_custom_call.1} parent=1 // pred_check_branch
      %61 = sbr.rel (0) target = $region25
    $region24: #{tpu_custom_call.1} parent=1 // pred_region
      _
    $region25: #{tpu_custom_call.1} parent=1 // pred_fallthru
      _
    // Predicated region
    $region26: #{tpu_custom_call.1} parent=1 // pred_check
      _
    $region27: #{tpu_custom_call.1} parent=1 // pred_check_branch
      %63 = sbr.rel (0) target = $region29
    $region28: #{tpu_custom_call.1} parent=1 // pred_region
      _
    $region29: #{tpu_custom_call.1} parent=1 // pred_fallthru
      _
    // Predicated region
    $region30: #{tpu_custom_call.1} parent=1 // pred_check
      _
    $region31: #{tpu_custom_call.1} parent=1 // pred_check_branch
      %65 = sbr.rel (0) target = $region33
    $region32: #{tpu_custom_call.1} parent=1 // pred_region
      _
    $region33: #{tpu_custom_call.1} parent=1 // pred_fallthru
      _
    // Predicated region
    $region34: #{tpu_custom_call.1} parent=1 // pred_check
      _
    $region35: #{tpu_custom_call.1} parent=1 // pred_check_branch
      %67 = sbr.rel (0) target = $region37
    $region36: #{tpu_custom_call.1} parent=1 // pred_region
      %s69 = ssub.s32 256, 256
      %70 = vsyncadd [#allocation9], %s69
      %s71 = sshll.u32 [#allocation8], 4
      %s72 = int_to_ptr.vmem [resolvable:$true] %s71
      %77 = dma.hbm_to_vmem [thread:$0]  %s8, 256, %s72, [#allocation9], 64, 64, 4
    $region37: #{tpu_custom_call.1} parent=1 // pred_fallthru
      _
    // Predicated region
    $region38: #{tpu_custom_call.1} parent=1 // pred_check
      _
    $region39: #{tpu_custom_call.1} parent=1 // pred_check_branch
      %79 = sbr.rel (0) target = $region41
    $region40: #{tpu_custom_call.1} parent=1 // pred_region
      %s81 = ssub.s32 256, 256
      %82 = vsyncadd [#allocation9], %s81
      %s83 = sshll.u32 [#allocation10], 4
      %s84 = int_to_ptr.vmem [resolvable:$true] %s83
      %89 = dma.hbm_to_vmem [thread:$0]  %s9, 256, %s84, [#allocation9], 64, 64, 4
    $region41: #{tpu_custom_call.1} parent=1 // pred_fallthru
      _
    // Predicated region
    $region42: #{tpu_custom_call.1} parent=1 // pred_check
      _
    $region43: #{tpu_custom_call.1} parent=1 // pred_check_branch
      %91 = sbr.rel (0) target = $region45
    $region44: #{tpu_custom_call.1} parent=1 // pred_region
      _
    $region45: #{tpu_custom_call.1} parent=1 // pred_fallthru
      _
    // Predicated region
    $region46: #{tpu_custom_call.1} parent=1 // pred_check
      _
    $region47: #{tpu_custom_call.1} parent=1 // pred_check_branch
      %93 = sbr.rel (0) target = $region49
    $region48: #{tpu_custom_call.1} parent=1 // pred_region
      _
    $region49: #{tpu_custom_call.1} parent=1 // pred_fallthru
      _
    // Predicated region
    $region50: #{tpu_custom_call.1} parent=1 // pred_check
      _
    $region51: #{tpu_custom_call.1} parent=1 // pred_check_branch
      %95 = sbr.rel (0) target = $region53
    $region52: #{tpu_custom_call.1} parent=1 // pred_region
      _
    $region53: #{tpu_custom_call.1} parent=1 // pred_fallthru
      _
    // Predicated region
    $region54: #{tpu_custom_call.1} parent=1 // pred_check
      _
    $region55: #{tpu_custom_call.1} parent=1 // pred_check_branch
      %97 = sbr.rel (0) target = $region57
    $region56: #{tpu_custom_call.1} parent=1 // pred_region
      %98 = dma.done [#allocation3], 256
    $region57: #{tpu_custom_call.1} parent=1 // pred_fallthru
      _
    // Predicated region
    $region58: #{tpu_custom_call.1} parent=1 // pred_check
      _
    $region59: #{tpu_custom_call.1} parent=1 // pred_check_branch
      %100 = sbr.rel (0) target = $region61
    $region60: #{tpu_custom_call.1} parent=1 // pred_region
      %101 = dma.done [#allocation6], 64
    $region61: #{tpu_custom_call.1} parent=1 // pred_fallthru
      _
    // Predicated region
    $region62: #{tpu_custom_call.1} parent=1 // pred_check
      _
    $region63: #{tpu_custom_call.1} parent=1 // pred_check_branch
      %103 = sbr.rel (0) target = $region65
    $region64: #{tpu_custom_call.1} parent=1 // pred_region
      %104 = dma.done [#allocation6], 256
    $region65: #{tpu_custom_call.1} parent=1 // pred_fallthru
      _
    // Predicated region
    $region66: #{tpu_custom_call.1} parent=1 // pred_check
      _
    $region67: #{tpu_custom_call.1} parent=1 // pred_check_branch
      %106 = sbr.rel (0) target = $region69
    $region68: #{tpu_custom_call.1} parent=1 // pred_region
      %107 = dma.done [#allocation9], 256
    $region69: #{tpu_custom_call.1} parent=1 // pred_fallthru
      _
    // Predicated region
    $region70: #{tpu_custom_call.1} parent=1 // pred_check
      _
    $region71: #{tpu_custom_call.1} parent=1 // pred_check_branch
      %109 = sbr.rel (0) target = $region73
    $region72: #{tpu_custom_call.1} parent=1 // pred_region
      %110 = dma.done [#allocation9], 256
    $region73: #{tpu_custom_call.1} parent=1 // pred_fallthru
      _
    %v112 = vld [vmem:[#allocation2] sm:$0xff]
    %v113 = vld [vmem:[#allocation2 + $0x8] sm:$0xff]
    %v114 = vld [vmem:[#allocation5] sm:$0x1]
    %v115 = vmul.f32 %v112, %v112
    %v116 = vmul.f32 %v113, %v113
    %vm117 = vcmask 261120
    %v118 = vsel %vm117, %v115, 0.0
    %119 = vadd.xlane.f32.xlu0 %v118
    %v120 = vpop.xlane.xlu0 %119
    %v121 = vsel %vm117, %v116, 0.0
    %122 = vadd.xlane.f32.xlu0 %v121
    %v123 = vpop.xlane.xlu0 %122
    %v124 = vrcp.pop 32.0
    %v125 = vmul.f32 %v120, %v124
    %v126 = vmul.f32 %v123, %v124
    %v127 = vadd.f32 %v125, 1e-05
    %v128 = vadd.f32 %v126, 1e-05
    %v129 = vrsqrt.pop %v127
    %v130 = vrsqrt.pop %v128
    %v131 = vmul.f32 %v112, %v129
    %v132 = vmul.f32 %v113, %v130
    %v133 = vlaneseq
    %v134 = vshrl.u32 %v133, 7
    %v135 = vsub.s32 0, %v134
    %v136 = vrot.slane %v114, %v135
    %v137 = vmul.f32 %v131, %v136
    %v138 = vmul.f32 %v132, %v136
    %v139 = vld [vmem:[#allocation5 + $0x1] sm:$0x1]
    %v140 = vmul.f32 %v137, %v137
    %v141 = vmul.f32 %v138, %v138
    %v142 = vsel %vm117, %v140, 0.0
    %143 = vadd.xlane.f32.xlu0 %v142
    %v144 = vpop.xlane.xlu0 %143
    %v145 = vsel %vm117, %v141, 0.0
    %146 = vadd.xlane.f32.xlu0 %v145
    %v147 = vpop.xlane.xlu0 %146
    %v148 = vmul.f32 %v144, %v124
    %v149 = vmul.f32 %v147, %v124
    %v150 = vadd.f32 %v148, 1e-05
    %v151 = vadd.f32 %v149, 1e-05
    %v152 = vrsqrt.pop %v150
    %v153 = vrsqrt.pop %v151
    %v154 = vmul.f32 %v137, %v152
    %v155 = vmul.f32 %v138, %v153
    %v156 = vlaneseq
    %v157 = vshrl.u32 %v156, 7
    %v158 = vsub.s32 0, %v157
    %v159 = vrot.slane %v139, %v158
    %v160 = vmul.f32 %v154, %v159
    %v161 = vmul.f32 %v155, %v159
    %v162 = vpack.c.bf16 %v161, %v160
    %v163 = vld [vmem:[#allocation7] sm:$0xf]
    %v164 = vld [vmem:[#allocation7 + $0x4] sm:$0xf]
    %v165 = vld [vmem:[#allocation7 + $0x8] sm:$0xf]
    %v166 = vld [vmem:[#allocation7 + $0xc] sm:$0xf]
    %v171 = vunpack.c.l.b16 %v163
    %v172 = vunpack.c.l.b16 %v164
    %v173 = vunpack.c.l.b16 %v165
    %v174 = vunpack.c.l.b16 %v166
    %v175 = vpack.c.b16 %v172, %v171
    %v176 = vpack.c.b16 %v174, %v173
    %v180 = vsel %vm117, %v162, 0
    %182 = vmatprep.subr.bf16.mxu0 0
    %183 = vmatpush1.bf16.msra.mxu0 %v175
    %184 = vmatprep.subr.bf16.mxu0 0
    %185 = vmatpush1.bf16.msra.mxu0 %v176
    %186 = vmatprep.subr.bf16.mxu0 0
    %187 = vmatpush1.bf16.msra.mxu0 0
    %188 = vmatprep.subr.bf16.mxu0 0
    %189 = vmatpush1.bf16.msra.mxu0 0
    %190 = vmatprep.subr.bf16.mxu0 0
    %191 = vmatpush1.bf16.msra.mxu0 0
    %192 = vmatprep.subr.bf16.mxu0 0
    %193 = vmatpush1.bf16.msra.mxu0 0
    %194 = vmatprep.subr.bf16.mxu0 0
    %195 = vmatpush1.bf16.msra.mxu0 0
    %196 = vmatprep.subr.bf16.mxu0 0
    %197 = vmatpush1.bf16.msra.mxu0 0
    %198 = vmatprep.subr.bf16.mxu0 0
    %199 = vmatpush1.bf16.msra.mxu0 0
    %200 = vmatprep.subr.bf16.mxu0 0
    %201 = vmatpush1.bf16.msra.mxu0 0
    %202 = vmatprep.subr.bf16.mxu0 0
    %203 = vmatpush1.bf16.msra.mxu0 0
    %204 = vmatprep.subr.bf16.mxu0 0
    %205 = vmatpush1.bf16.msra.mxu0 0
    %206 = vmatprep.subr.bf16.mxu0 0
    %207 = vmatpush1.bf16.msra.mxu0 0
    %208 = vmatprep.subr.bf16.mxu0 0
    %209 = vmatpush1.bf16.msra.mxu0 0
    %210 = vmatprep.subr.bf16.mxu0 0
    %211 = vmatpush1.bf16.msra.mxu0 0
    %212 = vmatprep.subr.bf16.mxu0 0
    %213 = vmatpush1.bf16.msra.mxu0 0
    %214 = vmatprep.mubr.bf16.mxu0 0
    %215 = vmatmul.mubr.bf16.gmra.mrb[0].mxu0 %v180
    %v216 = vpop.f32.mrb[0].mxu0
    %v217 = vadd.f32 0.0, %v216
    %v218 = vpop.f32.mrb[0].mxu0
    %v219 = vpop.f32.mrb[0].mxu0
    %v220 = vadd.f32 0.0, %v219
    %v221 = vpop.f32.mrb[0].mxu0
    %222 = vdwg.mxu0
    %v223 = vld [vmem:[%s3] sm:$0xff]
    %v224 = vld [vmem:[%s3 + $0x8] sm:$0xff]
    %v225 = vld [vmem:[%s3 + $0x10] sm:$0xf]
    %v226 = vld [vmem:[%s3 + $0x14] sm:$0xff]
    %v227 = vld [vmem:[%s3 + $0x1c] sm:$0xff]
    %v228 = vld [vmem:[%s3 + $0x24] sm:$0xf]
    %v229 = vld [vmem:[%s3 + $0x28] sm:$0xff]
    %v230 = vld [vmem:[%s3 + $0x30] sm:$0xff]
    %v231 = vld [vmem:[%s3 + $0x38] sm:$0xf]
    %v232 = vld [vmem:[%s3 + $0x3c] sm:$0xff]
    %v233 = vld [vmem:[%s3 + $0x44] sm:$0xff]
    %v234 = vld [vmem:[%s3 + $0x4c] sm:$0xf]
    %v247 = vunpack.c.l.b16 %v223
    %v248 = vunpack.c.h.b16 %v223
    %v249 = vunpack.c.l.b16 %v224
    %v250 = vunpack.c.h.b16 %v224
    %v251 = vunpack.c.l.b16 %v225
    %v252 = vunpack.c.l.b16 %v226
    %v253 = vunpack.c.h.b16 %v226
    %v254 = vunpack.c.l.b16 %v227
    %v255 = vunpack.c.h.b16 %v227
    %v256 = vunpack.c.l.b16 %v228
    %v257 = vunpack.c.l.b16 %v229
    %v258 = vunpack.c.h.b16 %v229
    %v259 = vunpack.c.l.b16 %v230
    %v260 = vunpack.c.h.b16 %v230
    %v261 = vunpack.c.l.b16 %v231
    %v262 = vunpack.c.l.b16 %v232
    %v263 = vunpack.c.h.b16 %v232
    %v264 = vunpack.c.l.b16 %v233
    %v265 = vunpack.c.h.b16 %v233
    %v266 = vunpack.c.l.b16 %v234
    %v267 = vpack.c.b16 %v252, %v247
    %v268 = vpack.c.b16 %v253, %v248
    %v269 = vpack.c.b16 %v254, %v249
    %v270 = vpack.c.b16 %v255, %v250
    %v271 = vpack.c.b16 %v256, %v251
    %v272 = vpack.c.b16 %v262, %v257
    %v273 = vpack.c.b16 %v263, %v258
    %v274 = vpack.c.b16 %v264, %v259
    %v275 = vpack.c.b16 %v265, %v260
    %v276 = vpack.c.b16 %v266, %v261
    %287 = vmatprep.subr.bf16.mxu0 %v268
    %288 = vmatpush1.bf16.msra.mxu0 %v267
    %289 = vmatprep.subr.bf16.mxu0 %v273
    %290 = vmatpush1.bf16.msra.mxu0 %v272
    %291 = vmatprep.subr.bf16.mxu0 0
    %292 = vmatpush1.bf16.msra.mxu0 0
    %293 = vmatprep.subr.bf16.mxu0 0
    %294 = vmatpush1.bf16.msra.mxu0 0
    %295 = vmatprep.subr.bf16.mxu0 0
    %296 = vmatpush1.bf16.msra.mxu0 0
    %297 = vmatprep.subr.bf16.mxu0 0
    %298 = vmatpush1.bf16.msra.mxu0 0
    %299 = vmatprep.subr.bf16.mxu0 0
    %300 = vmatpush1.bf16.msra.mxu0 0
    %301 = vmatprep.subr.bf16.mxu0 0
    %302 = vmatpush1.bf16.msra.mxu0 0
    %303 = vmatprep.subr.bf16.mxu0 0
    %304 = vmatpush1.bf16.msra.mxu0 0
    %305 = vmatprep.subr.bf16.mxu0 0
    %306 = vmatpush1.bf16.msra.mxu0 0
    %307 = vmatprep.subr.bf16.mxu0 0
    %308 = vmatpush1.bf16.msra.mxu0 0
    %309 = vmatprep.subr.bf16.mxu0 0
    %310 = vmatpush1.bf16.msra.mxu0 0
    %311 = vmatprep.subr.bf16.mxu0 0
    %312 = vmatpush1.bf16.msra.mxu0 0
    %313 = vmatprep.subr.bf16.mxu0 0
    %314 = vmatpush1.bf16.msra.mxu0 0
    %315 = vmatprep.subr.bf16.mxu0 0
    %316 = vmatpush1.bf16.msra.mxu0 0
    %317 = vmatprep.subr.bf16.mxu0 0
    %318 = vmatpush1.bf16.msra.mxu0 0
    %319 = vmatprep.mubr.bf16.mxu0 0
    %320 = vmatmul.mubr.bf16.gmra.mrb[0].mxu0 %v180
    %v321 = vpop.f32.mrb[0].mxu0
    %v322 = vadd.f32 0.0, %v321
    %v323 = vpop.f32.mrb[0].mxu0
    %v324 = vadd.f32 0.0, %v323
    %v325 = vpop.f32.mrb[0].mxu0
    %v326 = vadd.f32 0.0, %v325
    %v327 = vpop.f32.mrb[0].mxu0
    %v328 = vadd.f32 0.0, %v327
    %329 = vdwg.mxu0
    %330 = vmatprep.subr.bf16.mxu0 %v270
    %331 = vmatpush1.bf16.msra.mxu0 %v269
    %332 = vmatprep.subr.bf16.mxu0 %v275
    %333 = vmatpush1.bf16.msra.mxu0 %v274
    %334 = vmatprep.subr.bf16.mxu0 0
    %335 = vmatpush1.bf16.msra.mxu0 0
    %336 = vmatprep.subr.bf16.mxu0 0
    %337 = vmatpush1.bf16.msra.mxu0 0
    %338 = vmatprep.subr.bf16.mxu0 0
    %339 = vmatpush1.bf16.msra.mxu0 0
    %340 = vmatprep.subr.bf16.mxu0 0
    %341 = vmatpush1.bf16.msra.mxu0 0
    %342 = vmatprep.subr.bf16.mxu0 0
    %343 = vmatpush1.bf16.msra.mxu0 0
    %344 = vmatprep.subr.bf16.mxu0 0
    %345 = vmatpush1.bf16.msra.mxu0 0
    %346 = vmatprep.subr.bf16.mxu0 0
    %347 = vmatpush1.bf16.msra.mxu0 0
    %348 = vmatprep.subr.bf16.mxu0 0
    %349 = vmatpush1.bf16.msra.mxu0 0
    %350 = vmatprep.subr.bf16.mxu0 0
    %351 = vmatpush1.bf16.msra.mxu0 0
    %352 = vmatprep.subr.bf16.mxu0 0
    %353 = vmatpush1.bf16.msra.mxu0 0
    %354 = vmatprep.subr.bf16.mxu0 0
    %355 = vmatpush1.bf16.msra.mxu0 0
    %356 = vmatprep.subr.bf16.mxu0 0
    %357 = vmatpush1.bf16.msra.mxu0 0
    %358 = vmatprep.subr.bf16.mxu0 0
    %359 = vmatpush1.bf16.msra.mxu0 0
    %360 = vmatprep.subr.bf16.mxu0 0
    %361 = vmatpush1.bf16.msra.mxu0 0
    %362 = vmatprep.mubr.bf16.mxu0 0
    %363 = vmatmul.mubr.bf16.gmra.mrb[0].mxu0 %v180
    %v364 = vpop.f32.mrb[0].mxu0
    %v365 = vadd.f32 0.0, %v364
    %v366 = vpop.f32.mrb[0].mxu0
    %v367 = vadd.f32 0.0, %v366
    %v368 = vpop.f32.mrb[0].mxu0
    %v369 = vadd.f32 0.0, %v368
    %v370 = vpop.f32.mrb[0].mxu0
    %v371 = vadd.f32 0.0, %v370
    %372 = vdwg.mxu0
    %373 = vmatprep.subr.bf16.mxu0 0
    %374 = vmatpush1.bf16.msra.mxu0 %v271
    %375 = vmatprep.subr.bf16.mxu0 0
    %376 = vmatpush1.bf16.msra.mxu0 %v276
    %377 = vmatprep.subr.bf16.mxu0 0
    %378 = vmatpush1.bf16.msra.mxu0 0
    %379 = vmatprep.subr.bf16.mxu0 0
    %380 = vmatpush1.bf16.msra.mxu0 0
    %381 = vmatprep.subr.bf16.mxu0 0
    %382 = vmatpush1.bf16.msra.mxu0 0
    %383 = vmatprep.subr.bf16.mxu0 0
    %384 = vmatpush1.bf16.msra.mxu0 0
    %385 = vmatprep.subr.bf16.mxu0 0
    %386 = vmatpush1.bf16.msra.mxu0 0
    %387 = vmatprep.subr.bf16.mxu0 0
    %388 = vmatpush1.bf16.msra.mxu0 0
    %389 = vmatprep.subr.bf16.mxu0 0
    %390 = vmatpush1.bf16.msra.mxu0 0
    %391 = vmatprep.subr.bf16.mxu0 0
    %392 = vmatpush1.bf16.msra.mxu0 0
    %393 = vmatprep.subr.bf16.mxu0 0
    %394 = vmatpush1.bf16.msra.mxu0 0
    %395 = vmatprep.subr.bf16.mxu0 0
    %396 = vmatpush1.bf16.msra.mxu0 0
    %397 = vmatprep.subr.bf16.mxu0 0
    %398 = vmatpush1.bf16.msra.mxu0 0
    %399 = vmatprep.subr.bf16.mxu0 0
    %400 = vmatpush1.bf16.msra.mxu0 0
    %401 = vmatprep.subr.bf16.mxu0 0
    %402 = vmatpush1.bf16.msra.mxu0 0
    %403 = vmatprep.subr.bf16.mxu0 0
    %404 = vmatpush1.bf16.msra.mxu0 0
    %405 = vmatprep.mubr.bf16.mxu0 0
    %406 = vmatmul.mubr.bf16.gmra.mrb[0].mxu0 %v180
    %v407 = vpop.f32.mrb[0].mxu0
    %v408 = vadd.f32 0.0, %v407
    %v409 = vpop.f32.mrb[0].mxu0
    %v410 = vpop.f32.mrb[0].mxu0
    %v411 = vadd.f32 0.0, %v410
    %v412 = vpop.f32.mrb[0].mxu0
    %413 = vdwg.mxu0
    %v414 = vld [vmem:[%s4] sm:$0xf]
    %v415 = vld [vmem:[%s4 + $0x4] sm:$0xf]
    %v416 = vld [vmem:[%s4 + $0x8] sm:$0xf]
    %v417 = vld [vmem:[%s4 + $0xc] sm:$0xf]
    %v418 = vld [vmem:[%s6] sm:$0x1]
    %v419 = vmul.f32 %v418, 1.442695
    %v420 = vpow.pop %v419
    %v421 = vsub.f32 0.0, %v420
    %v422 = vld [vmem:[%s6 + $0x1] sm:$0x1]
    %v423 = vld [vmem:[%s7] sm:$0x1]
    %v424 = vld [vmem:[%s7 + $0x1] sm:$0x1]
    %v425 = vlaneseq
    %v426 = vshrl.u32 %v425, 7
    %v427 = vsub.s32 0, %v426
    %v428 = vrot.slane %v422, %v427
    %v433 = vunpack.c.l.b16 %v414
    %v434 = vunpack.c.l.b16 %v415
    %v435 = vunpack.c.l.b16 %v416
    %v436 = vunpack.c.l.b16 %v417
    %v437 = vpack.c.b16 %v434, %v433
    %v438 = vpack.c.b16 %v436, %v435
    %441 = vmatprep.subr.bf16.mxu0 0
    %442 = vmatpush1.bf16.msra.mxu0 %v437
    %443 = vmatprep.subr.bf16.mxu0 0
    %444 = vmatpush1.bf16.msra.mxu0 %v438
    %445 = vmatprep.subr.bf16.mxu0 0
    %446 = vmatpush1.bf16.msra.mxu0 0
    %447 = vmatprep.subr.bf16.mxu0 0
    %448 = vmatpush1.bf16.msra.mxu0 0
    %449 = vmatprep.subr.bf16.mxu0 0
    %450 = vmatpush1.bf16.msra.mxu0 0
    %451 = vmatprep.subr.bf16.mxu0 0
    %452 = vmatpush1.bf16.msra.mxu0 0
    %453 = vmatprep.subr.bf16.mxu0 0
    %454 = vmatpush1.bf16.msra.mxu0 0
    %455 = vmatprep.subr.bf16.mxu0 0
    %456 = vmatpush1.bf16.msra.mxu0 0
    %457 = vmatprep.subr.bf16.mxu0 0
    %458 = vmatpush1.bf16.msra.mxu0 0
    %459 = vmatprep.subr.bf16.mxu0 0
    %460 = vmatpush1.bf16.msra.mxu0 0
    %461 = vmatprep.subr.bf16.mxu0 0
    %462 = vmatpush1.bf16.msra.mxu0 0
    %463 = vmatprep.subr.bf16.mxu0 0
    %464 = vmatpush1.bf16.msra.mxu0 0
    %465 = vmatprep.subr.bf16.mxu0 0
    %466 = vmatpush1.bf16.msra.mxu0 0
    %467 = vmatprep.subr.bf16.mxu0 0
    %468 = vmatpush1.bf16.msra.mxu0 0
    %469 = vmatprep.subr.bf16.mxu0 0
    %470 = vmatpush1.bf16.msra.mxu0 0
    %471 = vmatprep.subr.bf16.mxu0 0
    %472 = vmatpush1.bf16.msra.mxu0 0
    %473 = vmatprep.mubr.bf16.mxu0 0
    %474 = vmatmul.mubr.bf16.gmra.mrb[0].mxu0 %v180
    %v475 = vpop.f32.mrb[0].mxu0
    %v476 = vadd.f32 %v428, %v475
    %v477 = vpop.f32.mrb[0].mxu0
    %v478 = vpop.f32.mrb[0].mxu0
    %v479 = vadd.f32 %v428, %v478
    %v480 = vpop.f32.mrb[0].mxu0
    %481 = vdwg.mxu0
    %v482 = vmax.f32 %v476, 0.0
    %v483 = vmax.f32 %v479, 0.0
    %v484 = vand.u32 2147483647, %v476
    %v485 = vand.u32 2147483647, %v479
    %v486 = vsub.f32 0.0, %v484
    %v487 = vsub.f32 0.0, %v485
    %v488 = vmul.f32 %v486, 1.442695
    %v489 = vpow.pop %v488
    %v490 = vmul.f32 %v487, 1.442695
    %v491 = vpow.pop %v490
    %v492 = vadd.f32 %v489, 1.0
    %v493 = vadd.f32 %v491, 1.0
    %v494 = vlog2.pop %v492
    %v495 = vmul.f32 %v494, 0.6931472
    %v496 = vlog2.pop %v493
    %v497 = vmul.f32 %v496, 0.6931472
    %v498 = vadd.f32 %v482, %v495
    %v499 = vadd.f32 %v483, %v497
    %v500 = vlaneseq
    %v501 = vshrl.u32 %v500, 7
    %v502 = vsub.s32 0, %v501
    %v503 = vrot.slane %v421, %v502
    %v504 = vmul.f32 %v498, %v503
    %v505 = vmul.f32 %v499, %v503
    %v506 = vlaneseq
    %v507 = vshrl.u32 %v506, 7
    %v508 = vlaneseq
    %v509 = vand.u32 %v508, 127
    %vm510 = vcmp.ge.s32.totalorder %v507, %v509
    %v511 = vsel %vm510, 1, 0
    %v512 = vcvt.s32.f32 %v511
    %s513 = scalar_lea.vmem %s5, 4
    %v514 = vld [vmem:[%s513] ss:$8 sm:$0xf]
    %v515 = vld [vmem:[%s513] ss:$8 sm:$0x10]
    %v516 = vor.u32 %v514, %v515
    %s517 = scalar_lea.vmem %s5, 3
    %v518 = vld [vmem:[%s517] ss:$8 sm:$0xf]
    %v519 = vld [vmem:[%s517] ss:$8 sm:$0x10]
    %v520 = vor.u32 %v518, %v519
    %v522 = vlaneseq
    %v523 = vshrl.u32 %v522, 7
    %v524 = vsub.s32 0, %v523
    %v525 = vrot.slane %v520, %v524
    %v526 = vlaneseq
    %v527 = vshrl.u32 %v526, 7
    %v528 = vsub.s32 1, %v527
    %v529 = vrot.slane %v520, %v528
    %v530 = vlaneseq
    %v531 = vshrl.u32 %v530, 7
    %v532 = vsub.s32 2, %v531
    %v533 = vrot.slane %v520, %v532
    %v534 = vlaneseq
    %v535 = vshrl.u32 %v534, 7
    %v536 = vsub.s32 3, %v535
    %v537 = vrot.slane %v520, %v536
    %v538 = vlaneseq
    %v539 = vshrl.u32 %v538, 7
    %v540 = vsub.s32 4, %v539
    %v541 = vrot.slane %v520, %v540
    %v547 = vmul.f32 %v322, %v525
    %v548 = vmul.f32 %v324, %v529
    %v549 = vmul.f32 %v365, %v533
    %v550 = vmul.f32 %v367, %v537
    %v551 = vmul.f32 %v408, %v541
    %v552 = vrot.slane %v322, 7
    %v553 = vrot.slane %v324, 7
    %v554 = vrot.slane %v365, 7
    %v555 = vrot.slane %v367, 7
    %v556 = vrot.slane %v408, 7
    %vm557 = vcmp.ge.s32.totalorder %v507, 1
    %v558 = vsel %vm557, 1, 0
    %v559 = vcvt.s32.f32 %v558
    %v560 = vmul.f32 %v552, %v559
    %v561 = vmul.f32 %v553, %v559
    %v562 = vmul.f32 %v554, %v559
    %v563 = vmul.f32 %v555, %v559
    %v564 = vmul.f32 %v556, %v559
    %s565 = scalar_lea.vmem %s5, 2
    %v566 = vld [vmem:[%s565] ss:$8 sm:$0xf]
    %v567 = vld [vmem:[%s565] ss:$8 sm:$0x10]
    %v568 = vor.u32 %v566, %v567
    %v570 = vlaneseq
    %v571 = vshrl.u32 %v570, 7
    %v572 = vsub.s32 0, %v571
    %v573 = vrot.slane %v568, %v572
    %v574 = vlaneseq
    %v575 = vshrl.u32 %v574, 7
    %v576 = vsub.s32 1, %v575
    %v577 = vrot.slane %v568, %v576
    %v578 = vlaneseq
    %v579 = vshrl.u32 %v578, 7
    %v580 = vsub.s32 2, %v579
    %v581 = vrot.slane %v568, %v580
    %v582 = vlaneseq
    %v583 = vshrl.u32 %v582, 7
    %v584 = vsub.s32 3, %v583
    %v585 = vrot.slane %v568, %v584
    %v586 = vlaneseq
    %v587 = vshrl.u32 %v586, 7
    %v588 = vsub.s32 4, %v587
    %v589 = vrot.slane %v568, %v588
    %v595 = vmul.f32 %v560, %v573
    %v596 = vmul.f32 %v561, %v577
    %v597 = vmul.f32 %v562, %v581
    %v598 = vmul.f32 %v563, %v585
    %v599 = vmul.f32 %v564, %v589
    %v600 = vadd.f32 %v547, %v595
    %v601 = vadd.f32 %v548, %v596
    %v602 = vadd.f32 %v549, %v597
    %v603 = vadd.f32 %v550, %v598
    %v604 = vadd.f32 %v551, %v599
    %v605 = vrot.slane %v322, 6
    %v606 = vrot.slane %v324, 6
    %v607 = vrot.slane %v365, 6
    %v608 = vrot.slane %v367, 6
    %v609 = vrot.slane %v408, 6
    %vm610 = vcmp.ge.s32.totalorder %v507, 2
    %v611 = vsel %vm610, 1, 0
    %v612 = vcvt.s32.f32 %v611
    %v613 = vmul.f32 %v605, %v612
    %v614 = vmul.f32 %v606, %v612
    %v615 = vmul.f32 %v607, %v612
    %v616 = vmul.f32 %v608, %v612
    %v617 = vmul.f32 %v609, %v612
    %s618 = scalar_lea.vmem %s5, 1
    %v619 = vld [vmem:[%s618] ss:$8 sm:$0xf]
    %v620 = vld [vmem:[%s618] ss:$8 sm:$0x10]
    %v621 = vor.u32 %v619, %v620
    %v623 = vlaneseq
    %v624 = vshrl.u32 %v623, 7
    %v625 = vsub.s32 0, %v624
    %v626 = vrot.slane %v621, %v625
    %v627 = vlaneseq
    %v628 = vshrl.u32 %v627, 7
    %v629 = vsub.s32 1, %v628
    %v630 = vrot.slane %v621, %v629
    %v631 = vlaneseq
    %v632 = vshrl.u32 %v631, 7
    %v633 = vsub.s32 2, %v632
    %v634 = vrot.slane %v621, %v633
    %v635 = vlaneseq
    %v636 = vshrl.u32 %v635, 7
    %v637 = vsub.s32 3, %v636
    %v638 = vrot.slane %v621, %v637
    %v639 = vlaneseq
    %v640 = vshrl.u32 %v639, 7
    %v641 = vsub.s32 4, %v640
    %v642 = vrot.slane %v621, %v641
    %v648 = vmul.f32 %v613, %v626
    %v649 = vmul.f32 %v614, %v630
    %v650 = vmul.f32 %v615, %v634
    %v651 = vmul.f32 %v616, %v638
    %v652 = vmul.f32 %v617, %v642
    %v653 = vadd.f32 %v600, %v648
    %v654 = vadd.f32 %v601, %v649
    %v655 = vadd.f32 %v602, %v650
    %v656 = vadd.f32 %v603, %v651
    %v657 = vadd.f32 %v604, %v652
    %v658 = vrot.slane %v322, 5
    %v659 = vrot.slane %v324, 5
    %v660 = vrot.slane %v365, 5
    %v661 = vrot.slane %v367, 5
    %v662 = vrot.slane %v408, 5
    %vm663 = vcmp.ge.s32.totalorder %v507, 3
    %v664 = vsel %vm663, 1, 0
    %v665 = vcvt.s32.f32 %v664
    %v666 = vmul.f32 %v658, %v665
    %v667 = vmul.f32 %v659, %v665
    %v668 = vmul.f32 %v660, %v665
    %v669 = vmul.f32 %v661, %v665
    %v670 = vmul.f32 %v662, %v665
    %v671 = vld [vmem:[%s5] ss:$8 sm:$0xf]
    %v672 = vld [vmem:[%s5] ss:$8 sm:$0x10]
    %v673 = vor.u32 %v671, %v672
    %v675 = vlaneseq
    %v676 = vshrl.u32 %v675, 7
    %v677 = vsub.s32 0, %v676
    %v678 = vrot.slane %v673, %v677
    %v679 = vlaneseq
    %v680 = vshrl.u32 %v679, 7
    %v681 = vsub.s32 1, %v680
    %v682 = vrot.slane %v673, %v681
    %v683 = vlaneseq
    %v684 = vshrl.u32 %v683, 7
    %v685 = vsub.s32 2, %v684
    %v686 = vrot.slane %v673, %v685
    %v687 = vlaneseq
    %v688 = vshrl.u32 %v687, 7
    %v689 = vsub.s32 3, %v688
    %v690 = vrot.slane %v673, %v689
    %v691 = vlaneseq
    %v692 = vshrl.u32 %v691, 7
    %v693 = vsub.s32 4, %v692
    %v694 = vrot.slane %v673, %v693
    %v700 = vmul.f32 %v666, %v678
    %v701 = vmul.f32 %v667, %v682
    %v702 = vmul.f32 %v668, %v686
    %v703 = vmul.f32 %v669, %v690
    %v704 = vmul.f32 %v670, %v694
    %v705 = vadd.f32 %v653, %v700
    %v706 = vadd.f32 %v654, %v701
    %v707 = vadd.f32 %v655, %v702
    %v708 = vadd.f32 %v656, %v703
    %v709 = vadd.f32 %v657, %v704
    %v711 = vlaneseq
    %v712 = vshrl.u32 %v711, 7
    %v713 = vsub.s32 0, %v712
    %v714 = vrot.slane %v516, %v713
    %v715 = vlaneseq
    %v716 = vshrl.u32 %v715, 7
    %v717 = vsub.s32 1, %v716
    %v718 = vrot.slane %v516, %v717
    %v719 = vlaneseq
    %v720 = vshrl.u32 %v719, 7
    %v721 = vsub.s32 2, %v720
    %v722 = vrot.slane %v516, %v721
    %v723 = vlaneseq
    %v724 = vshrl.u32 %v723, 7
    %v725 = vsub.s32 3, %v724
    %v726 = vrot.slane %v516, %v725
    %v727 = vlaneseq
    %v728 = vshrl.u32 %v727, 7
    %v729 = vsub.s32 4, %v728
    %v730 = vrot.slane %v516, %v729
    %v736 = vadd.f32 %v705, %v714
    %v737 = vadd.f32 %v706, %v718
    %v738 = vadd.f32 %v707, %v722
    %v739 = vadd.f32 %v708, %v726
    %v740 = vadd.f32 %v709, %v730
    %v741 = vsub.f32 0.0, %v736
    %v742 = vsub.f32 0.0, %v737
    %v743 = vsub.f32 0.0, %v738
    %v744 = vsub.f32 0.0, %v739
    %v745 = vsub.f32 0.0, %v740
    %v746 = vmul.f32 %v741, 1.442695
    %v747 = vpow.pop %v746
    %v748 = vmul.f32 %v742, 1.442695
    %v749 = vpow.pop %v748
    %v750 = vmul.f32 %v743, 1.442695
    %v751 = vpow.pop %v750
    %v752 = vmul.f32 %v744, 1.442695
    %v753 = vpow.pop %v752
    %v754 = vmul.f32 %v745, 1.442695
    %v755 = vpow.pop %v754
    %v756 = vadd.f32 %v747, 1.0
    %v757 = vadd.f32 %v749, 1.0
    %v758 = vadd.f32 %v751, 1.0
    %v759 = vadd.f32 %v753, 1.0
    %v760 = vadd.f32 %v755, 1.0
    %v761 = vrcp.pop %v756
    %v762 = vmul.f32 1.0, %v761
    %v763 = vrcp.pop %v757
    %v764 = vmul.f32 1.0, %v763
    %v765 = vrcp.pop %v758
    %v766 = vmul.f32 1.0, %v765
    %v767 = vrcp.pop %v759
    %v768 = vmul.f32 1.0, %v767
    %v769 = vrcp.pop %v760
    %v770 = vmul.f32 1.0, %v769
    %v771 = vmul.f32 %v736, %v762
    %v772 = vmul.f32 %v737, %v764
    %v773 = vmul.f32 %v738, %v766
    %v774 = vmul.f32 %v739, %v768
    %v775 = vmul.f32 %v740, %v770
    %vm776 = vcmask 64512
    %v778 = vsel %vm776, %v512, 0
    %780 = vmatprep.subr.mxu0 0.0
    %781 = vmatpush1.msra.mxu0 %v504
    %782 = vmatprep.subr.mxu0 0.0
    %783 = vmatpush1.msra.mxu0 0.0
    %784 = vmatprep.subr.mxu0 0.0
    %785 = vmatpush1.msra.mxu0 0.0
    %786 = vmatprep.subr.mxu0 0.0
    %787 = vmatpush1.msra.mxu0 0.0
    %788 = vmatprep.subr.mxu0 0.0
    %789 = vmatpush1.msra.mxu0 0.0
    %790 = vmatprep.subr.mxu0 0.0
    %791 = vmatpush1.msra.mxu0 0.0
    %792 = vmatprep.subr.mxu0 0.0
    %793 = vmatpush1.msra.mxu0 0.0
    %794 = vmatprep.subr.mxu0 0.0
    %795 = vmatpush1.msra.mxu0 0.0
    %796 = vmatprep.subr.mxu0 0.0
    %797 = vmatpush1.msra.mxu0 0.0
    %798 = vmatprep.subr.mxu0 0.0
    %799 = vmatpush1.msra.mxu0 0.0
    %800 = vmatprep.subr.mxu0 0.0
    %801 = vmatpush1.msra.mxu0 0.0
    %802 = vmatprep.subr.mxu0 0.0
    %803 = vmatpush1.msra.mxu0 0.0
    %804 = vmatprep.subr.mxu0 0.0
    %805 = vmatpush1.msra.mxu0 0.0
    %806 = vmatprep.subr.mxu0 0.0
    %807 = vmatpush1.msra.mxu0 0.0
    %808 = vmatprep.subr.mxu0 0.0
    %809 = vmatpush1.msra.mxu0 0.0
    %810 = vmatprep.subr.mxu0 0.0
    %811 = vmatpush1.msra.mxu0 0.0
    %812 = vmatprep.subr.mxu0 0.0
    %813 = vmatpush1.msra.mxu0 0.0
    %814 = vmatprep.subr.mxu0 0.0
    %815 = vmatpush1.msra.mxu0 0.0
    %816 = vmatprep.subr.mxu0 0.0
    %817 = vmatpush1.msra.mxu0 0.0
    %818 = vmatprep.subr.mxu0 0.0
    %819 = vmatpush1.msra.mxu0 0.0
    %820 = vmatprep.subr.mxu0 0.0
    %821 = vmatpush1.msra.mxu0 0.0
    %822 = vmatprep.subr.mxu0 0.0
    %823 = vmatpush1.msra.mxu0 0.0
    %824 = vmatprep.subr.mxu0 0.0
    %825 = vmatpush1.msra.mxu0 0.0
    %826 = vmatprep.subr.mxu0 0.0
    %827 = vmatpush1.msra.mxu0 0.0
    %828 = vmatprep.subr.mxu0 0.0
    %829 = vmatpush1.msra.mxu0 0.0
    %830 = vmatprep.subr.mxu0 0.0
    %831 = vmatpush1.msra.mxu0 0.0
    %832 = vmatprep.subr.mxu0 0.0
    %833 = vmatpush1.msra.mxu0 0.0
    %834 = vmatprep.subr.mxu0 0.0
    %835 = vmatpush1.msra.mxu0 0.0
    %836 = vmatprep.subr.mxu0 0.0
    %837 = vmatpush1.msra.mxu0 0.0
    %838 = vmatprep.subr.mxu0 0.0
    %839 = vmatpush1.msra.mxu0 0.0
    %840 = vmatprep.subr.mxu0 0.0
    %841 = vmatpush1.msra.mxu0 0.0
    %842 = vmatprep.subr.mxu0 0.0
    %843 = vmatpush1.msra.mxu0 0.0
    %844 = vmatprep.mubr.f32.mxu0 0.0
    %845 = vmatmul.mubr.f32.gmra.mrb[0].mxu0 %v778
    %v846 = vpop.f32.mrb[0].mxu0
    %v847 = vadd.f32 0.0, %v846
    %v848 = vpop.f32.mrb[0].mxu0
    %849 = vdwg.mxu0
    %850 = vxpose.xlu0.b32.start [1/16] %v847, 128
    %851 = vxpose.xlu0.b32.cont [2/16] 0.0, 128
    %852 = vxpose.xlu0.b32.cont [3/16] 0.0, 128
    %853 = vxpose.xlu0.b32.cont [4/16] 0.0, 128
    %854 = vxpose.xlu0.b32.cont [5/16] 0.0, 128
    %855 = vxpose.xlu0.b32.cont [6/16] 0.0, 128
    %856 = vxpose.xlu0.b32.cont [7/16] 0.0, 128
    %857 = vxpose.xlu0.b32.cont [8/16] 0.0, 128
    %858 = vxpose.xlu0.b32.cont [9/16] 0.0, 128
    %859 = vxpose.xlu0.b32.cont [10/16] 0.0, 128
    %860 = vxpose.xlu0.b32.cont [11/16] 0.0, 128
    %861 = vxpose.xlu0.b32.cont [12/16] 0.0, 128
    %862 = vxpose.xlu0.b32.cont [13/16] 0.0, 128
    %863 = vxpose.xlu0.b32.cont [14/16] 0.0, 128
    %864 = vxpose.xlu0.b32.cont [15/16] 0.0, 128
    %865 = vxpose.xlu0.b32.end [16/16] 0.0, 128
    %v866 = vpop.trf.xlu0
    %v867 = vpop.trf.xlu0
    %v868 = vpop.trf.xlu0
    %v869 = vpop.trf.xlu0
    %v870 = vpop.trf.xlu0
    %v871 = vpop.trf.xlu0
    %v872 = vpop.trf.xlu0
    %v873 = vpop.trf.xlu0
    %v874 = vpop.trf.xlu0
    %v875 = vpop.trf.xlu0
    %v876 = vpop.trf.xlu0
    %v877 = vpop.trf.xlu0
    %v878 = vpop.trf.xlu0
    %v879 = vpop.trf.xlu0
    %v880 = vpop.trf.xlu0
    %v881 = vpop.trf.xlu0
    %882 = vmatprep.subr.mxu0 %v772
    %883 = vmatpush1.xpose.msra.mxu0 %v771
    %884 = vmatprep.subr.mxu0 0.0
    %885 = vmatpush1.xpose.msra.mxu0 0.0
    %886 = vmatprep.subr.mxu0 0.0
    %887 = vmatpush1.xpose.msra.mxu0 0.0
    %888 = vmatprep.subr.mxu0 0.0
    %889 = vmatpush1.xpose.msra.mxu0 0.0
    %890 = vmatprep.subr.mxu0 0.0
    %891 = vmatpush1.xpose.msra.mxu0 0.0
    %892 = vmatprep.subr.mxu0 0.0
    %893 = vmatpush1.xpose.msra.mxu0 0.0
    %894 = vmatprep.subr.mxu0 0.0
    %895 = vmatpush1.xpose.msra.mxu0 0.0
    %896 = vmatprep.subr.mxu0 0.0
    %897 = vmatpush1.xpose.msra.mxu0 0.0
    %898 = vmatprep.subr.mxu0 0.0
    %899 = vmatpush1.xpose.msra.mxu0 0.0
    %900 = vmatprep.subr.mxu0 0.0
    %901 = vmatpush1.xpose.msra.mxu0 0.0
    %902 = vmatprep.subr.mxu0 0.0
    %903 = vmatpush1.xpose.msra.mxu0 0.0
    %904 = vmatprep.subr.mxu0 0.0
    %905 = vmatpush1.xpose.msra.mxu0 0.0
    %906 = vmatprep.subr.mxu0 0.0
    %907 = vmatpush1.xpose.msra.mxu0 0.0
    %908 = vmatprep.subr.mxu0 0.0
    %909 = vmatpush1.xpose.msra.mxu0 0.0
    %910 = vmatprep.subr.mxu0 0.0
    %911 = vmatpush1.xpose.msra.mxu0 0.0
    %912 = vmatprep.subr.mxu0 0.0
    %913 = vmatpush1.xpose.msra.mxu0 0.0
    %914 = vmatprep.subr.mxu0 0.0
    %915 = vmatpush1.xpose.msra.mxu0 0.0
    %916 = vmatprep.subr.mxu0 0.0
    %917 = vmatpush1.xpose.msra.mxu0 0.0
    %918 = vmatprep.subr.mxu0 0.0
    %919 = vmatpush1.xpose.msra.mxu0 0.0
    %920 = vmatprep.subr.mxu0 0.0
    %921 = vmatpush1.xpose.msra.mxu0 0.0
    %922 = vmatprep.subr.mxu0 0.0
    %923 = vmatpush1.xpose.msra.mxu0 0.0
    %924 = vmatprep.subr.mxu0 0.0
    %925 = vmatpush1.xpose.msra.mxu0 0.0
    %926 = vmatprep.subr.mxu0 0.0
    %927 = vmatpush1.xpose.msra.mxu0 0.0
    %928 = vmatprep.subr.mxu0 0.0
    %929 = vmatpush1.xpose.msra.mxu0 0.0
    %930 = vmatprep.subr.mxu0 0.0
    %931 = vmatpush1.xpose.msra.mxu0 0.0
    %932 = vmatprep.subr.mxu0 0.0
    %933 = vmatpush1.xpose.msra.mxu0 0.0
    %934 = vmatprep.subr.mxu0 0.0
    %935 = vmatpush1.xpose.msra.mxu0 0.0
    %936 = vmatprep.subr.mxu0 0.0
    %937 = vmatpush1.xpose.msra.mxu0 0.0
    %938 = vmatprep.subr.mxu0 0.0
    %939 = vmatpush1.xpose.msra.mxu0 0.0
    %940 = vmatprep.subr.mxu0 0.0
    %941 = vmatpush1.xpose.msra.mxu0 0.0
    %942 = vmatprep.subr.mxu0 0.0
    %943 = vmatpush1.xpose.msra.mxu0 0.0
    %944 = vmatprep.subr.mxu0 0.0
    %945 = vmatpush1.xpose.msra.mxu0 0.0
    %946 = vmatprep.mubr.f32.mxu0 %v774
    %947 = vmatmul.mubr.f32.gmra.mrb[0].mxu0 %v773
    %v948 = vpop.f32.mrb[0].mxu0
    %v949 = vadd.f32 0.0, %v948
    %v950 = vpop.f32.mrb[0].mxu0
    %951 = vdwg.mxu0
    %953 = vset.pattern.permute.xlu0 0
    %954 = vperm.xlu0 %953, %v847
    %v955 = vpop.permute.xlu0 %954
    %v957 = vlaneseq
    %v958 = vshrl.u32 %v957, 7
    %v959 = vsub.s32 0, %v958
    %v960 = vrot.slane %v866, %v959
    %v961 = vsub.f32 %v955, %v960
    %v962 = vmin.f32 %v961, 0.0
    %v963 = vmul.f32 %v962, 1.442695
    %v964 = vpow.pop %v963
    %v965 = vmul.f32 %v964, %v512
    %967 = vset.pattern.permute.xlu0 0
    %968 = vperm.xlu0 %967, %v498
    %v969 = vpop.permute.xlu0 %968
    %v971 = vmul.f32 %v969, %v775
    %v972 = vmul.f32 %v949, %v965
    %v974 = vsel %vm776, %v972, 0
    %976 = vmatprep.subr.mxu0 0.0
    %977 = vmatpush1.msra.mxu0 %v971
    %978 = vmatprep.subr.mxu0 0.0
    %979 = vmatpush1.msra.mxu0 0.0
    %980 = vmatprep.subr.mxu0 0.0
    %981 = vmatpush1.msra.mxu0 0.0
    %982 = vmatprep.subr.mxu0 0.0
    %983 = vmatpush1.msra.mxu0 0.0
    %984 = vmatprep.subr.mxu0 0.0
    %985 = vmatpush1.msra.mxu0 0.0
    %986 = vmatprep.subr.mxu0 0.0
    %987 = vmatpush1.msra.mxu0 0.0
    %988 = vmatprep.subr.mxu0 0.0
    %989 = vmatpush1.msra.mxu0 0.0
    %990 = vmatprep.subr.mxu0 0.0
    %991 = vmatpush1.msra.mxu0 0.0
    %992 = vmatprep.subr.mxu0 0.0
    %993 = vmatpush1.msra.mxu0 0.0
    %994 = vmatprep.subr.mxu0 0.0
    %995 = vmatpush1.msra.mxu0 0.0
    %996 = vmatprep.subr.mxu0 0.0
    %997 = vmatpush1.msra.mxu0 0.0
    %998 = vmatprep.subr.mxu0 0.0
    %999 = vmatpush1.msra.mxu0 0.0
    %1000 = vmatprep.subr.mxu0 0.0
    %1001 = vmatpush1.msra.mxu0 0.0
    %1002 = vmatprep.subr.mxu0 0.0
    %1003 = vmatpush1.msra.mxu0 0.0
    %1004 = vmatprep.subr.mxu0 0.0
    %1005 = vmatpush1.msra.mxu0 0.0
    %1006 = vmatprep.subr.mxu0 0.0
    %1007 = vmatpush1.msra.mxu0 0.0
    %1008 = vmatprep.subr.mxu0 0.0
    %1009 = vmatpush1.msra.mxu0 0.0
    %1010 = vmatprep.subr.mxu0 0.0
    %1011 = vmatpush1.msra.mxu0 0.0
    %1012 = vmatprep.subr.mxu0 0.0
    %1013 = vmatpush1.msra.mxu0 0.0
    %1014 = vmatprep.subr.mxu0 0.0
    %1015 = vmatpush1.msra.mxu0 0.0
    %1016 = vmatprep.subr.mxu0 0.0
    %1017 = vmatpush1.msra.mxu0 0.0
    %1018 = vmatprep.subr.mxu0 0.0
    %1019 = vmatpush1.msra.mxu0 0.0
    %1020 = vmatprep.subr.mxu0 0.0
    %1021 = vmatpush1.msra.mxu0 0.0
    %1022 = vmatprep.subr.mxu0 0.0
    %1023 = vmatpush1.msra.mxu0 0.0
    %1024 = vmatprep.subr.mxu0 0.0
    %1025 = vmatpush1.msra.mxu0 0.0
    %1026 = vmatprep.subr.mxu0 0.0
    %1027 = vmatpush1.msra.mxu0 0.0
    %1028 = vmatprep.subr.mxu0 0.0
    %1029 = vmatpush1.msra.mxu0 0.0
    %1030 = vmatprep.subr.mxu0 0.0
    %1031 = vmatpush1.msra.mxu0 0.0
    %1032 = vmatprep.subr.mxu0 0.0
    %1033 = vmatpush1.msra.mxu0 0.0
    %1034 = vmatprep.subr.mxu0 0.0
    %1035 = vmatpush1.msra.mxu0 0.0
    %1036 = vmatprep.subr.mxu0 0.0
    %1037 = vmatpush1.msra.mxu0 0.0
    %1038 = vmatprep.subr.mxu0 0.0
    %1039 = vmatpush1.msra.mxu0 0.0
    %1040 = vmatprep.mubr.f32.mxu0 0.0
    %1041 = vmatmul.mubr.f32.gmra.mrb[0].mxu0 %v974
    %v1042 = vpop.f32.mrb[0].mxu0
    %v1043 = vadd.f32 0.0, %v1042
    %v1044 = vpop.f32.mrb[0].mxu0
    %1045 = vdwg.mxu0
    %1046 = vset.pattern.permute.xlu0 1
    %1047 = vperm.xlu0 %1046, %v847
    %v1048 = vpop.permute.xlu0 %1047
    %v1050 = vlaneseq
    %v1051 = vshrl.u32 %v1050, 7
    %v1052 = vsub.s32 1, %v1051
    %v1053 = vrot.slane %v866, %v1052
    %v1054 = vsub.f32 %v1048, %v1053
    %v1055 = vmin.f32 %v1054, 0.0
    %v1056 = vmul.f32 %v1055, 1.442695
    %v1057 = vpow.pop %v1056
    %v1058 = vmul.f32 %v1057, %v512
    %1059 = vset.pattern.permute.xlu0 1
    %1060 = vperm.xlu0 %1059, %v498
    %v1061 = vpop.permute.xlu0 %1060
    %v1063 = vmul.f32 %v1061, %v775
    %v1064 = vmul.f32 %v949, %v1058
    %1066 = vrot.lane.b32.xlu0 %v1063, 120
    %v1067 = vpop.permute.xlu0 %1066
    %v1070 = vsel %vm776, %v1064, 0
    %1072 = vmatprep.subr.mxu0 0.0
    %1073 = vmatpush1.msra.mxu0 %v1067
    %1074 = vmatprep.subr.mxu0 0.0
    %1075 = vmatpush1.msra.mxu0 0.0
    %1076 = vmatprep.subr.mxu0 0.0
    %1077 = vmatpush1.msra.mxu0 0.0
    %1078 = vmatprep.subr.mxu0 0.0
    %1079 = vmatpush1.msra.mxu0 0.0
    %1080 = vmatprep.subr.mxu0 0.0
    %1081 = vmatpush1.msra.mxu0 0.0
    %1082 = vmatprep.subr.mxu0 0.0
    %1083 = vmatpush1.msra.mxu0 0.0
    %1084 = vmatprep.subr.mxu0 0.0
    %1085 = vmatpush1.msra.mxu0 0.0
    %1086 = vmatprep.subr.mxu0 0.0
    %1087 = vmatpush1.msra.mxu0 0.0
    %1088 = vmatprep.subr.mxu0 0.0
    %1089 = vmatpush1.msra.mxu0 0.0
    %1090 = vmatprep.subr.mxu0 0.0
    %1091 = vmatpush1.msra.mxu0 0.0
    %1092 = vmatprep.subr.mxu0 0.0
    %1093 = vmatpush1.msra.mxu0 0.0
    %1094 = vmatprep.subr.mxu0 0.0
    %1095 = vmatpush1.msra.mxu0 0.0
    %1096 = vmatprep.subr.mxu0 0.0
    %1097 = vmatpush1.msra.mxu0 0.0
    %1098 = vmatprep.subr.mxu0 0.0
    %1099 = vmatpush1.msra.mxu0 0.0
    %1100 = vmatprep.subr.mxu0 0.0
    %1101 = vmatpush1.msra.mxu0 0.0
    %1102 = vmatprep.subr.mxu0 0.0
    %1103 = vmatpush1.msra.mxu0 0.0
    %1104 = vmatprep.subr.mxu0 0.0
    %1105 = vmatpush1.msra.mxu0 0.0
    %1106 = vmatprep.subr.mxu0 0.0
    %1107 = vmatpush1.msra.mxu0 0.0
    %1108 = vmatprep.subr.mxu0 0.0
    %1109 = vmatpush1.msra.mxu0 0.0
    %1110 = vmatprep.subr.mxu0 0.0
    %1111 = vmatpush1.msra.mxu0 0.0
    %1112 = vmatprep.subr.mxu0 0.0
    %1113 = vmatpush1.msra.mxu0 0.0
    %1114 = vmatprep.subr.mxu0 0.0
    %1115 = vmatpush1.msra.mxu0 0.0
    %1116 = vmatprep.subr.mxu0 0.0
    %1117 = vmatpush1.msra.mxu0 0.0
    %1118 = vmatprep.subr.mxu0 0.0
    %1119 = vmatpush1.msra.mxu0 0.0
    %1120 = vmatprep.subr.mxu0 0.0
    %1121 = vmatpush1.msra.mxu0 0.0
    %1122 = vmatprep.subr.mxu0 0.0
    %1123 = vmatpush1.msra.mxu0 0.0
    %1124 = vmatprep.subr.mxu0 0.0
    %1125 = vmatpush1.msra.mxu0 0.0
    %1126 = vmatprep.subr.mxu0 0.0
    %1127 = vmatpush1.msra.mxu0 0.0
    %1128 = vmatprep.subr.mxu0 0.0
    %1129 = vmatpush1.msra.mxu0 0.0
    %1130 = vmatprep.subr.mxu0 0.0
    %1131 = vmatpush1.msra.mxu0 0.0
    %1132 = vmatprep.subr.mxu0 0.0
    %1133 = vmatpush1.msra.mxu0 0.0
    %1134 = vmatprep.subr.mxu0 0.0
    %1135 = vmatpush1.msra.mxu0 0.0
    %1136 = vmatprep.mubr.f32.mxu0 0.0
    %1137 = vmatmul.mubr.f32.gmra.mrb[0].mxu0 %v1070
    %v1138 = vpop.f32.mrb[0].mxu0
    %v1139 = vadd.f32 0.0, %v1138
    %v1140 = vpop.f32.mrb[0].mxu0
    %1141 = vdwg.mxu0
    %1142 = vset.pattern.permute.xlu0 2
    %1143 = vperm.xlu0 %1142, %v847
    %v1144 = vpop.permute.xlu0 %1143
    %v1146 = vlaneseq
    %v1147 = vshrl.u32 %v1146, 7
    %v1148 = vsub.s32 2, %v1147
    %v1149 = vrot.slane %v866, %v1148
    %v1150 = vsub.f32 %v1144, %v1149
    %v1151 = vmin.f32 %v1150, 0.0
    %v1152 = vmul.f32 %v1151, 1.442695
    %v1153 = vpow.pop %v1152
    %v1154 = vmul.f32 %v1153, %v512
    %1155 = vset.pattern.permute.xlu0 2
    %1156 = vperm.xlu0 %1155, %v498
    %v1157 = vpop.permute.xlu0 %1156
    %v1159 = vmul.f32 %v1157, %v775
    %v1160 = vmul.f32 %v949, %v1154
    %1162 = vrot.lane.b32.xlu0 %v1159, 112
    %v1163 = vpop.permute.xlu0 %1162
    %v1166 = vsel %vm776, %v1160, 0
    %1168 = vmatprep.subr.mxu0 0.0
    %1169 = vmatpush1.msra.mxu0 %v1163
    %1170 = vmatprep.subr.mxu0 0.0
    %1171 = vmatpush1.msra.mxu0 0.0
    %1172 = vmatprep.subr.mxu0 0.0
    %1173 = vmatpush1.msra.mxu0 0.0
    %1174 = vmatprep.subr.mxu0 0.0
    %1175 = vmatpush1.msra.mxu0 0.0
    %1176 = vmatprep.subr.mxu0 0.0
    %1177 = vmatpush1.msra.mxu0 0.0
    %1178 = vmatprep.subr.mxu0 0.0
    %1179 = vmatpush1.msra.mxu0 0.0
    %1180 = vmatprep.subr.mxu0 0.0
    %1181 = vmatpush1.msra.mxu0 0.0
    %1182 = vmatprep.subr.mxu0 0.0
    %1183 = vmatpush1.msra.mxu0 0.0
    %1184 = vmatprep.subr.mxu0 0.0
    %1185 = vmatpush1.msra.mxu0 0.0
    %1186 = vmatprep.subr.mxu0 0.0
    %1187 = vmatpush1.msra.mxu0 0.0
    %1188 = vmatprep.subr.mxu0 0.0
    %1189 = vmatpush1.msra.mxu0 0.0
    %1190 = vmatprep.subr.mxu0 0.0
    %1191 = vmatpush1.msra.mxu0 0.0
    %1192 = vmatprep.subr.mxu0 0.0
    %1193 = vmatpush1.msra.mxu0 0.0
    %1194 = vmatprep.subr.mxu0 0.0
    %1195 = vmatpush1.msra.mxu0 0.0
    %1196 = vmatprep.subr.mxu0 0.0
    %1197 = vmatpush1.msra.mxu0 0.0
    %1198 = vmatprep.subr.mxu0 0.0
    %1199 = vmatpush1.msra.mxu0 0.0
    %1200 = vmatprep.subr.mxu0 0.0
    %1201 = vmatpush1.msra.mxu0 0.0
    %1202 = vmatprep.subr.mxu0 0.0
    %1203 = vmatpush1.msra.mxu0 0.0
    %1204 = vmatprep.subr.mxu0 0.0
    %1205 = vmatpush1.msra.mxu0 0.0
    %1206 = vmatprep.subr.mxu0 0.0
    %1207 = vmatpush1.msra.mxu0 0.0
    %1208 = vmatprep.subr.mxu0 0.0
    %1209 = vmatpush1.msra.mxu0 0.0
    %1210 = vmatprep.subr.mxu0 0.0
    %1211 = vmatpush1.msra.mxu0 0.0
    %1212 = vmatprep.subr.mxu0 0.0
    %1213 = vmatpush1.msra.mxu0 0.0
    %1214 = vmatprep.subr.mxu0 0.0
    %1215 = vmatpush1.msra.mxu0 0.0
    %1216 = vmatprep.subr.mxu0 0.0
    %1217 = vmatpush1.msra.mxu0 0.0
    %1218 = vmatprep.subr.mxu0 0.0
    %1219 = vmatpush1.msra.mxu0 0.0
    %1220 = vmatprep.subr.mxu0 0.0
    %1221 = vmatpush1.msra.mxu0 0.0
    %1222 = vmatprep.subr.mxu0 0.0
    %1223 = vmatpush1.msra.mxu0 0.0
    %1224 = vmatprep.subr.mxu0 0.0
    %1225 = vmatpush1.msra.mxu0 0.0
    %1226 = vmatprep.subr.mxu0 0.0
    %1227 = vmatpush1.msra.mxu0 0.0
    %1228 = vmatprep.subr.mxu0 0.0
    %1229 = vmatpush1.msra.mxu0 0.0
    %1230 = vmatprep.subr.mxu0 0.0
    %1231 = vmatpush1.msra.mxu0 0.0
    %1232 = vmatprep.mubr.f32.mxu0 0.0
    %1233 = vmatmul.mubr.f32.gmra.mrb[0].mxu0 %v1166
    %v1234 = vpop.f32.mrb[0].mxu0
    %v1235 = vadd.f32 0.0, %v1234
    %v1236 = vpop.f32.mrb[0].mxu0
    %1237 = vdwg.mxu0
    %1238 = vset.pattern.permute.xlu0 3
    %1239 = vperm.xlu0 %1238, %v847
    %v1240 = vpop.permute.xlu0 %1239
    %v1242 = vlaneseq
    %v1243 = vshrl.u32 %v1242, 7
    %v1244 = vsub.s32 3, %v1243
    %v1245 = vrot.slane %v866, %v1244
    %v1246 = vsub.f32 %v1240, %v1245
    %v1247 = vmin.f32 %v1246, 0.0
    %v1248 = vmul.f32 %v1247, 1.442695
    %v1249 = vpow.pop %v1248
    %v1250 = vmul.f32 %v1249, %v512
    %1251 = vset.pattern.permute.xlu0 3
    %1252 = vperm.xlu0 %1251, %v498
    %v1253 = vpop.permute.xlu0 %1252
    %v1255 = vmul.f32 %v1253, %v775
    %v1256 = vmul.f32 %v949, %v1250
    %1258 = vrot.lane.b32.xlu0 %v1255, 104
    %v1259 = vpop.permute.xlu0 %1258
    %v1262 = vsel %vm776, %v1256, 0
    %1264 = vmatprep.subr.mxu0 0.0
    %1265 = vmatpush1.msra.mxu0 %v1259
    %1266 = vmatprep.subr.mxu0 0.0
    %1267 = vmatpush1.msra.mxu0 0.0
    %1268 = vmatprep.subr.mxu0 0.0
    %1269 = vmatpush1.msra.mxu0 0.0
    %1270 = vmatprep.subr.mxu0 0.0
    %1271 = vmatpush1.msra.mxu0 0.0
    %1272 = vmatprep.subr.mxu0 0.0
    %1273 = vmatpush1.msra.mxu0 0.0
    %1274 = vmatprep.subr.mxu0 0.0
    %1275 = vmatpush1.msra.mxu0 0.0
    %1276 = vmatprep.subr.mxu0 0.0
    %1277 = vmatpush1.msra.mxu0 0.0
    %1278 = vmatprep.subr.mxu0 0.0
    %1279 = vmatpush1.msra.mxu0 0.0
    %1280 = vmatprep.subr.mxu0 0.0
    %1281 = vmatpush1.msra.mxu0 0.0
    %1282 = vmatprep.subr.mxu0 0.0
    %1283 = vmatpush1.msra.mxu0 0.0
    %1284 = vmatprep.subr.mxu0 0.0
    %1285 = vmatpush1.msra.mxu0 0.0
    %1286 = vmatprep.subr.mxu0 0.0
    %1287 = vmatpush1.msra.mxu0 0.0
    %1288 = vmatprep.subr.mxu0 0.0
    %1289 = vmatpush1.msra.mxu0 0.0
    %1290 = vmatprep.subr.mxu0 0.0
    %1291 = vmatpush1.msra.mxu0 0.0
    %1292 = vmatprep.subr.mxu0 0.0
    %1293 = vmatpush1.msra.mxu0 0.0
    %1294 = vmatprep.subr.mxu0 0.0
    %1295 = vmatpush1.msra.mxu0 0.0
    %1296 = vmatprep.subr.mxu0 0.0
    %1297 = vmatpush1.msra.mxu0 0.0
    %1298 = vmatprep.subr.mxu0 0.0
    %1299 = vmatpush1.msra.mxu0 0.0
    %1300 = vmatprep.subr.mxu0 0.0
    %1301 = vmatpush1.msra.mxu0 0.0
    %1302 = vmatprep.subr.mxu0 0.0
    %1303 = vmatpush1.msra.mxu0 0.0
    %1304 = vmatprep.subr.mxu0 0.0
    %1305 = vmatpush1.msra.mxu0 0.0
    %1306 = vmatprep.subr.mxu0 0.0
    %1307 = vmatpush1.msra.mxu0 0.0
    %1308 = vmatprep.subr.mxu0 0.0
    %1309 = vmatpush1.msra.mxu0 0.0
    %1310 = vmatprep.subr.mxu0 0.0
    %1311 = vmatpush1.msra.mxu0 0.0
    %1312 = vmatprep.subr.mxu0 0.0
    %1313 = vmatpush1.msra.mxu0 0.0
    %1314 = vmatprep.subr.mxu0 0.0
    %1315 = vmatpush1.msra.mxu0 0.0
    %1316 = vmatprep.subr.mxu0 0.0
    %1317 = vmatpush1.msra.mxu0 0.0
    %1318 = vmatprep.subr.mxu0 0.0
    %1319 = vmatpush1.msra.mxu0 0.0
    %1320 = vmatprep.subr.mxu0 0.0
    %1321 = vmatpush1.msra.mxu0 0.0
    %1322 = vmatprep.subr.mxu0 0.0
    %1323 = vmatpush1.msra.mxu0 0.0
    %1324 = vmatprep.subr.mxu0 0.0
    %1325 = vmatpush1.msra.mxu0 0.0
    %1326 = vmatprep.subr.mxu0 0.0
    %1327 = vmatpush1.msra.mxu0 0.0
    %1328 = vmatprep.mubr.f32.mxu0 0.0
    %1329 = vmatmul.mubr.f32.gmra.mrb[0].mxu0 %v1262
    %v1330 = vpop.f32.mrb[0].mxu0
    %v1331 = vadd.f32 0.0, %v1330
    %v1332 = vpop.f32.mrb[0].mxu0
    %1333 = vdwg.mxu0
    %1335 = vrot.lane.b32.xlu0 %v1139, 8
    %v1336 = vpop.permute.xlu0 %1335
    %1339 = vrot.lane.b32.xlu0 %v1235, 16
    %v1340 = vpop.permute.xlu0 %1339
    %1343 = vrot.lane.b32.xlu0 %v1331, 24
    %v1344 = vpop.permute.xlu0 %1343
    %v1346 = vsel %vm776, %v1043, %v1336
    %vm1347 = vcmask 130048
    %v1348 = vsel %vm1347, %v1346, %v1340
    %vm1349 = vcmask 195584
    %v1350 = vsel %vm1349, %v1348, %v1344
    %v1351 = vlaneseq
    %v1352 = vshrl.u32 %v1351, 7
    %v1353 = vsub.s32 0, %v1352
    %v1354 = vrot.slane %v423, %v1353
    %v1355 = vmul.f32 %v1354, %v775
    %v1356 = vadd.f32 %v1350, %v1355
    %v1357 = vsub.f32 0.0, %v217
    %v1358 = vmul.f32 %v1357, 1.442695
    %v1359 = vpow.pop %v1358
    %v1360 = vadd.f32 %v1359, 1.0
    %v1361 = vrcp.pop %v1360
    %v1362 = vmul.f32 1.0, %v1361
    %v1363 = vmul.f32 %v217, %v1362
    %v1364 = vmul.f32 %v1356, %v1363
    %v1365 = vmul.f32 %v1364, %v1364
    %v1366 = vsel %vm117, %v1365, 0.0
    %1367 = vadd.xlane.f32.xlu0 %v1366
    %v1368 = vpop.xlane.xlu0 %1367
    %v1369 = vmul.f32 %v1368, %v124
    %v1370 = vadd.f32 %v1369, 1e-05
    %v1371 = vrsqrt.pop %v1370
    %v1372 = vmul.f32 %v1364, %v1371
    %v1373 = vlaneseq
    %v1374 = vshrl.u32 %v1373, 7
    %v1375 = vsub.s32 0, %v1374
    %v1376 = vrot.slane %v424, %v1375
    %v1377 = vmul.f32 %v1372, %v1376
    %v1378 = vmul.f32 %v326, %v525
    %v1379 = vmul.f32 %v328, %v529
    %v1380 = vmul.f32 %v369, %v533
    %v1381 = vmul.f32 %v371, %v537
    %v1382 = vmul.f32 %v411, %v541
    %v1383 = vrot.slane %v326, 7
    %v1384 = vrot.slane %v328, 7
    %v1385 = vrot.slane %v369, 7
    %v1386 = vrot.slane %v371, 7
    %v1387 = vrot.slane %v411, 7
    %v1388 = vmul.f32 %v1383, %v559
    %v1389 = vmul.f32 %v1384, %v559
    %v1390 = vmul.f32 %v1385, %v559
    %v1391 = vmul.f32 %v1386, %v559
    %v1392 = vmul.f32 %v1387, %v559
    %v1393 = vmul.f32 %v1388, %v573
    %v1394 = vmul.f32 %v1389, %v577
    %v1395 = vmul.f32 %v1390, %v581
    %v1396 = vmul.f32 %v1391, %v585
    %v1397 = vmul.f32 %v1392, %v589
    %v1398 = vadd.f32 %v1378, %v1393
    %v1399 = vadd.f32 %v1379, %v1394
    %v1400 = vadd.f32 %v1380, %v1395
    %v1401 = vadd.f32 %v1381, %v1396
    %v1402 = vadd.f32 %v1382, %v1397
    %v1403 = vrot.slane %v326, 6
    %v1404 = vrot.slane %v328, 6
    %v1405 = vrot.slane %v369, 6
    %v1406 = vrot.slane %v371, 6
    %v1407 = vrot.slane %v411, 6
    %v1408 = vmul.f32 %v1403, %v612
    %v1409 = vmul.f32 %v1404, %v612
    %v1410 = vmul.f32 %v1405, %v612
    %v1411 = vmul.f32 %v1406, %v612
    %v1412 = vmul.f32 %v1407, %v612
    %v1413 = vmul.f32 %v1408, %v626
    %v1414 = vmul.f32 %v1409, %v630
    %v1415 = vmul.f32 %v1410, %v634
    %v1416 = vmul.f32 %v1411, %v638
    %v1417 = vmul.f32 %v1412, %v642
    %v1418 = vadd.f32 %v1398, %v1413
    %v1419 = vadd.f32 %v1399, %v1414
    %v1420 = vadd.f32 %v1400, %v1415
    %v1421 = vadd.f32 %v1401, %v1416
    %v1422 = vadd.f32 %v1402, %v1417
    %v1423 = vrot.slane %v326, 5
    %v1424 = vrot.slane %v328, 5
    %v1425 = vrot.slane %v369, 5
    %v1426 = vrot.slane %v371, 5
    %v1427 = vrot.slane %v411, 5
    %v1428 = vmul.f32 %v1423, %v665
    %v1429 = vmul.f32 %v1424, %v665
    %v1430 = vmul.f32 %v1425, %v665
    %v1431 = vmul.f32 %v1426, %v665
    %v1432 = vmul.f32 %v1427, %v665
    %v1433 = vmul.f32 %v1428, %v678
    %v1434 = vmul.f32 %v1429, %v682
    %v1435 = vmul.f32 %v1430, %v686
    %v1436 = vmul.f32 %v1431, %v690
    %v1437 = vmul.f32 %v1432, %v694
    %v1438 = vadd.f32 %v1418, %v1433
    %v1439 = vadd.f32 %v1419, %v1434
    %v1440 = vadd.f32 %v1420, %v1435
    %v1441 = vadd.f32 %v1421, %v1436
    %v1442 = vadd.f32 %v1422, %v1437
    %v1443 = vadd.f32 %v1438, %v714
    %v1444 = vadd.f32 %v1439, %v718
    %v1445 = vadd.f32 %v1440, %v722
    %v1446 = vadd.f32 %v1441, %v726
    %v1447 = vadd.f32 %v1442, %v730
    %v1448 = vsub.f32 0.0, %v1443
    %v1449 = vsub.f32 0.0, %v1444
    %v1450 = vsub.f32 0.0, %v1445
    %v1451 = vsub.f32 0.0, %v1446
    %v1452 = vsub.f32 0.0, %v1447
    %v1453 = vmul.f32 %v1448, 1.442695
    %v1454 = vpow.pop %v1453
    %v1455 = vmul.f32 %v1449, 1.442695
    %v1456 = vpow.pop %v1455
    %v1457 = vmul.f32 %v1450, 1.442695
    %v1458 = vpow.pop %v1457
    %v1459 = vmul.f32 %v1451, 1.442695
    %v1460 = vpow.pop %v1459
    %v1461 = vmul.f32 %v1452, 1.442695
    %v1462 = vpow.pop %v1461
    %v1463 = vadd.f32 %v1454, 1.0
    %v1464 = vadd.f32 %v1456, 1.0
    %v1465 = vadd.f32 %v1458, 1.0
    %v1466 = vadd.f32 %v1460, 1.0
    %v1467 = vadd.f32 %v1462, 1.0
    %v1468 = vrcp.pop %v1463
    %v1469 = vmul.f32 1.0, %v1468
    %v1470 = vrcp.pop %v1464
    %v1471 = vmul.f32 1.0, %v1470
    %v1472 = vrcp.pop %v1465
    %v1473 = vmul.f32 1.0, %v1472
    %v1474 = vrcp.pop %v1466
    %v1475 = vmul.f32 1.0, %v1474
    %v1476 = vrcp.pop %v1467
    %v1477 = vmul.f32 1.0, %v1476
    %v1478 = vmul.f32 %v1443, %v1469
    %v1479 = vmul.f32 %v1444, %v1471
    %v1480 = vmul.f32 %v1445, %v1473
    %v1481 = vmul.f32 %v1446, %v1475
    %v1482 = vmul.f32 %v1447, %v1477
    %1483 = vmatprep.subr.mxu0 0.0
    %1484 = vmatpush1.msra.mxu0 %v505
    %1485 = vmatprep.subr.mxu0 0.0
    %1486 = vmatpush1.msra.mxu0 0.0
    %1487 = vmatprep.subr.mxu0 0.0
    %1488 = vmatpush1.msra.mxu0 0.0
    %1489 = vmatprep.subr.mxu0 0.0
    %1490 = vmatpush1.msra.mxu0 0.0
    %1491 = vmatprep.subr.mxu0 0.0
    %1492 = vmatpush1.msra.mxu0 0.0
    %1493 = vmatprep.subr.mxu0 0.0
    %1494 = vmatpush1.msra.mxu0 0.0
    %1495 = vmatprep.subr.mxu0 0.0
    %1496 = vmatpush1.msra.mxu0 0.0
    %1497 = vmatprep.subr.mxu0 0.0
    %1498 = vmatpush1.msra.mxu0 0.0
    %1499 = vmatprep.subr.mxu0 0.0
    %1500 = vmatpush1.msra.mxu0 0.0
    %1501 = vmatprep.subr.mxu0 0.0
    %1502 = vmatpush1.msra.mxu0 0.0
    %1503 = vmatprep.subr.mxu0 0.0
    %1504 = vmatpush1.msra.mxu0 0.0
    %1505 = vmatprep.subr.mxu0 0.0
    %1506 = vmatpush1.msra.mxu0 0.0
    %1507 = vmatprep.subr.mxu0 0.0
    %1508 = vmatpush1.msra.mxu0 0.0
    %1509 = vmatprep.subr.mxu0 0.0
    %1510 = vmatpush1.msra.mxu0 0.0
    %1511 = vmatprep.subr.mxu0 0.0
    %1512 = vmatpush1.msra.mxu0 0.0
    %1513 = vmatprep.subr.mxu0 0.0
    %1514 = vmatpush1.msra.mxu0 0.0
    %1515 = vmatprep.subr.mxu0 0.0
    %1516 = vmatpush1.msra.mxu0 0.0
    %1517 = vmatprep.subr.mxu0 0.0
    %1518 = vmatpush1.msra.mxu0 0.0
    %1519 = vmatprep.subr.mxu0 0.0
    %1520 = vmatpush1.msra.mxu0 0.0
    %1521 = vmatprep.subr.mxu0 0.0
    %1522 = vmatpush1.msra.mxu0 0.0
    %1523 = vmatprep.subr.mxu0 0.0
    %1524 = vmatpush1.msra.mxu0 0.0
    %1525 = vmatprep.subr.mxu0 0.0
    %1526 = vmatpush1.msra.mxu0 0.0
    %1527 = vmatprep.subr.mxu0 0.0
    %1528 = vmatpush1.msra.mxu0 0.0
    %1529 = vmatprep.subr.mxu0 0.0
    %1530 = vmatpush1.msra.mxu0 0.0
    %1531 = vmatprep.subr.mxu0 0.0
    %1532 = vmatpush1.msra.mxu0 0.0
    %1533 = vmatprep.subr.mxu0 0.0
    %1534 = vmatpush1.msra.mxu0 0.0
    %1535 = vmatprep.subr.mxu0 0.0
    %1536 = vmatpush1.msra.mxu0 0.0
    %1537 = vmatprep.subr.mxu0 0.0
    %1538 = vmatpush1.msra.mxu0 0.0
    %1539 = vmatprep.subr.mxu0 0.0
    %1540 = vmatpush1.msra.mxu0 0.0
    %1541 = vmatprep.subr.mxu0 0.0
    %1542 = vmatpush1.msra.mxu0 0.0
    %1543 = vmatprep.subr.mxu0 0.0
    %1544 = vmatpush1.msra.mxu0 0.0
    %1545 = vmatprep.subr.mxu0 0.0
    %1546 = vmatpush1.msra.mxu0 0.0
    %1547 = vmatprep.mubr.f32.mxu0 0.0
    %1548 = vmatmul.mubr.f32.gmra.mrb[0].mxu0 %v778
    %v1549 = vpop.f32.mrb[0].mxu0
    %v1550 = vadd.f32 0.0, %v1549
    %v1551 = vpop.f32.mrb[0].mxu0
    %1552 = vdwg.mxu0
    %1553 = vxpose.xlu0.b32.start [1/16] %v1550, 128
    %1554 = vxpose.xlu0.b32.cont [2/16] 0.0, 128
    %1555 = vxpose.xlu0.b32.cont [3/16] 0.0, 128
    %1556 = vxpose.xlu0.b32.cont [4/16] 0.0, 128
    %1557 = vxpose.xlu0.b32.cont [5/16] 0.0, 128
    %1558 = vxpose.xlu0.b32.cont [6/16] 0.0, 128
    %1559 = vxpose.xlu0.b32.cont [7/16] 0.0, 128
    %1560 = vxpose.xlu0.b32.cont [8/16] 0.0, 128
    %1561 = vxpose.xlu0.b32.cont [9/16] 0.0, 128
    %1562 = vxpose.xlu0.b32.cont [10/16] 0.0, 128
    %1563 = vxpose.xlu0.b32.cont [11/16] 0.0, 128
    %1564 = vxpose.xlu0.b32.cont [12/16] 0.0, 128
    %1565 = vxpose.xlu0.b32.cont [13/16] 0.0, 128
    %1566 = vxpose.xlu0.b32.cont [14/16] 0.0, 128
    %1567 = vxpose.xlu0.b32.cont [15/16] 0.0, 128
    %1568 = vxpose.xlu0.b32.end [16/16] 0.0, 128
    %v1569 = vpop.trf.xlu0
    %v1570 = vpop.trf.xlu0
    %v1571 = vpop.trf.xlu0
    %v1572 = vpop.trf.xlu0
    %v1573 = vpop.trf.xlu0
    %v1574 = vpop.trf.xlu0
    %v1575 = vpop.trf.xlu0
    %v1576 = vpop.trf.xlu0
    %v1577 = vpop.trf.xlu0
    %v1578 = vpop.trf.xlu0
    %v1579 = vpop.trf.xlu0
    %v1580 = vpop.trf.xlu0
    %v1581 = vpop.trf.xlu0
    %v1582 = vpop.trf.xlu0
    %v1583 = vpop.trf.xlu0
    %v1584 = vpop.trf.xlu0
    %1585 = vmatprep.subr.mxu0 %v1479
    %1586 = vmatpush1.xpose.msra.mxu0 %v1478
    %1587 = vmatprep.subr.mxu0 0.0
    %1588 = vmatpush1.xpose.msra.mxu0 0.0
    %1589 = vmatprep.subr.mxu0 0.0
    %1590 = vmatpush1.xpose.msra.mxu0 0.0
    %1591 = vmatprep.subr.mxu0 0.0
    %1592 = vmatpush1.xpose.msra.mxu0 0.0
    %1593 = vmatprep.subr.mxu0 0.0
    %1594 = vmatpush1.xpose.msra.mxu0 0.0
    %1595 = vmatprep.subr.mxu0 0.0
    %1596 = vmatpush1.xpose.msra.mxu0 0.0
    %1597 = vmatprep.subr.mxu0 0.0
    %1598 = vmatpush1.xpose.msra.mxu0 0.0
    %1599 = vmatprep.subr.mxu0 0.0
    %1600 = vmatpush1.xpose.msra.mxu0 0.0
    %1601 = vmatprep.subr.mxu0 0.0
    %1602 = vmatpush1.xpose.msra.mxu0 0.0
    %1603 = vmatprep.subr.mxu0 0.0
    %1604 = vmatpush1.xpose.msra.mxu0 0.0
    %1605 = vmatprep.subr.mxu0 0.0
    %1606 = vmatpush1.xpose.msra.mxu0 0.0
    %1607 = vmatprep.subr.mxu0 0.0
    %1608 = vmatpush1.xpose.msra.mxu0 0.0
    %1609 = vmatprep.subr.mxu0 0.0
    %1610 = vmatpush1.xpose.msra.mxu0 0.0
    %1611 = vmatprep.subr.mxu0 0.0
    %1612 = vmatpush1.xpose.msra.mxu0 0.0
    %1613 = vmatprep.subr.mxu0 0.0
    %1614 = vmatpush1.xpose.msra.mxu0 0.0
    %1615 = vmatprep.subr.mxu0 0.0
    %1616 = vmatpush1.xpose.msra.mxu0 0.0
    %1617 = vmatprep.subr.mxu0 0.0
    %1618 = vmatpush1.xpose.msra.mxu0 0.0
    %1619 = vmatprep.subr.mxu0 0.0
    %1620 = vmatpush1.xpose.msra.mxu0 0.0
    %1621 = vmatprep.subr.mxu0 0.0
    %1622 = vmatpush1.xpose.msra.mxu0 0.0
    %1623 = vmatprep.subr.mxu0 0.0
    %1624 = vmatpush1.xpose.msra.mxu0 0.0
    %1625 = vmatprep.subr.mxu0 0.0
    %1626 = vmatpush1.xpose.msra.mxu0 0.0
    %1627 = vmatprep.subr.mxu0 0.0
    %1628 = vmatpush1.xpose.msra.mxu0 0.0
    %1629 = vmatprep.subr.mxu0 0.0
    %1630 = vmatpush1.xpose.msra.mxu0 0.0
    %1631 = vmatprep.subr.mxu0 0.0
    %1632 = vmatpush1.xpose.msra.mxu0 0.0
    %1633 = vmatprep.subr.mxu0 0.0
    %1634 = vmatpush1.xpose.msra.mxu0 0.0
    %1635 = vmatprep.subr.mxu0 0.0
    %1636 = vmatpush1.xpose.msra.mxu0 0.0
    %1637 = vmatprep.subr.mxu0 0.0
    %1638 = vmatpush1.xpose.msra.mxu0 0.0
    %1639 = vmatprep.subr.mxu0 0.0
    %1640 = vmatpush1.xpose.msra.mxu0 0.0
    %1641 = vmatprep.subr.mxu0 0.0
    %1642 = vmatpush1.xpose.msra.mxu0 0.0
    %1643 = vmatprep.subr.mxu0 0.0
    %1644 = vmatpush1.xpose.msra.mxu0 0.0
    %1645 = vmatprep.subr.mxu0 0.0
    %1646 = vmatpush1.xpose.msra.mxu0 0.0
    %1647 = vmatprep.subr.mxu0 0.0
    %1648 = vmatpush1.xpose.msra.mxu0 0.0
    %1649 = vmatprep.mubr.f32.mxu0 %v1481
    %1650 = vmatmul.mubr.f32.gmra.mrb[0].mxu0 %v1480
    %v1651 = vpop.f32.mrb[0].mxu0
    %v1652 = vadd.f32 0.0, %v1651
    %v1653 = vpop.f32.mrb[0].mxu0
    %1654 = vdwg.mxu0
    %1656 = vset.pattern.permute.xlu0 0
    %1657 = vperm.xlu0 %1656, %v1550
    %v1658 = vpop.permute.xlu0 %1657
    %v1660 = vlaneseq
    %v1661 = vshrl.u32 %v1660, 7
    %v1662 = vsub.s32 0, %v1661
    %v1663 = vrot.slane %v1569, %v1662
    %v1664 = vsub.f32 %v1658, %v1663
    %v1665 = vmin.f32 %v1664, 0.0
    %v1666 = vmul.f32 %v1665, 1.442695
    %v1667 = vpow.pop %v1666
    %v1668 = vmul.f32 %v1667, %v512
    %1670 = vset.pattern.permute.xlu0 0
    %1671 = vperm.xlu0 %1670, %v499
    %v1672 = vpop.permute.xlu0 %1671
    %v1674 = vmul.f32 %v1672, %v1482
    %v1675 = vmul.f32 %v1652, %v1668
    %v1677 = vsel %vm776, %v1675, 0
    %1679 = vmatprep.subr.mxu0 0.0
    %1680 = vmatpush1.msra.mxu0 %v1674
    %1681 = vmatprep.subr.mxu0 0.0
    %1682 = vmatpush1.msra.mxu0 0.0
    %1683 = vmatprep.subr.mxu0 0.0
    %1684 = vmatpush1.msra.mxu0 0.0
    %1685 = vmatprep.subr.mxu0 0.0
    %1686 = vmatpush1.msra.mxu0 0.0
    %1687 = vmatprep.subr.mxu0 0.0
    %1688 = vmatpush1.msra.mxu0 0.0
    %1689 = vmatprep.subr.mxu0 0.0
    %1690 = vmatpush1.msra.mxu0 0.0
    %1691 = vmatprep.subr.mxu0 0.0
    %1692 = vmatpush1.msra.mxu0 0.0
    %1693 = vmatprep.subr.mxu0 0.0
    %1694 = vmatpush1.msra.mxu0 0.0
    %1695 = vmatprep.subr.mxu0 0.0
    %1696 = vmatpush1.msra.mxu0 0.0
    %1697 = vmatprep.subr.mxu0 0.0
    %1698 = vmatpush1.msra.mxu0 0.0
    %1699 = vmatprep.subr.mxu0 0.0
    %1700 = vmatpush1.msra.mxu0 0.0
    %1701 = vmatprep.subr.mxu0 0.0
    %1702 = vmatpush1.msra.mxu0 0.0
    %1703 = vmatprep.subr.mxu0 0.0
    %1704 = vmatpush1.msra.mxu0 0.0
    %1705 = vmatprep.subr.mxu0 0.0
    %1706 = vmatpush1.msra.mxu0 0.0
    %1707 = vmatprep.subr.mxu0 0.0
    %1708 = vmatpush1.msra.mxu0 0.0
    %1709 = vmatprep.subr.mxu0 0.0
    %1710 = vmatpush1.msra.mxu0 0.0
    %1711 = vmatprep.subr.mxu0 0.0
    %1712 = vmatpush1.msra.mxu0 0.0
    %1713 = vmatprep.subr.mxu0 0.0
    %1714 = vmatpush1.msra.mxu0 0.0
    %1715 = vmatprep.subr.mxu0 0.0
    %1716 = vmatpush1.msra.mxu0 0.0
    %1717 = vmatprep.subr.mxu0 0.0
    %1718 = vmatpush1.msra.mxu0 0.0
    %1719 = vmatprep.subr.mxu0 0.0
    %1720 = vmatpush1.msra.mxu0 0.0
    %1721 = vmatprep.subr.mxu0 0.0
    %1722 = vmatpush1.msra.mxu0 0.0
    %1723 = vmatprep.subr.mxu0 0.0
    %1724 = vmatpush1.msra.mxu0 0.0
    %1725 = vmatprep.subr.mxu0 0.0
    %1726 = vmatpush1.msra.mxu0 0.0
    %1727 = vmatprep.subr.mxu0 0.0
    %1728 = vmatpush1.msra.mxu0 0.0
    %1729 = vmatprep.subr.mxu0 0.0
    %1730 = vmatpush1.msra.mxu0 0.0
    %1731 = vmatprep.subr.mxu0 0.0
    %1732 = vmatpush1.msra.mxu0 0.0
    %1733 = vmatprep.subr.mxu0 0.0
    %1734 = vmatpush1.msra.mxu0 0.0
    %1735 = vmatprep.subr.mxu0 0.0
    %1736 = vmatpush1.msra.mxu0 0.0
    %1737 = vmatprep.subr.mxu0 0.0
    %1738 = vmatpush1.msra.mxu0 0.0
    %1739 = vmatprep.subr.mxu0 0.0
    %1740 = vmatpush1.msra.mxu0 0.0
    %1741 = vmatprep.subr.mxu0 0.0
    %1742 = vmatpush1.msra.mxu0 0.0
    %1743 = vmatprep.mubr.f32.mxu0 0.0
    %1744 = vmatmul.mubr.f32.gmra.mrb[0].mxu0 %v1677
    %v1745 = vpop.f32.mrb[0].mxu0
    %v1746 = vadd.f32 0.0, %v1745
    %v1747 = vpop.f32.mrb[0].mxu0
    %1748 = vdwg.mxu0
    %1749 = vset.pattern.permute.xlu0 1
    %1750 = vperm.xlu0 %1749, %v1550
    %v1751 = vpop.permute.xlu0 %1750
    %v1753 = vlaneseq
    %v1754 = vshrl.u32 %v1753, 7
    %v1755 = vsub.s32 1, %v1754
    %v1756 = vrot.slane %v1569, %v1755
    %v1757 = vsub.f32 %v1751, %v1756
    %v1758 = vmin.f32 %v1757, 0.0
    %v1759 = vmul.f32 %v1758, 1.442695
    %v1760 = vpow.pop %v1759
    %v1761 = vmul.f32 %v1760, %v512
    %1762 = vset.pattern.permute.xlu0 1
    %1763 = vperm.xlu0 %1762, %v499
    %v1764 = vpop.permute.xlu0 %1763
    %v1766 = vmul.f32 %v1764, %v1482
    %v1767 = vmul.f32 %v1652, %v1761
    %1769 = vrot.lane.b32.xlu0 %v1766, 120
    %v1770 = vpop.permute.xlu0 %1769
    %v1773 = vsel %vm776, %v1767, 0
    %1775 = vmatprep.subr.mxu0 0.0
    %1776 = vmatpush1.msra.mxu0 %v1770
    %1777 = vmatprep.subr.mxu0 0.0
    %1778 = vmatpush1.msra.mxu0 0.0
    %1779 = vmatprep.subr.mxu0 0.0
    %1780 = vmatpush1.msra.mxu0 0.0
    %1781 = vmatprep.subr.mxu0 0.0
    %1782 = vmatpush1.msra.mxu0 0.0
    %1783 = vmatprep.subr.mxu0 0.0
    %1784 = vmatpush1.msra.mxu0 0.0
    %1785 = vmatprep.subr.mxu0 0.0
    %1786 = vmatpush1.msra.mxu0 0.0
    %1787 = vmatprep.subr.mxu0 0.0
    %1788 = vmatpush1.msra.mxu0 0.0
    %1789 = vmatprep.subr.mxu0 0.0
    %1790 = vmatpush1.msra.mxu0 0.0
    %1791 = vmatprep.subr.mxu0 0.0
    %1792 = vmatpush1.msra.mxu0 0.0
    %1793 = vmatprep.subr.mxu0 0.0
    %1794 = vmatpush1.msra.mxu0 0.0
    %1795 = vmatprep.subr.mxu0 0.0
    %1796 = vmatpush1.msra.mxu0 0.0
    %1797 = vmatprep.subr.mxu0 0.0
    %1798 = vmatpush1.msra.mxu0 0.0
    %1799 = vmatprep.subr.mxu0 0.0
    %1800 = vmatpush1.msra.mxu0 0.0
    %1801 = vmatprep.subr.mxu0 0.0
    %1802 = vmatpush1.msra.mxu0 0.0
    %1803 = vmatprep.subr.mxu0 0.0
    %1804 = vmatpush1.msra.mxu0 0.0
    %1805 = vmatprep.subr.mxu0 0.0
    %1806 = vmatpush1.msra.mxu0 0.0
    %1807 = vmatprep.subr.mxu0 0.0
    %1808 = vmatpush1.msra.mxu0 0.0
    %1809 = vmatprep.subr.mxu0 0.0
    %1810 = vmatpush1.msra.mxu0 0.0
    %1811 = vmatprep.subr.mxu0 0.0
    %1812 = vmatpush1.msra.mxu0 0.0
    %1813 = vmatprep.subr.mxu0 0.0
    %1814 = vmatpush1.msra.mxu0 0.0
    %1815 = vmatprep.subr.mxu0 0.0
    %1816 = vmatpush1.msra.mxu0 0.0
    %1817 = vmatprep.subr.mxu0 0.0
    %1818 = vmatpush1.msra.mxu0 0.0
    %1819 = vmatprep.subr.mxu0 0.0
    %1820 = vmatpush1.msra.mxu0 0.0
    %1821 = vmatprep.subr.mxu0 0.0
    %1822 = vmatpush1.msra.mxu0 0.0
    %1823 = vmatprep.subr.mxu0 0.0
    %1824 = vmatpush1.msra.mxu0 0.0
    %1825 = vmatprep.subr.mxu0 0.0
    %1826 = vmatpush1.msra.mxu0 0.0
    %1827 = vmatprep.subr.mxu0 0.0
    %1828 = vmatpush1.msra.mxu0 0.0
    %1829 = vmatprep.subr.mxu0 0.0
    %1830 = vmatpush1.msra.mxu0 0.0
    %1831 = vmatprep.subr.mxu0 0.0
    %1832 = vmatpush1.msra.mxu0 0.0
    %1833 = vmatprep.subr.mxu0 0.0
    %1834 = vmatpush1.msra.mxu0 0.0
    %1835 = vmatprep.subr.mxu0 0.0
    %1836 = vmatpush1.msra.mxu0 0.0
    %1837 = vmatprep.subr.mxu0 0.0
    %1838 = vmatpush1.msra.mxu0 0.0
    %1839 = vmatprep.mubr.f32.mxu0 0.0
    %1840 = vmatmul.mubr.f32.gmra.mrb[0].mxu0 %v1773
    %v1841 = vpop.f32.mrb[0].mxu0
    %v1842 = vadd.f32 0.0, %v1841
    %v1843 = vpop.f32.mrb[0].mxu0
    %1844 = vdwg.mxu0
    %1845 = vset.pattern.permute.xlu0 2
    %1846 = vperm.xlu0 %1845, %v1550
    %v1847 = vpop.permute.xlu0 %1846
    %v1849 = vlaneseq
    %v1850 = vshrl.u32 %v1849, 7
    %v1851 = vsub.s32 2, %v1850
    %v1852 = vrot.slane %v1569, %v1851
    %v1853 = vsub.f32 %v1847, %v1852
    %v1854 = vmin.f32 %v1853, 0.0
    %v1855 = vmul.f32 %v1854, 1.442695
    %v1856 = vpow.pop %v1855
    %v1857 = vmul.f32 %v1856, %v512
    %1858 = vset.pattern.permute.xlu0 2
    %1859 = vperm.xlu0 %1858, %v499
    %v1860 = vpop.permute.xlu0 %1859
    %v1862 = vmul.f32 %v1860, %v1482
    %v1863 = vmul.f32 %v1652, %v1857
    %1865 = vrot.lane.b32.xlu0 %v1862, 112
    %v1866 = vpop.permute.xlu0 %1865
    %v1869 = vsel %vm776, %v1863, 0
    %1871 = vmatprep.subr.mxu0 0.0
    %1872 = vmatpush1.msra.mxu0 %v1866
    %1873 = vmatprep.subr.mxu0 0.0
    %1874 = vmatpush1.msra.mxu0 0.0
    %1875 = vmatprep.subr.mxu0 0.0
    %1876 = vmatpush1.msra.mxu0 0.0
    %1877 = vmatprep.subr.mxu0 0.0
    %1878 = vmatpush1.msra.mxu0 0.0
    %1879 = vmatprep.subr.mxu0 0.0
    %1880 = vmatpush1.msra.mxu0 0.0
    %1881 = vmatprep.subr.mxu0 0.0
    %1882 = vmatpush1.msra.mxu0 0.0
    %1883 = vmatprep.subr.mxu0 0.0
    %1884 = vmatpush1.msra.mxu0 0.0
    %1885 = vmatprep.subr.mxu0 0.0
    %1886 = vmatpush1.msra.mxu0 0.0
    %1887 = vmatprep.subr.mxu0 0.0
    %1888 = vmatpush1.msra.mxu0 0.0
    %1889 = vmatprep.subr.mxu0 0.0
    %1890 = vmatpush1.msra.mxu0 0.0
    %1891 = vmatprep.subr.mxu0 0.0
    %1892 = vmatpush1.msra.mxu0 0.0
    %1893 = vmatprep.subr.mxu0 0.0
    %1894 = vmatpush1.msra.mxu0 0.0
    %1895 = vmatprep.subr.mxu0 0.0
    %1896 = vmatpush1.msra.mxu0 0.0
    %1897 = vmatprep.subr.mxu0 0.0
    %1898 = vmatpush1.msra.mxu0 0.0
    %1899 = vmatprep.subr.mxu0 0.0
    %1900 = vmatpush1.msra.mxu0 0.0
    %1901 = vmatprep.subr.mxu0 0.0
    %1902 = vmatpush1.msra.mxu0 0.0
    %1903 = vmatprep.subr.mxu0 0.0
    %1904 = vmatpush1.msra.mxu0 0.0
    %1905 = vmatprep.subr.mxu0 0.0
    %1906 = vmatpush1.msra.mxu0 0.0
    %1907 = vmatprep.subr.mxu0 0.0
    %1908 = vmatpush1.msra.mxu0 0.0
    %1909 = vmatprep.subr.mxu0 0.0
    %1910 = vmatpush1.msra.mxu0 0.0
    %1911 = vmatprep.subr.mxu0 0.0
    %1912 = vmatpush1.msra.mxu0 0.0
    %1913 = vmatprep.subr.mxu0 0.0
    %1914 = vmatpush1.msra.mxu0 0.0
    %1915 = vmatprep.subr.mxu0 0.0
    %1916 = vmatpush1.msra.mxu0 0.0
    %1917 = vmatprep.subr.mxu0 0.0
    %1918 = vmatpush1.msra.mxu0 0.0
    %1919 = vmatprep.subr.mxu0 0.0
    %1920 = vmatpush1.msra.mxu0 0.0
    %1921 = vmatprep.subr.mxu0 0.0
    %1922 = vmatpush1.msra.mxu0 0.0
    %1923 = vmatprep.subr.mxu0 0.0
    %1924 = vmatpush1.msra.mxu0 0.0
    %1925 = vmatprep.subr.mxu0 0.0
    %1926 = vmatpush1.msra.mxu0 0.0
    %1927 = vmatprep.subr.mxu0 0.0
    %1928 = vmatpush1.msra.mxu0 0.0
    %1929 = vmatprep.subr.mxu0 0.0
    %1930 = vmatpush1.msra.mxu0 0.0
    %1931 = vmatprep.subr.mxu0 0.0
    %1932 = vmatpush1.msra.mxu0 0.0
    %1933 = vmatprep.subr.mxu0 0.0
    %1934 = vmatpush1.msra.mxu0 0.0
    %1935 = vmatprep.mubr.f32.mxu0 0.0
    %1936 = vmatmul.mubr.f32.gmra.mrb[0].mxu0 %v1869
    %v1937 = vpop.f32.mrb[0].mxu0
    %v1938 = vadd.f32 0.0, %v1937
    %v1939 = vpop.f32.mrb[0].mxu0
    %1940 = vdwg.mxu0
    %1941 = vset.pattern.permute.xlu0 3
    %1942 = vperm.xlu0 %1941, %v1550
    %v1943 = vpop.permute.xlu0 %1942
    %v1945 = vlaneseq
    %v1946 = vshrl.u32 %v1945, 7
    %v1947 = vsub.s32 3, %v1946
    %v1948 = vrot.slane %v1569, %v1947
    %v1949 = vsub.f32 %v1943, %v1948
    %v1950 = vmin.f32 %v1949, 0.0
    %v1951 = vmul.f32 %v1950, 1.442695
    %v1952 = vpow.pop %v1951
    %v1953 = vmul.f32 %v1952, %v512
    %1954 = vset.pattern.permute.xlu0 3
    %1955 = vperm.xlu0 %1954, %v499
    %v1956 = vpop.permute.xlu0 %1955
    %v1958 = vmul.f32 %v1956, %v1482
    %v1959 = vmul.f32 %v1652, %v1953
    %1961 = vrot.lane.b32.xlu0 %v1958, 104
    %v1962 = vpop.permute.xlu0 %1961
    %v1965 = vsel %vm776, %v1959, 0
    %1967 = vmatprep.subr.mxu0 0.0
    %1968 = vmatpush1.msra.mxu0 %v1962
    %1969 = vmatprep.subr.mxu0 0.0
    %1970 = vmatpush1.msra.mxu0 0.0
    %1971 = vmatprep.subr.mxu0 0.0
    %1972 = vmatpush1.msra.mxu0 0.0
    %1973 = vmatprep.subr.mxu0 0.0
    %1974 = vmatpush1.msra.mxu0 0.0
    %1975 = vmatprep.subr.mxu0 0.0
    %1976 = vmatpush1.msra.mxu0 0.0
    %1977 = vmatprep.subr.mxu0 0.0
    %1978 = vmatpush1.msra.mxu0 0.0
    %1979 = vmatprep.subr.mxu0 0.0
    %1980 = vmatpush1.msra.mxu0 0.0
    %1981 = vmatprep.subr.mxu0 0.0
    %1982 = vmatpush1.msra.mxu0 0.0
    %1983 = vmatprep.subr.mxu0 0.0
    %1984 = vmatpush1.msra.mxu0 0.0
    %1985 = vmatprep.subr.mxu0 0.0
    %1986 = vmatpush1.msra.mxu0 0.0
    %1987 = vmatprep.subr.mxu0 0.0
    %1988 = vmatpush1.msra.mxu0 0.0
    %1989 = vmatprep.subr.mxu0 0.0
    %1990 = vmatpush1.msra.mxu0 0.0
    %1991 = vmatprep.subr.mxu0 0.0
    %1992 = vmatpush1.msra.mxu0 0.0
    %1993 = vmatprep.subr.mxu0 0.0
    %1994 = vmatpush1.msra.mxu0 0.0
    %1995 = vmatprep.subr.mxu0 0.0
    %1996 = vmatpush1.msra.mxu0 0.0
    %1997 = vmatprep.subr.mxu0 0.0
    %1998 = vmatpush1.msra.mxu0 0.0
    %1999 = vmatprep.subr.mxu0 0.0
    %2000 = vmatpush1.msra.mxu0 0.0
    %2001 = vmatprep.subr.mxu0 0.0
    %2002 = vmatpush1.msra.mxu0 0.0
    %2003 = vmatprep.subr.mxu0 0.0
    %2004 = vmatpush1.msra.mxu0 0.0
    %2005 = vmatprep.subr.mxu0 0.0
    %2006 = vmatpush1.msra.mxu0 0.0
    %2007 = vmatprep.subr.mxu0 0.0
    %2008 = vmatpush1.msra.mxu0 0.0
    %2009 = vmatprep.subr.mxu0 0.0
    %2010 = vmatpush1.msra.mxu0 0.0
    %2011 = vmatprep.subr.mxu0 0.0
    %2012 = vmatpush1.msra.mxu0 0.0
    %2013 = vmatprep.subr.mxu0 0.0
    %2014 = vmatpush1.msra.mxu0 0.0
    %2015 = vmatprep.subr.mxu0 0.0
    %2016 = vmatpush1.msra.mxu0 0.0
    %2017 = vmatprep.subr.mxu0 0.0
    %2018 = vmatpush1.msra.mxu0 0.0
    %2019 = vmatprep.subr.mxu0 0.0
    %2020 = vmatpush1.msra.mxu0 0.0
    %2021 = vmatprep.subr.mxu0 0.0
    %2022 = vmatpush1.msra.mxu0 0.0
    %2023 = vmatprep.subr.mxu0 0.0
    %2024 = vmatpush1.msra.mxu0 0.0
    %2025 = vmatprep.subr.mxu0 0.0
    %2026 = vmatpush1.msra.mxu0 0.0
    %2027 = vmatprep.subr.mxu0 0.0
    %2028 = vmatpush1.msra.mxu0 0.0
    %2029 = vmatprep.subr.mxu0 0.0
    %2030 = vmatpush1.msra.mxu0 0.0
    %2031 = vmatprep.mubr.f32.mxu0 0.0
    %2032 = vmatmul.mubr.f32.gmra.mrb[0].mxu0 %v1965
    %v2033 = vpop.f32.mrb[0].mxu0
    %v2034 = vadd.f32 0.0, %v2033
    %v2035 = vpop.f32.mrb[0].mxu0
    %2036 = vdwg.mxu0
    %2038 = vrot.lane.b32.xlu0 %v1842, 8
    %v2039 = vpop.permute.xlu0 %2038
    %2042 = vrot.lane.b32.xlu0 %v1938, 16
    %v2043 = vpop.permute.xlu0 %2042
    %2046 = vrot.lane.b32.xlu0 %v2034, 24
    %v2047 = vpop.permute.xlu0 %2046
    %v2049 = vsel %vm776, %v1746, %v2039
    %v2050 = vsel %vm1347, %v2049, %v2043
    %v2051 = vsel %vm1349, %v2050, %v2047
    %v2052 = vmul.f32 %v1354, %v1482
    %v2053 = vadd.f32 %v2051, %v2052
    %v2054 = vsub.f32 0.0, %v220
    %v2055 = vmul.f32 %v2054, 1.442695
    %v2056 = vpow.pop %v2055
    %v2057 = vadd.f32 %v2056, 1.0
    %v2058 = vrcp.pop %v2057
    %v2059 = vmul.f32 1.0, %v2058
    %v2060 = vmul.f32 %v220, %v2059
    %v2061 = vmul.f32 %v2053, %v2060
    %v2062 = vmul.f32 %v2061, %v2061
    %v2063 = vsel %vm117, %v2062, 0.0
    %2064 = vadd.xlane.f32.xlu0 %v2063
    %v2065 = vpop.xlane.xlu0 %2064
    %v2066 = vmul.f32 %v2065, %v124
    %v2067 = vadd.f32 %v2066, 1e-05
    %v2068 = vrsqrt.pop %v2067
    %v2069 = vmul.f32 %v2061, %v2068
    %v2070 = vmul.f32 %v2069, %v1376
    %v2071 = vpack.c.bf16 %v2070, %v1377
    %v2072 = vld [vmem:[#allocation8] sm:$0xf]
    %v2073 = vld [vmem:[#allocation8 + $0x4] sm:$0xf]
    %v2074 = vld [vmem:[#allocation8 + $0x8] sm:$0xf]
    %v2075 = vld [vmem:[#allocation8 + $0xc] sm:$0xf]
    %v2080 = vunpack.c.l.b16 %v2072
    %v2081 = vunpack.c.l.b16 %v2073
    %v2082 = vunpack.c.l.b16 %v2074
    %v2083 = vunpack.c.l.b16 %v2075
    %v2084 = vpack.c.b16 %v2081, %v2080
    %v2085 = vpack.c.b16 %v2083, %v2082
    %v2089 = vsel %vm117, %v2071, 0
    %2091 = vmatprep.subr.bf16.mxu0 0
    %2092 = vmatpush1.bf16.msra.mxu0 %v2084
    %2093 = vmatprep.subr.bf16.mxu0 0
    %2094 = vmatpush1.bf16.msra.mxu0 %v2085
    %2095 = vmatprep.subr.bf16.mxu0 0
    %2096 = vmatpush1.bf16.msra.mxu0 0
    %2097 = vmatprep.subr.bf16.mxu0 0
    %2098 = vmatpush1.bf16.msra.mxu0 0
    %2099 = vmatprep.subr.bf16.mxu0 0
    %2100 = vmatpush1.bf16.msra.mxu0 0
    %2101 = vmatprep.subr.bf16.mxu0 0
    %2102 = vmatpush1.bf16.msra.mxu0 0
    %2103 = vmatprep.subr.bf16.mxu0 0
    %2104 = vmatpush1.bf16.msra.mxu0 0
    %2105 = vmatprep.subr.bf16.mxu0 0
    %2106 = vmatpush1.bf16.msra.mxu0 0
    %2107 = vmatprep.subr.bf16.mxu0 0
    %2108 = vmatpush1.bf16.msra.mxu0 0
    %2109 = vmatprep.subr.bf16.mxu0 0
    %2110 = vmatpush1.bf16.msra.mxu0 0
    %2111 = vmatprep.subr.bf16.mxu0 0
    %2112 = vmatpush1.bf16.msra.mxu0 0
    %2113 = vmatprep.subr.bf16.mxu0 0
    %2114 = vmatpush1.bf16.msra.mxu0 0
    %2115 = vmatprep.subr.bf16.mxu0 0
    %2116 = vmatpush1.bf16.msra.mxu0 0
    %2117 = vmatprep.subr.bf16.mxu0 0
    %2118 = vmatpush1.bf16.msra.mxu0 0
    %2119 = vmatprep.subr.bf16.mxu0 0
    %2120 = vmatpush1.bf16.msra.mxu0 0
    %2121 = vmatprep.subr.bf16.mxu0 0
    %2122 = vmatpush1.bf16.msra.mxu0 0
    %2123 = vmatprep.mubr.bf16.mxu0 0
    %2124 = vmatmul.mubr.bf16.gmra.mrb[0].mxu0 %v2089
    %v2125 = vpop.f32.mrb[0].mxu0
    %v2126 = vadd.f32 0.0, %v2125
    %v2127 = vpop.f32.mrb[0].mxu0
    %v2128 = vpop.f32.mrb[0].mxu0
    %v2129 = vadd.f32 0.0, %v2128
    %v2130 = vpop.f32.mrb[0].mxu0
    %2131 = vdwg.mxu0
    %v2132 = vpack.c.bf16 %v2129, %v2126
    %v2133 = vld [vmem:[#allocation10] sm:$0xf]
    %v2134 = vld [vmem:[#allocation10 + $0x4] sm:$0xf]
    %v2135 = vld [vmem:[#allocation10 + $0x8] sm:$0xf]
    %v2136 = vld [vmem:[#allocation10 + $0xc] sm:$0xf]
    %v2141 = vunpack.c.l.b16 %v2133
    %v2142 = vunpack.c.l.b16 %v2134
    %v2143 = vunpack.c.l.b16 %v2135
    %v2144 = vunpack.c.l.b16 %v2136
    %v2145 = vpack.c.b16 %v2142, %v2141
    %v2146 = vpack.c.b16 %v2144, %v2143
    %v2150 = vsel %vm117, %v2132, 0
    %2152 = vmatprep.subr.bf16.mxu0 0
    %2153 = vmatpush1.bf16.msra.mxu0 %v2145
    %2154 = vmatprep.subr.bf16.mxu0 0
    %2155 = vmatpush1.bf16.msra.mxu0 %v2146
    %2156 = vmatprep.subr.bf16.mxu0 0
    %2157 = vmatpush1.bf16.msra.mxu0 0
    %2158 = vmatprep.subr.bf16.mxu0 0
    %2159 = vmatpush1.bf16.msra.mxu0 0
    %2160 = vmatprep.subr.bf16.mxu0 0
    %2161 = vmatpush1.bf16.msra.mxu0 0
    %2162 = vmatprep.subr.bf16.mxu0 0
    %2163 = vmatpush1.bf16.msra.mxu0 0
    %2164 = vmatprep.subr.bf16.mxu0 0
    %2165 = vmatpush1.bf16.msra.mxu0 0
    %2166 = vmatprep.subr.bf16.mxu0 0
    %2167 = vmatpush1.bf16.msra.mxu0 0
    %2168 = vmatprep.subr.bf16.mxu0 0
    %2169 = vmatpush1.bf16.msra.mxu0 0
    %2170 = vmatprep.subr.bf16.mxu0 0
    %2171 = vmatpush1.bf16.msra.mxu0 0
    %2172 = vmatprep.subr.bf16.mxu0 0
    %2173 = vmatpush1.bf16.msra.mxu0 0
    %2174 = vmatprep.subr.bf16.mxu0 0
    %2175 = vmatpush1.bf16.msra.mxu0 0
    %2176 = vmatprep.subr.bf16.mxu0 0
    %2177 = vmatpush1.bf16.msra.mxu0 0
    %2178 = vmatprep.subr.bf16.mxu0 0
    %2179 = vmatpush1.bf16.msra.mxu0 0
    %2180 = vmatprep.subr.bf16.mxu0 0
    %2181 = vmatpush1.bf16.msra.mxu0 0
    %2182 = vmatprep.subr.bf16.mxu0 0
    %2183 = vmatpush1.bf16.msra.mxu0 0
    %2184 = vmatprep.mubr.bf16.mxu0 0
    %2185 = vmatmul.mubr.bf16.gmra.mrb[0].mxu0 %v2150
    %v2186 = vpop.f32.mrb[0].mxu0
    %v2187 = vadd.f32 0.0, %v2186
    %v2188 = vpop.f32.mrb[0].mxu0
    %v2189 = vpop.f32.mrb[0].mxu0
    %v2190 = vadd.f32 0.0, %v2189
    %v2191 = vpop.f32.mrb[0].mxu0
    %2192 = vdwg.mxu0
    %v2193 = vadd.f32 %v112, %v2187
    %v2194 = vadd.f32 %v113, %v2190
    %v2195 = vld [vmem:[#allocation5 + $0x2] sm:$0x1]
    %v2196 = vmul.f32 %v2193, %v2193
    %v2197 = vmul.f32 %v2194, %v2194
    %v2198 = vsel %vm117, %v2196, 0.0
    %2199 = vadd.xlane.f32.xlu0 %v2198
    %v2200 = vpop.xlane.xlu0 %2199
    %v2201 = vsel %vm117, %v2197, 0.0
    %2202 = vadd.xlane.f32.xlu0 %v2201
    %v2203 = vpop.xlane.xlu0 %2202
    %v2204 = vmul.f32 %v2200, %v124
    %v2205 = vmul.f32 %v2203, %v124
    %v2206 = vadd.f32 %v2204, 1e-05
    %v2207 = vadd.f32 %v2205, 1e-05
    %v2208 = vrsqrt.pop %v2206
    %v2209 = vrsqrt.pop %v2207
    %v2210 = vmul.f32 %v2193, %v2208
    %v2211 = vmul.f32 %v2194, %v2209
    %v2212 = vlaneseq
    %v2213 = vshrl.u32 %v2212, 7
    %v2214 = vsub.s32 0, %v2213
    %v2215 = vrot.slane %v2195, %v2214
    %v2216 = vmul.f32 %v2210, %v2215
    %v2217 = vmul.f32 %v2211, %v2215
    %v2218 = vpack.c.bf16 %v2217, %v2216
    %v2219 = vld [vmem:[%s10] sm:$0xff]
    %v2220 = vld [vmem:[%s10 + $0x8] sm:$0xff]
    %v2221 = vld [vmem:[%s10 + $0x10] sm:$0xff]
    %v2222 = vld [vmem:[%s10 + $0x18] sm:$0xff]
    %v2227 = vunpack.c.l.b16 %v2219
    %v2228 = vunpack.c.h.b16 %v2219
    %v2229 = vunpack.c.l.b16 %v2220
    %v2230 = vunpack.c.h.b16 %v2220
    %v2231 = vunpack.c.l.b16 %v2221
    %v2232 = vunpack.c.h.b16 %v2221
    %v2233 = vunpack.c.l.b16 %v2222
    %v2234 = vunpack.c.h.b16 %v2222
    %v2235 = vpack.c.b16 %v2229, %v2227
    %v2236 = vpack.c.b16 %v2230, %v2228
    %v2237 = vpack.c.b16 %v2233, %v2231
    %v2238 = vpack.c.b16 %v2234, %v2232
    %v2244 = vsel %vm117, %v2218, 0
    %2246 = vmatprep.subr.bf16.mxu0 %v2236
    %2247 = vmatpush1.bf16.msra.mxu0 %v2235
    %2248 = vmatprep.subr.bf16.mxu0 %v2238
    %2249 = vmatpush1.bf16.msra.mxu0 %v2237
    %2250 = vmatprep.subr.bf16.mxu0 0
    %2251 = vmatpush1.bf16.msra.mxu0 0
    %2252 = vmatprep.subr.bf16.mxu0 0
    %2253 = vmatpush1.bf16.msra.mxu0 0
    %2254 = vmatprep.subr.bf16.mxu0 0
    %2255 = vmatpush1.bf16.msra.mxu0 0
    %2256 = vmatprep.subr.bf16.mxu0 0
    %2257 = vmatpush1.bf16.msra.mxu0 0
    %2258 = vmatprep.subr.bf16.mxu0 0
    %2259 = vmatpush1.bf16.msra.mxu0 0
    %2260 = vmatprep.subr.bf16.mxu0 0
    %2261 = vmatpush1.bf16.msra.mxu0 0
    %2262 = vmatprep.subr.bf16.mxu0 0
    %2263 = vmatpush1.bf16.msra.mxu0 0
    %2264 = vmatprep.subr.bf16.mxu0 0
    %2265 = vmatpush1.bf16.msra.mxu0 0
    %2266 = vmatprep.subr.bf16.mxu0 0
    %2267 = vmatpush1.bf16.msra.mxu0 0
    %2268 = vmatprep.subr.bf16.mxu0 0
    %2269 = vmatpush1.bf16.msra.mxu0 0
    %2270 = vmatprep.subr.bf16.mxu0 0
    %2271 = vmatpush1.bf16.msra.mxu0 0
    %2272 = vmatprep.subr.bf16.mxu0 0
    %2273 = vmatpush1.bf16.msra.mxu0 0
    %2274 = vmatprep.subr.bf16.mxu0 0
    %2275 = vmatpush1.bf16.msra.mxu0 0
    %2276 = vmatprep.subr.bf16.mxu0 0
    %2277 = vmatpush1.bf16.msra.mxu0 0
    %2278 = vmatprep.mubr.bf16.mxu0 0
    %2279 = vmatmul.mubr.bf16.gmra.mrb[0].mxu0 %v2244
    %v2280 = vpop.f32.mrb[0].mxu0
    %v2281 = vadd.f32 0.0, %v2280
    %v2282 = vpop.f32.mrb[0].mxu0
    %v2283 = vadd.f32 0.0, %v2282
    %v2284 = vpop.f32.mrb[0].mxu0
    %v2285 = vadd.f32 0.0, %v2284
    %v2286 = vpop.f32.mrb[0].mxu0
    %v2287 = vadd.f32 0.0, %v2286
    %2288 = vdwg.mxu0
    %v2289 = vld [vmem:[%s11] sm:$0xff]
    %v2290 = vld [vmem:[%s11 + $0x8] sm:$0xff]
    %v2291 = vld [vmem:[%s11 + $0x10] sm:$0xff]
    %v2292 = vld [vmem:[%s11 + $0x18] sm:$0xff]
    %v2297 = vunpack.c.l.b16 %v2289
    %v2298 = vunpack.c.h.b16 %v2289
    %v2299 = vunpack.c.l.b16 %v2290
    %v2300 = vunpack.c.h.b16 %v2290
    %v2301 = vunpack.c.l.b16 %v2291
    %v2302 = vunpack.c.h.b16 %v2291
    %v2303 = vunpack.c.l.b16 %v2292
    %v2304 = vunpack.c.h.b16 %v2292
    %v2305 = vpack.c.b16 %v2299, %v2297
    %v2306 = vpack.c.b16 %v2300, %v2298
    %v2307 = vpack.c.b16 %v2303, %v2301
    %v2308 = vpack.c.b16 %v2304, %v2302
    %2313 = vmatprep.subr.bf16.mxu0 %v2306
    %2314 = vmatpush1.bf16.msra.mxu0 %v2305
    %2315 = vmatprep.subr.bf16.mxu0 %v2308
    %2316 = vmatpush1.bf16.msra.mxu0 %v2307
    %2317 = vmatprep.subr.bf16.mxu0 0
    %2318 = vmatpush1.bf16.msra.mxu0 0
    %2319 = vmatprep.subr.bf16.mxu0 0
    %2320 = vmatpush1.bf16.msra.mxu0 0
    %2321 = vmatprep.subr.bf16.mxu0 0
    %2322 = vmatpush1.bf16.msra.mxu0 0
    %2323 = vmatprep.subr.bf16.mxu0 0
    %2324 = vmatpush1.bf16.msra.mxu0 0
    %2325 = vmatprep.subr.bf16.mxu0 0
    %2326 = vmatpush1.bf16.msra.mxu0 0
    %2327 = vmatprep.subr.bf16.mxu0 0
    %2328 = vmatpush1.bf16.msra.mxu0 0
    %2329 = vmatprep.subr.bf16.mxu0 0
    %2330 = vmatpush1.bf16.msra.mxu0 0
    %2331 = vmatprep.subr.bf16.mxu0 0
    %2332 = vmatpush1.bf16.msra.mxu0 0
    %2333 = vmatprep.subr.bf16.mxu0 0
    %2334 = vmatpush1.bf16.msra.mxu0 0
    %2335 = vmatprep.subr.bf16.mxu0 0
    %2336 = vmatpush1.bf16.msra.mxu0 0
    %2337 = vmatprep.subr.bf16.mxu0 0
    %2338 = vmatpush1.bf16.msra.mxu0 0
    %2339 = vmatprep.subr.bf16.mxu0 0
    %2340 = vmatpush1.bf16.msra.mxu0 0
    %2341 = vmatprep.subr.bf16.mxu0 0
    %2342 = vmatpush1.bf16.msra.mxu0 0
    %2343 = vmatprep.subr.bf16.mxu0 0
    %2344 = vmatpush1.bf16.msra.mxu0 0
    %2345 = vmatprep.mubr.bf16.mxu0 0
    %2346 = vmatmul.mubr.bf16.gmra.mrb[0].mxu0 %v2244
    %v2347 = vpop.f32.mrb[0].mxu0
    %v2348 = vadd.f32 0.0, %v2347
    %v2349 = vpop.f32.mrb[0].mxu0
    %v2350 = vadd.f32 0.0, %v2349
    %v2351 = vpop.f32.mrb[0].mxu0
    %v2352 = vadd.f32 0.0, %v2351
    %v2353 = vpop.f32.mrb[0].mxu0
    %v2354 = vadd.f32 0.0, %v2353
    %2355 = vdwg.mxu0
    %v2356 = vsub.f32 0.0, %v2281
    %v2357 = vsub.f32 0.0, %v2283
    %v2358 = vsub.f32 0.0, %v2285
    %v2359 = vsub.f32 0.0, %v2287
    %v2360 = vmul.f32 %v2356, 1.442695
    %v2361 = vpow.pop %v2360
    %v2362 = vmul.f32 %v2357, 1.442695
    %v2363 = vpow.pop %v2362
    %v2364 = vmul.f32 %v2358, 1.442695
    %v2365 = vpow.pop %v2364
    %v2366 = vmul.f32 %v2359, 1.442695
    %v2367 = vpow.pop %v2366
    %v2368 = vadd.f32 %v2361, 1.0
    %v2369 = vadd.f32 %v2363, 1.0
    %v2370 = vadd.f32 %v2365, 1.0
    %v2371 = vadd.f32 %v2367, 1.0
    %v2372 = vrcp.pop %v2368
    %v2373 = vmul.f32 1.0, %v2372
    %v2374 = vrcp.pop %v2369
    %v2375 = vmul.f32 1.0, %v2374
    %v2376 = vrcp.pop %v2370
    %v2377 = vmul.f32 1.0, %v2376
    %v2378 = vrcp.pop %v2371
    %v2379 = vmul.f32 1.0, %v2378
    %v2380 = vmul.f32 %v2281, %v2373
    %v2381 = vmul.f32 %v2283, %v2375
    %v2382 = vmul.f32 %v2285, %v2377
    %v2383 = vmul.f32 %v2287, %v2379
    %v2384 = vmul.f32 %v2380, %v2348
    %v2385 = vmul.f32 %v2381, %v2350
    %v2386 = vmul.f32 %v2382, %v2352
    %v2387 = vmul.f32 %v2383, %v2354
    %v2388 = vpack.c.bf16 %v2386, %v2384
    %v2389 = vpack.c.bf16 %v2387, %v2385
    %v2390 = vld [vmem:[%s12] sm:$0xf]
    %v2391 = vld [vmem:[%s12 + $0x4] sm:$0xf]
    %v2392 = vld [vmem:[%s12 + $0x8] sm:$0xf]
    %v2393 = vld [vmem:[%s12 + $0xc] sm:$0xf]
    %v2394 = vld [vmem:[%s12 + $0x10] sm:$0xf]
    %v2395 = vld [vmem:[%s12 + $0x14] sm:$0xf]
    %v2396 = vld [vmem:[%s12 + $0x18] sm:$0xf]
    %v2397 = vld [vmem:[%s12 + $0x1c] sm:$0xf]
    %v2398 = vld [vmem:[%s12 + $0x20] sm:$0xf]
    %v2399 = vld [vmem:[%s12 + $0x24] sm:$0xf]
    %v2400 = vld [vmem:[%s12 + $0x28] sm:$0xf]
    %v2401 = vld [vmem:[%s12 + $0x2c] sm:$0xf]
    %v2402 = vld [vmem:[%s12 + $0x30] sm:$0xf]
    %v2403 = vld [vmem:[%s12 + $0x34] sm:$0xf]
    %v2404 = vld [vmem:[%s12 + $0x38] sm:$0xf]
    %v2405 = vld [vmem:[%s12 + $0x3c] sm:$0xf]
    %v2406 = vld [vmem:[%s12 + $0x40] sm:$0xf]
    %v2407 = vld [vmem:[%s12 + $0x44] sm:$0xf]
    %v2408 = vld [vmem:[%s12 + $0x48] sm:$0xf]
    %v2409 = vld [vmem:[%s12 + $0x4c] sm:$0xf]
    %v2410 = vld [vmem:[%s12 + $0x50] sm:$0xf]
    %v2411 = vld [vmem:[%s12 + $0x54] sm:$0xf]
    %v2412 = vld [vmem:[%s12 + $0x58] sm:$0xf]
    %v2413 = vld [vmem:[%s12 + $0x5c] sm:$0xf]
    %v2414 = vld [vmem:[%s12 + $0x60] sm:$0xf]
    %v2415 = vld [vmem:[%s12 + $0x64] sm:$0xf]
    %v2416 = vld [vmem:[%s12 + $0x68] sm:$0xf]
    %v2417 = vld [vmem:[%s12 + $0x6c] sm:$0xf]
    %v2418 = vld [vmem:[%s12 + $0x70] sm:$0xf]
    %v2419 = vld [vmem:[%s12 + $0x74] sm:$0xf]
    %v2420 = vld [vmem:[%s12 + $0x78] sm:$0xf]
    %v2421 = vld [vmem:[%s12 + $0x7c] sm:$0xf]
    %v2454 = vunpack.c.l.b16 %v2390
    %v2455 = vunpack.c.l.b16 %v2391
    %v2456 = vunpack.c.l.b16 %v2392
    %v2457 = vunpack.c.l.b16 %v2393
    %v2458 = vunpack.c.l.b16 %v2394
    %v2459 = vunpack.c.l.b16 %v2395
    %v2460 = vunpack.c.l.b16 %v2396
    %v2461 = vunpack.c.l.b16 %v2397
    %v2462 = vunpack.c.l.b16 %v2398
    %v2463 = vunpack.c.l.b16 %v2399
    %v2464 = vunpack.c.l.b16 %v2400
    %v2465 = vunpack.c.l.b16 %v2401
    %v2466 = vunpack.c.l.b16 %v2402
    %v2467 = vunpack.c.l.b16 %v2403
    %v2468 = vunpack.c.l.b16 %v2404
    %v2469 = vunpack.c.l.b16 %v2405
    %v2470 = vunpack.c.l.b16 %v2406
    %v2471 = vunpack.c.l.b16 %v2407
    %v2472 = vunpack.c.l.b16 %v2408
    %v2473 = vunpack.c.l.b16 %v2409
    %v2474 = vunpack.c.l.b16 %v2410
    %v2475 = vunpack.c.l.b16 %v2411
    %v2476 = vunpack.c.l.b16 %v2412
    %v2477 = vunpack.c.l.b16 %v2413
    %v2478 = vunpack.c.l.b16 %v2414
    %v2479 = vunpack.c.l.b16 %v2415
    %v2480 = vunpack.c.l.b16 %v2416
    %v2481 = vunpack.c.l.b16 %v2417
    %v2482 = vunpack.c.l.b16 %v2418
    %v2483 = vunpack.c.l.b16 %v2419
    %v2484 = vunpack.c.l.b16 %v2420
    %v2485 = vunpack.c.l.b16 %v2421
    %v2486 = vpack.c.b16 %v2455, %v2454
    %v2487 = vpack.c.b16 %v2457, %v2456
    %v2488 = vpack.c.b16 %v2459, %v2458
    %v2489 = vpack.c.b16 %v2461, %v2460
    %v2490 = vpack.c.b16 %v2463, %v2462
    %v2491 = vpack.c.b16 %v2465, %v2464
    %v2492 = vpack.c.b16 %v2467, %v2466
    %v2493 = vpack.c.b16 %v2469, %v2468
    %v2494 = vpack.c.b16 %v2471, %v2470
    %v2495 = vpack.c.b16 %v2473, %v2472
    %v2496 = vpack.c.b16 %v2475, %v2474
    %v2497 = vpack.c.b16 %v2477, %v2476
    %v2498 = vpack.c.b16 %v2479, %v2478
    %v2499 = vpack.c.b16 %v2481, %v2480
    %v2500 = vpack.c.b16 %v2483, %v2482
    %v2501 = vpack.c.b16 %v2485, %v2484
    %2518 = vmatprep.subr.bf16.mxu0 0
    %2519 = vmatpush1.bf16.msra.mxu0 %v2486
    %2520 = vmatprep.subr.bf16.mxu0 0
    %2521 = vmatpush1.bf16.msra.mxu0 %v2487
    %2522 = vmatprep.subr.bf16.mxu0 0
    %2523 = vmatpush1.bf16.msra.mxu0 %v2488
    %2524 = vmatprep.subr.bf16.mxu0 0
    %2525 = vmatpush1.bf16.msra.mxu0 %v2489
    %2526 = vmatprep.subr.bf16.mxu0 0
    %2527 = vmatpush1.bf16.msra.mxu0 %v2490
    %2528 = vmatprep.subr.bf16.mxu0 0
    %2529 = vmatpush1.bf16.msra.mxu0 %v2491
    %2530 = vmatprep.subr.bf16.mxu0 0
    %2531 = vmatpush1.bf16.msra.mxu0 %v2492
    %2532 = vmatprep.subr.bf16.mxu0 0
    %2533 = vmatpush1.bf16.msra.mxu0 %v2493
    %2534 = vmatprep.subr.bf16.mxu0 0
    %2535 = vmatpush1.bf16.msra.mxu0 %v2494
    %2536 = vmatprep.subr.bf16.mxu0 0
    %2537 = vmatpush1.bf16.msra.mxu0 %v2495
    %2538 = vmatprep.subr.bf16.mxu0 0
    %2539 = vmatpush1.bf16.msra.mxu0 %v2496
    %2540 = vmatprep.subr.bf16.mxu0 0
    %2541 = vmatpush1.bf16.msra.mxu0 %v2497
    %2542 = vmatprep.subr.bf16.mxu0 0
    %2543 = vmatpush1.bf16.msra.mxu0 %v2498
    %2544 = vmatprep.subr.bf16.mxu0 0
    %2545 = vmatpush1.bf16.msra.mxu0 %v2499
    %2546 = vmatprep.subr.bf16.mxu0 0
    %2547 = vmatpush1.bf16.msra.mxu0 %v2500
    %2548 = vmatprep.subr.bf16.mxu0 0
    %2549 = vmatpush1.bf16.msra.mxu0 %v2501
    %2550 = vmatprep.mubr.bf16.mxu0 %v2389
    %2551 = vmatmul.mubr.bf16.gmra.mrb[0].mxu0 %v2388
    %v2552 = vpop.f32.mrb[0].mxu0
    %v2553 = vadd.f32 0.0, %v2552
    %v2554 = vpop.f32.mrb[0].mxu0
    %v2555 = vpop.f32.mrb[0].mxu0
    %v2556 = vadd.f32 0.0, %v2555
    %v2557 = vpop.f32.mrb[0].mxu0
    %2558 = vdwg.mxu0
    %v2559 = vadd.f32 %v2193, %v2553
    %v2560 = vadd.f32 %v2194, %v2556
    %2561 = vst.msk [vmem:[#allocation11] sm:$0xff] %vm117, %v2559
    %2562 = vst.msk [vmem:[#allocation11 + $0x8] sm:$0xff] %vm117, %v2560
    // Predicated region
    $region74: #{tpu_custom_call.1} parent=1 // pred_check
      _
    $region75: #{tpu_custom_call.1} parent=1 // pred_check_branch
      %2564 = sbr.rel (0) target = $region77
    $region76: #{tpu_custom_call.1} parent=1 // pred_region
      %s2566 = ssub.s32 256, 256
      %2567 = vsyncadd [#allocation4], %s2566
      %s2568 = sshll.u32 [#allocation11], 4
      %s2569 = int_to_ptr.vmem [resolvable:$true] %s2568
      %2574 = dma.vmem_to_hbm [thread:$0]  %s2569, 256, %s13, [#allocation4], 128, 128, 8
    $region77: #{tpu_custom_call.1} parent=1 // pred_fallthru
      _
    // Predicated region
    $region78: #{tpu_custom_call.1} parent=1 // pred_check
      _
    $region79: #{tpu_custom_call.1} parent=1 // pred_check_branch
      %2576 = sbr.rel (0) target = $region81
    $region80: #{tpu_custom_call.1} parent=1 // pred_region
      %2577 = dma.done [#allocation4], 256
    $region81: #{tpu_custom_call.1} parent=1 // pred_fallthru
      _
    %2578 = vsyncpa [#allocation3], 1
    %2579 = vsyncpa [#allocation6], 1
    %2580 = vsyncpa [#allocation9], 1
    %2581 = vsyncpa [#allocation4], 1

</llo_original>
